<compile_context>
chip_gen: v6e
topology: v6e:2x2x1
jax: 0.10.0
libtpu: 0.0.40
codegen_flags: <defaults>
</compile_context>

<pallas_src>
import jax
import jax.numpy as jnp
import numpy as np
from jax.experimental import pallas as pl
from jax.experimental.pallas import tpu as pltpu

BF16 = jnp.bfloat16
LANE = 128


# ----------------------------- helpers (glue) --------------------------------


def _round_up(n, m):
    return ((n + m - 1) // m) * m


def _pad_to(x, axis, target):
    pad = target - x.shape[axis]
    if pad <= 0:
        return x
    widths = [(0, 0)] * x.ndim
    widths[axis] = (0, pad)
    return jnp.pad(x, widths)


def _tile_rows(m, cap=512):
    """Row tile (multiple of 16, <= cap) and padded row count (multiple of tile)."""
    tile = min(cap, _round_up(m, 16))
    return tile, _round_up(m, tile)


def _im2col_pooled(x_nhwc, KH, KW):
    """im2col for a valid stride-1 conv, rows grouped by 2x2 pool position.

    Returns cols of shape (4, B*OH//2*OW//2, KH*KW*C); feature order (kh,kw,c);
    leading axis indexes the pool position (dy*2+dx); rows ordered (b,oh2,ow2).
    """
    B, H, W, C = x_nhwc.shape
    OH, OW = H - KH + 1, W - KW + 1
    assert OH % 2 == 0 and OW % 2 == 0, "2x2 pool fusion needs even conv output"
    pats = [x_nhwc[:, i:i + OH, j:j + OW, :] for i in range(KH) for j in range(KW)]
    cols = jnp.concatenate(pats, axis=-1)                 # (B, OH, OW, K)
    K = KH * KW * C
    OH2, OW2 = OH // 2, OW // 2
    cols = cols.reshape(B, OH2, 2, OW2, 2, K)
    cols = cols.transpose(2, 4, 0, 1, 3, 5)               # (dy, dx, B, OH2, OW2, K)
    return cols.reshape(4, B * OH2 * OW2, K)


# ----------------------------- Pallas kernels --------------------------------


def _conv_relu_pool_kernel(x_ref, w_ref, b_ref, o_ref):
    # x_ref: (4, T, K) bf16 -- 4 pool positions of one im2col row-tile
    # w_ref: (K, N) bf16, b_ref: (1, N) f32, o_ref: (T, N)
    P, T, K = x_ref.shape
    x = x_ref[...].reshape(P * T, K)                       # leading-dim collapse only
    acc = jnp.dot(x, w_ref[...], preferred_element_type=jnp.float32)   # (4T, N)
    pooled = jnp.maximum(jnp.maximum(acc[0:T], acc[T:2 * T]),
                         jnp.maximum(acc[2 * T:3 * T], acc[3 * T:4 * T]))
    # bias add + ReLU hoisted past the pool max (bias shared across positions)
    o_ref[...] = jnp.maximum(pooled + b_ref[...], 0.0).astype(o_ref.dtype)


def _fc_chain_kernel(x_ref, w1_ref, b1_ref, w2_ref, b2_ref, w3_ref, b3_ref, o_ref):
    h = jnp.dot(x_ref[...], w1_ref[...], preferred_element_type=jnp.float32)
    h = jnp.maximum(h + b1_ref[...], 0.0).astype(jnp.bfloat16)
    h = jnp.dot(h, w2_ref[...], preferred_element_type=jnp.float32)
    h = jnp.maximum(h + b2_ref[...], 0.0).astype(jnp.bfloat16)
    h = jnp.dot(h, w3_ref[...], preferred_element_type=jnp.float32)
    o_ref[...] = (h + b3_ref[...]).astype(o_ref.dtype)


def conv_relu_pool(cols, wmat, bias, tile_m):
    """cols:(4,Mq,K) bf16, wmat:(K,N) bf16, bias:(1,N) f32 -> (Mq,N) bf16."""
    P, Mq, K = cols.shape
    N = wmat.shape[1]
    grid_m = Mq // tile_m
    return pl.pallas_call(
        _conv_relu_pool_kernel,
        out_shape=jax.ShapeDtypeStruct((Mq, N), BF16),
        grid_spec=pltpu.PrefetchScalarGridSpec(
            num_scalar_prefetch=0,
            grid=(grid_m,),
            in_specs=[pl.BlockSpec((P, tile_m, K), lambda i: (0, i, 0)),
                      pl.BlockSpec((K, N), lambda i: (0, 0)),
                      pl.BlockSpec((1, N), lambda i: (0, 0))],
            out_specs=pl.BlockSpec((tile_m, N), lambda i: (i, 0)),
        ),
        compiler_params=pltpu.CompilerParams(dimension_semantics=("parallel",)),
    )(cols, wmat, bias)


def fc_chain(x, w1, b1, w2, b2, w3, b3, tile_m):
    """Three chained FC layers (ReLU, ReLU, linear) in one call, row-tiled."""
    M, K = x.shape
    H1 = w1.shape[1]
    H2 = w2.shape[1]
    N = w3.shape[1]
    grid_m = M // tile_m
    return pl.pallas_call(
        _fc_chain_kernel,
        out_shape=jax.ShapeDtypeStruct((M, N), jnp.float32),
        grid_spec=pltpu.PrefetchScalarGridSpec(
            num_scalar_prefetch=0,
            grid=(grid_m,),
            in_specs=[pl.BlockSpec((tile_m, K), lambda i: (i, 0)),
                      pl.BlockSpec((K, H1), lambda i: (0, 0)),
                      pl.BlockSpec((1, H1), lambda i: (0, 0)),
                      pl.BlockSpec((H1, H2), lambda i: (0, 0)),
                      pl.BlockSpec((1, H2), lambda i: (0, 0)),
                      pl.BlockSpec((H2, N), lambda i: (0, 0)),
                      pl.BlockSpec((1, N), lambda i: (0, 0))],
            out_specs=pl.BlockSpec((tile_m, N), lambda i: (i, 0)),
        ),
        compiler_params=pltpu.CompilerParams(dimension_semantics=("parallel",)),
    )(x, w1, b1, w2, b2, w3, b3)


# ------------------------------ parameters -----------------------------------


def _xavier_normal(key, out_f, in_f, gain=1.414):
    std = gain * np.sqrt(2.0 / (in_f + out_f))
    return jax.random.normal(key, (out_f, in_f), jnp.float32) * std


def _hashed_weight(key, shape, buckets=16):
    n = int(np.prod(shape))
    vals = jax.random.normal(key, (buckets,), jnp.float32) * 0.1
    idx = (jnp.arange(n, dtype=jnp.uint32) * jnp.uint32(2654435761)) % jnp.uint32(buckets)
    return vals[idx.astype(jnp.int32)].reshape(shape)


def init_params(key, n_channels=3, n_outputs=10):
    ks = jax.random.split(key, 12)
    p = {}
    fan1 = n_channels * 25
    p["c1_w"] = jax.random.normal(ks[0], (6, n_channels, 5, 5), jnp.float32) / np.sqrt(fan1)
    p["c1_wh"] = _hashed_weight(ks[1], (6, n_channels, 5, 5), buckets=16)
    p["c1_b"] = jax.random.normal(ks[2], (6,), jnp.float32) * 0.01
    fan2 = 6 * 25
    p["c2_w"] = jax.random.normal(ks[3], (16, 6, 5, 5), jnp.float32) / np.sqrt(fan2)
    p["c2_wh"] = _hashed_weight(ks[4], (16, 6, 5, 5), buckets=16)
    p["c2_b"] = jax.random.normal(ks[5], (16,), jnp.float32) * 0.01
    p["fc1_w"] = _xavier_normal(ks[6], 120, 16 * 5 * 5)
    p["fc1_b"] = jax.random.normal(ks[7], (120,), jnp.float32) * 0.01
    p["fc2_w"] = _xavier_normal(ks[8], 84, 120)
    p["fc2_b"] = jax.random.normal(ks[9], (84,), jnp.float32) * 0.01
    p["fc3_w"] = _xavier_normal(ks[10], n_outputs, 84)
    p["fc3_b"] = jax.random.normal(ks[11], (n_outputs,), jnp.float32) * 0.01
    return p


# ------------------------------ forward pass ----------------------------------


def lenet_forward(x, p):
    B = x.shape[0]
    n_out = p["fc3_w"].shape[0]

    x_nhwc = jnp.transpose(x.astype(jnp.float32), (0, 2, 3, 1))       # (B,32,32,3)

    # ---- conv1: dense + hash streams fused along output channels (6 + 6) ----
    cols1 = _im2col_pooled(x_nhwc, 5, 5)                              # (4, B*196, 75)
    Mq1 = cols1.shape[1]
    tile1, Mq1p = _tile_rows(Mq1)
    K1p = _round_up(cols1.shape[2], LANE)                             # 128
    cols1 = _pad_to(_pad_to(cols1, 1, Mq1p), 2, K1p).astype(BF16)

    w1cat = jnp.concatenate([p["c1_w"], p["c1_wh"]], axis=0)          # (12,3,5,5)
    wmat1 = w1cat.transpose(0, 2, 3, 1).reshape(12, -1).T             # (75,12) (kh,kw,c)
    wmat1 = _pad_to(_pad_to(wmat1, 0, K1p), 1, LANE).astype(BF16)
    b1 = _pad_to(jnp.concatenate([p["c1_b"], p["c1_b"]]).reshape(1, -1), 1, LANE)

    y1 = conv_relu_pool(cols1, wmat1, b1, tile1)                      # (Mq1p, 128) bf16
    y1 = y1[:Mq1, :12].reshape(B, 14, 14, 12)                         # dense 0:6, hash 6:12

    # ---- conv2: both streams fused via block weight over the 12 channels ----
    cols2 = _im2col_pooled(y1, 5, 5)                                  # (4, B*25, 300)
    Mq2 = cols2.shape[1]
    tile2, Mq2p = _tile_rows(Mq2)
    K2p = _round_up(cols2.shape[2], LANE)                             # 384
    cols2 = _pad_to(_pad_to(cols2, 1, Mq2p), 2, K2p).astype(BF16)

    w2_blk = jnp.zeros((32, 12, 5, 5), jnp.float32)
    w2_blk = w2_blk.at[:16, :6].set(p["c2_w"])                        # dense <- dense chans
    w2_blk = w2_blk.at[16:, 6:].set(p["c2_wh"])                       # hash  <- hash chans
    wmat2 = w2_blk.transpose(0, 2, 3, 1).reshape(32, -1).T            # (300,32)
    wmat2 = _pad_to(_pad_to(wmat2, 0, K2p), 1, LANE).astype(BF16)
    b2 = _pad_to(jnp.concatenate([p["c2_b"], p["c2_b"]]).reshape(1, -1), 1, LANE)

    y2 = conv_relu_pool(cols2, wmat2, b2, tile2)                      # (Mq2p, 128) bf16
    y2 = y2[:Mq2, :32].reshape(B, 5, 5, 32)                           # NHWC, dense/hash

    # ---- fc1 -> fc2 -> fc3, both streams stacked along batch, one kernel ----
    dense_flat = y2[..., :16].reshape(B, 400)                         # (h, w, c) order
    hash_flat = y2[..., 16:32].reshape(B, 400)
    xf = jnp.concatenate([dense_flat, hash_flat], axis=0)             # (2B, 400)
    tilef, Mfp = _tile_rows(xf.shape[0])
    Kf = _round_up(400, LANE)                                         # 512
    xf = _pad_to(_pad_to(xf, 0, Mfp), 1, Kf).astype(BF16)

    # permute fc1 weight from torch (c,h,w) flatten order to NHWC (h,w,c) order
    fc1_w_nhwc = p["fc1_w"].reshape(-1, 16, 5, 5).transpose(0, 2, 3, 1).reshape(-1, 400)
    w1f = _pad_to(_pad_to(fc1_w_nhwc.T, 0, Kf), 1, LANE).astype(BF16) # (512,128)
    b1f = _pad_to(p["fc1_b"].reshape(1, -1), 1, LANE)
    w2f = _pad_to(_pad_to(p["fc2_w"].T, 0, LANE), 1, LANE).astype(BF16)
    b2f = _pad_to(p["fc2_b"].reshape(1, -1), 1, LANE)
    w3f = _pad_to(_pad_to(p["fc3_w"].T, 0, LANE), 1, LANE).astype(BF16)
    b3f = _pad_to(p["fc3_b"].reshape(1, -1), 1, LANE)

    logits = fc_chain(xf, w1f, b1f, w2f, b2f, w3f, b3f, tilef)        # (Mfp, 128) f32
    out = logits[:B, :n_out]
    out_hash = logits[B:2 * B, :n_out]
    return out, out_hash


# ----------------------- pure-JAX reference (for checking) --------------------


def _reference_forward(x, p):
    def conv(v, w, b):
        y = jax.lax.conv_general_dilated(v, w, (1, 1), "VALID",
                                         dimension_numbers=("NCHW", "OIHW", "NCHW"))
        return y + b.reshape(1, -1, 1, 1)

    def pool(v):
        return jax.lax.reduce_window(v, -jnp.inf, jax.lax.max,
                                     (1, 1, 2, 2), (1, 1, 2, 2), "VALID")

    relu = lambda v: jnp.maximum(v, 0.0)
    out = pool(relu(conv(x, p["c1_w"], p["c1_b"])))
    out_h = pool(relu(conv(x, p["c1_wh"], p["c1_b"])))
    out = pool(relu(conv(out, p["c2_w"], p["c2_b"])))
    out_h = pool(relu(conv(out_h, p["c2_wh"], p["c2_b"])))
    out = out.reshape(out.shape[0], -1)
    out_h = out_h.reshape(out_h.shape[0], -1)
    fc = lambda v, w, b: v @ w.T + b
    out = relu(fc(out, p["fc1_w"], p["fc1_b"]))
    out_h = relu(fc(out_h, p["fc1_w"], p["fc1_b"]))
    out = relu(fc(out, p["fc2_w"], p["fc2_b"]))
    out_h = relu(fc(out_h, p["fc2_w"], p["fc2_b"]))
    return fc(out, p["fc3_w"], p["fc3_b"]), fc(out_h, p["fc3_w"], p["fc3_b"])


if __name__ == "__main__":
    key = jax.random.PRNGKey(0)
    k_x, k_p = jax.random.split(key)

    # fc1 expects 16*5*5 features, which pins the input to 3x32x32 (CIFAR-10).
    batch = 2
    x = jax.random.normal(k_x, (batch, 3, 32, 32), jnp.float32)
    params = init_params(k_p, n_channels=3, n_outputs=10)

    fwd = jax.jit(lenet_forward)
    out, out_hash = fwd(x, params)
    jax.block_until_ready((out, out_hash))

    assert out.shape == (batch, 10) and out_hash.shape == (batch, 10)
    assert out.dtype == jnp.float32 and out_hash.dtype == jnp.float32

    ref_out, ref_hash = jax.jit(_reference_forward)(x, params)
    # bf16 matmul operands with f32 accumulation -> slightly relaxed tolerance.
    np.testing.assert_allclose(np.asarray(out), np.asarray(ref_out), rtol=5e-2, atol=5e-2)
    np.testing.assert_allclose(np.asarray(out_hash), np.asarray(ref_hash), rtol=5e-2, atol=5e-2)
    print("KERNEL_OK")
</pallas_src>

<mosaic_0001>
module attributes {stable_mosaic.version = 11 : i64} {
  func.func @_conv_relu_pool_kernel(%arg0: i32, %arg1: memref<4x400x128xbf16, #tpu.memory_space<vmem>>, %arg2: memref<128x128xbf16, #tpu.memory_space<vmem>>, %arg3: memref<1x128xf32, #tpu.memory_space<vmem>>, %arg4: memref<400x128xbf16, #tpu.memory_space<vmem>>) attributes {dimension_semantics = [#tpu.dimension_semantics<parallel>], iteration_bounds = array<i64: 1>, scalar_prefetch = 0 : i64, scratch_operands = 0 : i64, tpu.core_type = #tpu.core_type<tc>, window_params = [{transform_indices = @transform_0, window_bounds = array<i64: 4, 400, 128>}, {pipeline_mode = #tpu.pipeline_mode<synchronous>, transform_indices = @transform_1, window_bounds = array<i64: 128, 128>}, {pipeline_mode = #tpu.pipeline_mode<synchronous>, transform_indices = @transform_2, window_bounds = array<i64: 1, 128>}, {transform_indices = @transform_3, window_bounds = array<i64: 400, 128>}]} {
    %c0 = arith.constant 0 : index
    %c0_0 = arith.constant 0 : index
    %c0_1 = arith.constant 0 : index
    %0 = vector.load %arg1[%c0, %c0_0, %c0_1] : memref<4x400x128xbf16, #tpu.memory_space<vmem>>, vector<4x400x128xbf16>
    %1 = vector.shape_cast %0 : vector<4x400x128xbf16> to vector<1600x128xbf16>
    %c0_2 = arith.constant 0 : index
    %c0_3 = arith.constant 0 : index
    %2 = vector.load %arg2[%c0_2, %c0_3] : memref<128x128xbf16, #tpu.memory_space<vmem>>, vector<128x128xbf16>
    %cst = arith.constant dense<0.000000e+00> : vector<1600x128xf32>
    %3 = tpu.matmul %1, %2, %cst {dimension_numbers = #tpu.dot_dimension_numbers<[1], [0], [0], [1], [0, 0, 1, 1], [], []>} : vector<1600x128xbf16>, vector<128x128xbf16>, vector<1600x128xf32> -> vector<1600x128xf32>
    %4 = vector.extract_strided_slice %3 {offsets = [0, 0], sizes = [400, 128], strides = [1, 1]} : vector<1600x128xf32> to vector<400x128xf32>
    %5 = vector.extract_strided_slice %3 {offsets = [400, 0], sizes = [400, 128], strides = [1, 1]} : vector<1600x128xf32> to vector<400x128xf32>
    %6 = arith.maximumf %4, %5 : vector<400x128xf32>
    %7 = vector.extract_strided_slice %3 {offsets = [800, 0], sizes = [400, 128], strides = [1, 1]} : vector<1600x128xf32> to vector<400x128xf32>
    %8 = vector.extract_strided_slice %3 {offsets = [1200, 0], sizes = [400, 128], strides = [1, 1]} : vector<1600x128xf32> to vector<400x128xf32>
    %9 = arith.maximumf %7, %8 : vector<400x128xf32>
    %10 = arith.maximumf %6, %9 : vector<400x128xf32>
    %c0_4 = arith.constant 0 : index
    %c0_5 = arith.constant 0 : index
    %11 = vector.load %arg3[%c0_4, %c0_5] : memref<1x128xf32, #tpu.memory_space<vmem>>, vector<1x128xf32>
    %12 = vector.broadcast %11 : vector<1x128xf32> to vector<400x128xf32>
    %13 = arith.addf %10, %12 : vector<400x128xf32>
    %cst_6 = arith.constant 0.000000e+00 : f32
    %14 = vector.broadcast %cst_6 : f32 to vector<400x128xf32>
    %15 = arith.maximumf %13, %14 : vector<400x128xf32>
    %16 = arith.truncf %15 : vector<400x128xf32> to vector<400x128xbf16>
    %c0_7 = arith.constant 0 : index
    %c0_8 = arith.constant 0 : index
    %17 = vector.load %arg4[%c0_7, %c0_8] : memref<400x128xbf16, #tpu.memory_space<vmem>>, vector<400x128xbf16>
    tpu.vector_store %arg4[%c0_7, %c0_8], %16 {strides = array<i32>} : memref<400x128xbf16, #tpu.memory_space<vmem>>, vector<400x128xbf16>,
    return
  }
  func.func @transform_0(%arg0: i32) -> (i32, i32, i32) {
    %c0_i32 = arith.constant 0 : i32
    %c0_i32_0 = arith.constant 0 : i32
    %c0_i32_1 = arith.constant 0 : i32
    return %c0_i32, %arg0, %c0_i32_0 : i32, i32, i32
  }
  func.func @transform_1(%arg0: i32) -> (i32, i32) {
    %c0_i32 = arith.constant 0 : i32
    %c0_i32_0 = arith.constant 0 : i32
    %c0_i32_1 = arith.constant 0 : i32
    return %c0_i32, %c0_i32_0 : i32, i32
  }
  func.func @transform_2(%arg0: i32) -> (i32, i32) {
    %c0_i32 = arith.constant 0 : i32
    %c0_i32_0 = arith.constant 0 : i32
    %c0_i32_1 = arith.constant 0 : i32
    return %c0_i32, %c0_i32_0 : i32, i32
  }
  func.func @transform_3(%arg0: i32) -> (i32, i32) {
    %c0_i32 = arith.constant 0 : i32
    %c0_i32_0 = arith.constant 0 : i32
    return %arg0, %c0_i32 : i32, i32
  }
}

module attributes {stable_mosaic.version = 11 : i64} {
  func.func @_conv_relu_pool_kernel(%arg0: i32, %arg1: memref<4x64x384xbf16, #tpu.memory_space<vmem>>, %arg2: memref<384x128xbf16, #tpu.memory_space<vmem>>, %arg3: memref<1x128xf32, #tpu.memory_space<vmem>>, %arg4: memref<64x128xbf16, #tpu.memory_space<vmem>>) attributes {dimension_semantics = [#tpu.dimension_semantics<parallel>], iteration_bounds = array<i64: 1>, scalar_prefetch = 0 : i64, scratch_operands = 0 : i64, tpu.core_type = #tpu.core_type<tc>, window_params = [{transform_indices = @transform_0, window_bounds = array<i64: 4, 64, 384>}, {pipeline_mode = #tpu.pipeline_mode<synchronous>, transform_indices = @transform_1, window_bounds = array<i64: 384, 128>}, {pipeline_mode = #tpu.pipeline_mode<synchronous>, transform_indices = @transform_2, window_bounds = array<i64: 1, 128>}, {transform_indices = @transform_3, window_bounds = array<i64: 64, 128>}]} {
    %c0 = arith.constant 0 : index
    %c0_0 = arith.constant 0 : index
    %c0_1 = arith.constant 0 : index
    %0 = vector.load %arg1[%c0, %c0_0, %c0_1] : memref<4x64x384xbf16, #tpu.memory_space<vmem>>, vector<4x64x384xbf16>
    %1 = vector.shape_cast %0 : vector<4x64x384xbf16> to vector<256x384xbf16>
    %c0_2 = arith.constant 0 : index
    %c0_3 = arith.constant 0 : index
    %2 = vector.load %arg2[%c0_2, %c0_3] : memref<384x128xbf16, #tpu.memory_space<vmem>>, vector<384x128xbf16>
    %cst = arith.constant dense<0.000000e+00> : vector<256x128xf32>
    %3 = tpu.matmul %1, %2, %cst {dimension_numbers = #tpu.dot_dimension_numbers<[1], [0], [0], [1], [0, 0, 1, 1], [], []>} : vector<256x384xbf16>, vector<384x128xbf16>, vector<256x128xf32> -> vector<256x128xf32>
    %4 = vector.extract_strided_slice %3 {offsets = [0, 0], sizes = [64, 128], strides = [1, 1]} : vector<256x128xf32> to vector<64x128xf32>
    %5 = vector.extract_strided_slice %3 {offsets = [64, 0], sizes = [64, 128], strides = [1, 1]} : vector<256x128xf32> to vector<64x128xf32>
    %6 = arith.maximumf %4, %5 : vector<64x128xf32>
    %7 = vector.extract_strided_slice %3 {offsets = [128, 0], sizes = [64, 128], strides = [1, 1]} : vector<256x128xf32> to vector<64x128xf32>
    %8 = vector.extract_strided_slice %3 {offsets = [192, 0], sizes = [64, 128], strides = [1, 1]} : vector<256x128xf32> to vector<64x128xf32>
    %9 = arith.maximumf %7, %8 : vector<64x128xf32>
    %10 = arith.maximumf %6, %9 : vector<64x128xf32>
    %c0_4 = arith.constant 0 : index
    %c0_5 = arith.constant 0 : index
    %11 = vector.load %arg3[%c0_4, %c0_5] : memref<1x128xf32, #tpu.memory_space<vmem>>, vector<1x128xf32>
    %12 = vector.broadcast %11 : vector<1x128xf32> to vector<64x128xf32>
    %13 = arith.addf %10, %12 : vector<64x128xf32>
    %cst_6 = arith.constant 0.000000e+00 : f32
    %14 = vector.broadcast %cst_6 : f32 to vector<64x128xf32>
    %15 = arith.maximumf %13, %14 : vector<64x128xf32>
    %16 = arith.truncf %15 : vector<64x128xf32> to vector<64x128xbf16>
    %c0_7 = arith.constant 0 : index
    %c0_8 = arith.constant 0 : index
    %17 = vector.load %arg4[%c0_7, %c0_8] : memref<64x128xbf16, #tpu.memory_space<vmem>>, vector<64x128xbf16>
    tpu.vector_store %arg4[%c0_7, %c0_8], %16 {strides = array<i32>} : memref<64x128xbf16, #tpu.memory_space<vmem>>, vector<64x128xbf16>,
    return
  }
  func.func @transform_0(%arg0: i32) -> (i32, i32, i32) {
    %c0_i32 = arith.constant 0 : i32
    %c0_i32_0 = arith.constant 0 : i32
    %c0_i32_1 = arith.constant 0 : i32
    return %c0_i32, %arg0, %c0_i32_0 : i32, i32, i32
  }
  func.func @transform_1(%arg0: i32) -> (i32, i32) {
    %c0_i32 = arith.constant 0 : i32
    %c0_i32_0 = arith.constant 0 : i32
    %c0_i32_1 = arith.constant 0 : i32
    return %c0_i32, %c0_i32_0 : i32, i32
  }
  func.func @transform_2(%arg0: i32) -> (i32, i32) {
    %c0_i32 = arith.constant 0 : i32
    %c0_i32_0 = arith.constant 0 : i32
    %c0_i32_1 = arith.constant 0 : i32
    return %c0_i32, %c0_i32_0 : i32, i32
  }
  func.func @transform_3(%arg0: i32) -> (i32, i32) {
    %c0_i32 = arith.constant 0 : i32
    %c0_i32_0 = arith.constant 0 : i32
    return %arg0, %c0_i32 : i32, i32
  }
}

module attributes {stable_mosaic.version = 11 : i64} {
  func.func @_fc_chain_kernel(%arg0: i32, %arg1: memref<16x512xbf16, #tpu.memory_space<vmem>>, %arg2: memref<512x128xbf16, #tpu.memory_space<vmem>>, %arg3: memref<1x128xf32, #tpu.memory_space<vmem>>, %arg4: memref<128x128xbf16, #tpu.memory_space<vmem>>, %arg5: memref<1x128xf32, #tpu.memory_space<vmem>>, %arg6: memref<128x128xbf16, #tpu.memory_space<vmem>>, %arg7: memref<1x128xf32, #tpu.memory_space<vmem>>, %arg8: memref<16x128xf32, #tpu.memory_space<vmem>>) attributes {dimension_semantics = [#tpu.dimension_semantics<parallel>], iteration_bounds = array<i64: 1>, scalar_prefetch = 0 : i64, scratch_operands = 0 : i64, tpu.core_type = #tpu.core_type<tc>, window_params = [{transform_indices = @transform_0, window_bounds = array<i64: 16, 512>}, {pipeline_mode = #tpu.pipeline_mode<synchronous>, transform_indices = @transform_1, window_bounds = array<i64: 512, 128>}, {pipeline_mode = #tpu.pipeline_mode<synchronous>, transform_indices = @transform_2, window_bounds = array<i64: 1, 128>}, {pipeline_mode = #tpu.pipeline_mode<synchronous>, transform_indices = @transform_3, window_bounds = array<i64: 128, 128>}, {pipeline_mode = #tpu.pipeline_mode<synchronous>, transform_indices = @transform_4, window_bounds = array<i64: 1, 128>}, {pipeline_mode = #tpu.pipeline_mode<synchronous>, transform_indices = @transform_5, window_bounds = array<i64: 128, 128>}, {pipeline_mode = #tpu.pipeline_mode<synchronous>, transform_indices = @transform_6, window_bounds = array<i64: 1, 128>}, {transform_indices = @transform_7, window_bounds = array<i64: 16, 128>}]} {
    %c0 = arith.constant 0 : index
    %c0_0 = arith.constant 0 : index
    %0 = vector.load %arg1[%c0, %c0_0] : memref<16x512xbf16, #tpu.memory_space<vmem>>, vector<16x512xbf16>
    %c0_1 = arith.constant 0 : index
    %c0_2 = arith.constant 0 : index
    %1 = vector.load %arg2[%c0_1, %c0_2] : memref<512x128xbf16, #tpu.memory_space<vmem>>, vector<512x128xbf16>
    %cst = arith.constant dense<0.000000e+00> : vector<16x128xf32>
    %2 = tpu.matmul %0, %1, %cst {dimension_numbers = #tpu.dot_dimension_numbers<[1], [0], [0], [1], [0, 0, 1, 1], [], []>} : vector<16x512xbf16>, vector<512x128xbf16>, vector<16x128xf32> -> vector<16x128xf32>
    %c0_3 = arith.constant 0 : index
    %c0_4 = arith.constant 0 : index
    %3 = vector.load %arg3[%c0_3, %c0_4] : memref<1x128xf32, #tpu.memory_space<vmem>>, vector<1x128xf32>
    %4 = vector.broadcast %3 : vector<1x128xf32> to vector<16x128xf32>
    %5 = arith.addf %2, %4 : vector<16x128xf32>
    %cst_5 = arith.constant 0.000000e+00 : f32
    %6 = vector.broadcast %cst_5 : f32 to vector<16x128xf32>
    %7 = arith.maximumf %5, %6 : vector<16x128xf32>
    %8 = arith.truncf %7 : vector<16x128xf32> to vector<16x128xbf16>
    %c0_6 = arith.constant 0 : index
    %c0_7 = arith.constant 0 : index
    %9 = vector.load %arg4[%c0_6, %c0_7] : memref<128x128xbf16, #tpu.memory_space<vmem>>, vector<128x128xbf16>
    %cst_8 = arith.constant dense<0.000000e+00> : vector<16x128xf32>
    %10 = tpu.matmul %8, %9, %cst_8 {dimension_numbers = #tpu.dot_dimension_numbers<[1], [0], [0], [1], [0, 0, 1, 1], [], []>} : vector<16x128xbf16>, vector<128x128xbf16>, vector<16x128xf32> -> vector<16x128xf32>
    %c0_9 = arith.constant 0 : index
    %c0_10 = arith.constant 0 : index
    %11 = vector.load %arg5[%c0_9, %c0_10] : memref<1x128xf32, #tpu.memory_space<vmem>>, vector<1x128xf32>
    %12 = vector.broadcast %11 : vector<1x128xf32> to vector<16x128xf32>
    %13 = arith.addf %10, %12 : vector<16x128xf32>
    %cst_11 = arith.constant 0.000000e+00 : f32
    %14 = vector.broadcast %cst_11 : f32 to vector<16x128xf32>
    %15 = arith.maximumf %13, %14 : vector<16x128xf32>
    %16 = arith.truncf %15 : vector<16x128xf32> to vector<16x128xbf16>
    %c0_12 = arith.constant 0 : index
    %c0_13 = arith.constant 0 : index
    %17 = vector.load %arg6[%c0_12, %c0_13] : memref<128x128xbf16, #tpu.memory_space<vmem>>, vector<128x128xbf16>
    %cst_14 = arith.constant dense<0.000000e+00> : vector<16x128xf32>
    %18 = tpu.matmul %16, %17, %cst_14 {dimension_numbers = #tpu.dot_dimension_numbers<[1], [0], [0], [1], [0, 0, 1, 1], [], []>} : vector<16x128xbf16>, vector<128x128xbf16>, vector<16x128xf32> -> vector<16x128xf32>
    %c0_15 = arith.constant 0 : index
    %c0_16 = arith.constant 0 : index
    %19 = vector.load %arg7[%c0_15, %c0_16] : memref<1x128xf32, #tpu.memory_space<vmem>>, vector<1x128xf32>
    %20 = vector.broadcast %19 : vector<1x128xf32> to vector<16x128xf32>
    %21 = arith.addf %18, %20 : vector<16x128xf32>
    %c0_17 = arith.constant 0 : index
    %c0_18 = arith.constant 0 : index
    %22 = vector.load %arg8[%c0_17, %c0_18] : memref<16x128xf32, #tpu.memory_space<vmem>>, vector<16x128xf32>
    tpu.vector_store %arg8[%c0_17, %c0_18], %21 {strides = array<i32>} : memref<16x128xf32, #tpu.memory_space<vmem>>, vector<16x128xf32>,
    return
  }
  func.func @transform_0(%arg0: i32) -> (i32, i32) {
    %c0_i32 = arith.constant 0 : i32
    %c0_i32_0 = arith.constant 0 : i32
    return %arg0, %c0_i32 : i32, i32
  }
  func.func @transform_1(%arg0: i32) -> (i32, i32) {
    %c0_i32 = arith.constant 0 : i32
    %c0_i32_0 = arith.constant 0 : i32
    %c0_i32_1 = arith.constant 0 : i32
    return %c0_i32, %c0_i32_0 : i32, i32
  }
  func.func @transform_2(%arg0: i32) -> (i32, i32) {
    %c0_i32 = arith.constant 0 : i32
    %c0_i32_0 = arith.constant 0 : i32
    %c0_i32_1 = arith.constant 0 : i32
    return %c0_i32, %c0_i32_0 : i32, i32
  }
  func.func @transform_3(%arg0: i32) -> (i32, i32) {
    %c0_i32 = arith.constant 0 : i32
    %c0_i32_0 = arith.constant 0 : i32
    %c0_i32_1 = arith.constant 0 : i32
    return %c0_i32, %c0_i32_0 : i32, i32
  }
  func.func @transform_4(%arg0: i32) -> (i32, i32) {
    %c0_i32 = arith.constant 0 : i32
    %c0_i32_0 = arith.constant 0 : i32
    %c0_i32_1 = arith.constant 0 : i32
    return %c0_i32, %c0_i32_0 : i32, i32
  }
  func.func @transform_5(%arg0: i32) -> (i32, i32) {
    %c0_i32 = arith.constant 0 : i32
    %c0_i32_0 = arith.constant 0 : i32
    %c0_i32_1 = arith.constant 0 : i32
    return %c0_i32, %c0_i32_0 : i32, i32
  }
  func.func @transform_6(%arg0: i32) -> (i32, i32) {
    %c0_i32 = arith.constant 0 : i32
    %c0_i32_0 = arith.constant 0 : i32
    %c0_i32_1 = arith.constant 0 : i32
    return %c0_i32, %c0_i32_0 : i32, i32
  }
  func.func @transform_7(%arg0: i32) -> (i32, i32) {
    %c0_i32 = arith.constant 0 : i32
    %c0_i32_0 = arith.constant 0 : i32
    return %arg0, %c0_i32 : i32, i32
  }
}

</mosaic_0001>

<llo_original>
// kernel: lenet_forward.3
$region0: #{lenet_forward.3}
  #allocation0 [shape = 'u32[]', space=smem, size = 0x4, offset = 0x4, fixed_abs, tag = 'smem constant byte address 0x4 - core index']
  #allocation1 [shape = 'u32[144,128]{1,0:T(1,128)}', space=vmem, size = 0x12000, scoped, tag = 'internal scratch']
  %s0 = inlined_call_operand.vmem [shape: bf16[4,400,128], index: 0, kind: input, shape index: {}]
  %s1 = inlined_call_operand.vmem [shape: bf16[128,128], index: 1, kind: input, shape index: {}]
  %s2 = inlined_call_operand.vmem [shape: f32[1,128], index: 2, kind: input, shape index: {}]
  %s3 = inlined_call_operand.vmem [shape: bf16[400,128], index: 3, kind: output, shape index: {}]
  %s4 = sld [smem:[#allocation0]]
  $region22: #{lenet_forward.3} parent=0
    _
  %s6 = ssub.s32 1, %s4
  %s7 = scalar_select 0, %s6, %s4
  // Predicated region
  $region2: #{lenet_forward.3} parent=0 // pred_check
    _
  $region3: #{lenet_forward.3} parent=0 // pred_check_branch
    %9 = sbr.rel (0) target = $region5
  $region4: #{lenet_forward.3} parent=0 // pred_region
    _
  $region5: #{lenet_forward.3} parent=0 // pred_fallthru
    _
  // Predicated region
  $region6: #{lenet_forward.3} parent=0 // pred_check
    _
  $region7: #{lenet_forward.3} parent=0 // pred_check_branch
    %11 = sbr.rel (0) target = $region9
  $region8: #{lenet_forward.3} parent=0 // pred_region
    _
  $region9: #{lenet_forward.3} parent=0 // pred_fallthru
    _
  // Predicated region
  $region10: #{lenet_forward.3} parent=0 // pred_check
    _
  $region11: #{lenet_forward.3} parent=0 // pred_check_branch
    %13 = sbr.rel (0) target = $region13
  $region12: #{lenet_forward.3} parent=0 // pred_region
    _
  $region13: #{lenet_forward.3} parent=0 // pred_fallthru
    _
  %v15 = vld [vmem:[%s0] sm:$0xf]
  %v16 = vld [vmem:[%s0 + $0x4] sm:$0xf]
  %v17 = vld [vmem:[%s0 + $0x8] sm:$0xf]
  %v18 = vld [vmem:[%s0 + $0xc] sm:$0xf]
  %v19 = vld [vmem:[%s0 + $0x10] sm:$0xf]
  %v20 = vld [vmem:[%s0 + $0x14] sm:$0xf]
  %v21 = vld [vmem:[%s0 + $0x18] sm:$0xf]
  %v22 = vld [vmem:[%s0 + $0x1c] sm:$0xf]
  %v23 = vld [vmem:[%s0 + $0x20] sm:$0xf]
  %v24 = vld [vmem:[%s0 + $0x24] sm:$0xf]
  %v25 = vld [vmem:[%s0 + $0x28] sm:$0xf]
  %v26 = vld [vmem:[%s0 + $0x2c] sm:$0xf]
  %v27 = vld [vmem:[%s0 + $0x30] sm:$0xf]
  %v28 = vld [vmem:[%s0 + $0x34] sm:$0xf]
  %v29 = vld [vmem:[%s0 + $0x38] sm:$0xf]
  %v30 = vld [vmem:[%s0 + $0x3c] sm:$0xf]
  %v31 = vld [vmem:[%s0 + $0x40] sm:$0xf]
  %v32 = vld [vmem:[%s0 + $0x44] sm:$0xf]
  %v33 = vld [vmem:[%s0 + $0x48] sm:$0xf]
  %v34 = vld [vmem:[%s0 + $0x4c] sm:$0xf]
  %v35 = vld [vmem:[%s0 + $0x50] sm:$0xf]
  %v36 = vld [vmem:[%s0 + $0x54] sm:$0xf]
  %v37 = vld [vmem:[%s0 + $0x58] sm:$0xf]
  %v38 = vld [vmem:[%s0 + $0x5c] sm:$0xf]
  %v39 = vld [vmem:[%s0 + $0x60] sm:$0xf]
  %v40 = vld [vmem:[%s0 + $0x64] sm:$0xf]
  %v41 = vld [vmem:[%s0 + $0x68] sm:$0xf]
  %v42 = vld [vmem:[%s0 + $0x6c] sm:$0xf]
  %v43 = vld [vmem:[%s0 + $0x70] sm:$0xf]
  %v44 = vld [vmem:[%s0 + $0x74] sm:$0xf]
  %v45 = vld [vmem:[%s0 + $0x78] sm:$0xf]
  %v46 = vld [vmem:[%s0 + $0x7c] sm:$0xf]
  %v47 = vld [vmem:[%s0 + $0x80] sm:$0xf]
  %v48 = vld [vmem:[%s0 + $0x84] sm:$0xf]
  %v49 = vld [vmem:[%s0 + $0x88] sm:$0xf]
  %v50 = vld [vmem:[%s0 + $0x8c] sm:$0xf]
  %v51 = vld [vmem:[%s0 + $0x90] sm:$0xf]
  %v52 = vld [vmem:[%s0 + $0x94] sm:$0xf]
  %v53 = vld [vmem:[%s0 + $0x98] sm:$0xf]
  %v54 = vld [vmem:[%s0 + $0x9c] sm:$0xf]
  %v55 = vld [vmem:[%s0 + $0xa0] sm:$0xf]
  %v56 = vld [vmem:[%s0 + $0xa4] sm:$0xf]
  %v57 = vld [vmem:[%s0 + $0xa8] sm:$0xf]
  %v58 = vld [vmem:[%s0 + $0xac] sm:$0xf]
  %v59 = vld [vmem:[%s0 + $0xb0] sm:$0xf]
  %v60 = vld [vmem:[%s0 + $0xb4] sm:$0xf]
  %v61 = vld [vmem:[%s0 + $0xb8] sm:$0xf]
  %v62 = vld [vmem:[%s0 + $0xbc] sm:$0xf]
  %v63 = vld [vmem:[%s0 + $0xc0] sm:$0xf]
  %v64 = vld [vmem:[%s0 + $0xc4] sm:$0xf]
  %v65 = vld [vmem:[%s0 + $0xc8] sm:$0xf]
  %v66 = vld [vmem:[%s0 + $0xcc] sm:$0xf]
  %v67 = vld [vmem:[%s0 + $0xd0] sm:$0xf]
  %v68 = vld [vmem:[%s0 + $0xd4] sm:$0xf]
  %v69 = vld [vmem:[%s0 + $0xd8] sm:$0xf]
  %v70 = vld [vmem:[%s0 + $0xdc] sm:$0xf]
  %v71 = vld [vmem:[%s0 + $0xe0] sm:$0xf]
  %v72 = vld [vmem:[%s0 + $0xe4] sm:$0xf]
  %v73 = vld [vmem:[%s0 + $0xe8] sm:$0xf]
  %v74 = vld [vmem:[%s0 + $0xec] sm:$0xf]
  %v75 = vld [vmem:[%s0 + $0xf0] sm:$0xf]
  %v76 = vld [vmem:[%s0 + $0xf4] sm:$0xf]
  %v77 = vld [vmem:[%s0 + $0xf8] sm:$0xf]
  %v78 = vld [vmem:[%s0 + $0xfc] sm:$0xf]
  %v79 = vld [vmem:[%s0 + $0x100] sm:$0xf]
  %v80 = vld [vmem:[%s0 + $0x104] sm:$0xf]
  %v81 = vld [vmem:[%s0 + $0x108] sm:$0xf]
  %v82 = vld [vmem:[%s0 + $0x10c] sm:$0xf]
  %v83 = vld [vmem:[%s0 + $0x110] sm:$0xf]
  %v84 = vld [vmem:[%s0 + $0x114] sm:$0xf]
  %v85 = vld [vmem:[%s0 + $0x118] sm:$0xf]
  %v86 = vld [vmem:[%s0 + $0x11c] sm:$0xf]
  %v87 = vld [vmem:[%s0 + $0x120] sm:$0xf]
  %v88 = vld [vmem:[%s0 + $0x124] sm:$0xf]
  %v89 = vld [vmem:[%s0 + $0x128] sm:$0xf]
  %v90 = vld [vmem:[%s0 + $0x12c] sm:$0xf]
  %v91 = vld [vmem:[%s0 + $0x130] sm:$0xf]
  %v92 = vld [vmem:[%s0 + $0x134] sm:$0xf]
  %v93 = vld [vmem:[%s0 + $0x138] sm:$0xf]
  %v94 = vld [vmem:[%s0 + $0x13c] sm:$0xf]
  %v95 = vld [vmem:[%s0 + $0x140] sm:$0xf]
  %v96 = vld [vmem:[%s0 + $0x144] sm:$0xf]
  %v97 = vld [vmem:[%s0 + $0x148] sm:$0xf]
  %v98 = vld [vmem:[%s0 + $0x14c] sm:$0xf]
  %v99 = vld [vmem:[%s0 + $0x150] sm:$0xf]
  %v100 = vld [vmem:[%s0 + $0x154] sm:$0xf]
  %v101 = vld [vmem:[%s0 + $0x158] sm:$0xf]
  %v102 = vld [vmem:[%s0 + $0x15c] sm:$0xf]
  %v103 = vld [vmem:[%s0 + $0x160] sm:$0xf]
  %v104 = vld [vmem:[%s0 + $0x164] sm:$0xf]
  %v105 = vld [vmem:[%s0 + $0x168] sm:$0xf]
  %v106 = vld [vmem:[%s0 + $0x16c] sm:$0xf]
  %v107 = vld [vmem:[%s0 + $0x170] sm:$0xf]
  %v108 = vld [vmem:[%s0 + $0x174] sm:$0xf]
  %v109 = vld [vmem:[%s0 + $0x178] sm:$0xf]
  %v110 = vld [vmem:[%s0 + $0x17c] sm:$0xf]
  %v111 = vld [vmem:[%s0 + $0x180] sm:$0xf]
  %v112 = vld [vmem:[%s0 + $0x184] sm:$0xf]
  %v113 = vld [vmem:[%s0 + $0x188] sm:$0xf]
  %v114 = vld [vmem:[%s0 + $0x18c] sm:$0xf]
  %v115 = vld [vmem:[%s0 + $0x190] sm:$0xf]
  %v116 = vld [vmem:[%s0 + $0x194] sm:$0xf]
  %v117 = vld [vmem:[%s0 + $0x198] sm:$0xf]
  %v118 = vld [vmem:[%s0 + $0x19c] sm:$0xf]
  %v119 = vld [vmem:[%s0 + $0x1a0] sm:$0xf]
  %v120 = vld [vmem:[%s0 + $0x1a4] sm:$0xf]
  %v121 = vld [vmem:[%s0 + $0x1a8] sm:$0xf]
  %v122 = vld [vmem:[%s0 + $0x1ac] sm:$0xf]
  %v123 = vld [vmem:[%s0 + $0x1b0] sm:$0xf]
  %v124 = vld [vmem:[%s0 + $0x1b4] sm:$0xf]
  %v125 = vld [vmem:[%s0 + $0x1b8] sm:$0xf]
  %v126 = vld [vmem:[%s0 + $0x1bc] sm:$0xf]
  %v127 = vld [vmem:[%s0 + $0x1c0] sm:$0xf]
  %v128 = vld [vmem:[%s0 + $0x1c4] sm:$0xf]
  %v129 = vld [vmem:[%s0 + $0x1c8] sm:$0xf]
  %v130 = vld [vmem:[%s0 + $0x1cc] sm:$0xf]
  %v131 = vld [vmem:[%s0 + $0x1d0] sm:$0xf]
  %v132 = vld [vmem:[%s0 + $0x1d4] sm:$0xf]
  %v133 = vld [vmem:[%s0 + $0x1d8] sm:$0xf]
  %v134 = vld [vmem:[%s0 + $0x1dc] sm:$0xf]
  %v135 = vld [vmem:[%s0 + $0x1e0] sm:$0xf]
  %v136 = vld [vmem:[%s0 + $0x1e4] sm:$0xf]
  %v137 = vld [vmem:[%s0 + $0x1e8] sm:$0xf]
  %v138 = vld [vmem:[%s0 + $0x1ec] sm:$0xf]
  %v139 = vld [vmem:[%s0 + $0x1f0] sm:$0xf]
  %v140 = vld [vmem:[%s0 + $0x1f4] sm:$0xf]
  %v141 = vld [vmem:[%s0 + $0x1f8] sm:$0xf]
  %v142 = vld [vmem:[%s0 + $0x1fc] sm:$0xf]
  %v143 = vld [vmem:[%s0 + $0x200] sm:$0xf]
  %v144 = vld [vmem:[%s0 + $0x204] sm:$0xf]
  %v145 = vld [vmem:[%s0 + $0x208] sm:$0xf]
  %v146 = vld [vmem:[%s0 + $0x20c] sm:$0xf]
  %v147 = vld [vmem:[%s0 + $0x210] sm:$0xf]
  %v148 = vld [vmem:[%s0 + $0x214] sm:$0xf]
  %v149 = vld [vmem:[%s0 + $0x218] sm:$0xf]
  %v150 = vld [vmem:[%s0 + $0x21c] sm:$0xf]
  %v151 = vld [vmem:[%s0 + $0x220] sm:$0xf]
  %v152 = vld [vmem:[%s0 + $0x224] sm:$0xf]
  %v153 = vld [vmem:[%s0 + $0x228] sm:$0xf]
  %v154 = vld [vmem:[%s0 + $0x22c] sm:$0xf]
  %v155 = vld [vmem:[%s0 + $0x230] sm:$0xf]
  %v156 = vld [vmem:[%s0 + $0x234] sm:$0xf]
  %v157 = vld [vmem:[%s0 + $0x238] sm:$0xf]
  %v158 = vld [vmem:[%s0 + $0x23c] sm:$0xf]
  %v159 = vld [vmem:[%s0 + $0x240] sm:$0xf]
  %v160 = vld [vmem:[%s0 + $0x244] sm:$0xf]
  %v161 = vld [vmem:[%s0 + $0x248] sm:$0xf]
  %v162 = vld [vmem:[%s0 + $0x24c] sm:$0xf]
  %v163 = vld [vmem:[%s0 + $0x250] sm:$0xf]
  %v164 = vld [vmem:[%s0 + $0x254] sm:$0xf]
  %v165 = vld [vmem:[%s0 + $0x258] sm:$0xf]
  %v166 = vld [vmem:[%s0 + $0x25c] sm:$0xf]
  %v167 = vld [vmem:[%s0 + $0x260] sm:$0xf]
  %v168 = vld [vmem:[%s0 + $0x264] sm:$0xf]
  %v169 = vld [vmem:[%s0 + $0x268] sm:$0xf]
  %v170 = vld [vmem:[%s0 + $0x26c] sm:$0xf]
  %v171 = vld [vmem:[%s0 + $0x270] sm:$0xf]
  %v172 = vld [vmem:[%s0 + $0x274] sm:$0xf]
  %v173 = vld [vmem:[%s0 + $0x278] sm:$0xf]
  %v174 = vld [vmem:[%s0 + $0x27c] sm:$0xf]
  %v175 = vld [vmem:[%s0 + $0x280] sm:$0xf]
  %v176 = vld [vmem:[%s0 + $0x284] sm:$0xf]
  %v177 = vld [vmem:[%s0 + $0x288] sm:$0xf]
  %v178 = vld [vmem:[%s0 + $0x28c] sm:$0xf]
  %v179 = vld [vmem:[%s0 + $0x290] sm:$0xf]
  %v180 = vld [vmem:[%s0 + $0x294] sm:$0xf]
  %v181 = vld [vmem:[%s0 + $0x298] sm:$0xf]
  %v182 = vld [vmem:[%s0 + $0x29c] sm:$0xf]
  %v183 = vld [vmem:[%s0 + $0x2a0] sm:$0xf]
  %v184 = vld [vmem:[%s0 + $0x2a4] sm:$0xf]
  %v185 = vld [vmem:[%s0 + $0x2a8] sm:$0xf]
  %v186 = vld [vmem:[%s0 + $0x2ac] sm:$0xf]
  %v187 = vld [vmem:[%s0 + $0x2b0] sm:$0xf]
  %v188 = vld [vmem:[%s0 + $0x2b4] sm:$0xf]
  %v189 = vld [vmem:[%s0 + $0x2b8] sm:$0xf]
  %v190 = vld [vmem:[%s0 + $0x2bc] sm:$0xf]
  %v191 = vld [vmem:[%s0 + $0x2c0] sm:$0xf]
  %v192 = vld [vmem:[%s0 + $0x2c4] sm:$0xf]
  %v193 = vld [vmem:[%s0 + $0x2c8] sm:$0xf]
  %v194 = vld [vmem:[%s0 + $0x2cc] sm:$0xf]
  %v195 = vld [vmem:[%s0 + $0x2d0] sm:$0xf]
  %v196 = vld [vmem:[%s0 + $0x2d4] sm:$0xf]
  %v197 = vld [vmem:[%s0 + $0x2d8] sm:$0xf]
  %v198 = vld [vmem:[%s0 + $0x2dc] sm:$0xf]
  %v199 = vld [vmem:[%s0 + $0x2e0] sm:$0xf]
  %v200 = vld [vmem:[%s0 + $0x2e4] sm:$0xf]
  %v201 = vld [vmem:[%s0 + $0x2e8] sm:$0xf]
  %v202 = vld [vmem:[%s0 + $0x2ec] sm:$0xf]
  %v203 = vld [vmem:[%s0 + $0x2f0] sm:$0xf]
  %v204 = vld [vmem:[%s0 + $0x2f4] sm:$0xf]
  %v205 = vld [vmem:[%s0 + $0x2f8] sm:$0xf]
  %v206 = vld [vmem:[%s0 + $0x2fc] sm:$0xf]
  %v207 = vld [vmem:[%s0 + $0x300] sm:$0xf]
  %v208 = vld [vmem:[%s0 + $0x304] sm:$0xf]
  %v209 = vld [vmem:[%s0 + $0x308] sm:$0xf]
  %v210 = vld [vmem:[%s0 + $0x30c] sm:$0xf]
  %v211 = vld [vmem:[%s0 + $0x310] sm:$0xf]
  %v212 = vld [vmem:[%s0 + $0x314] sm:$0xf]
  %v213 = vld [vmem:[%s0 + $0x318] sm:$0xf]
  %v214 = vld [vmem:[%s0 + $0x31c] sm:$0xf]
  %v215 = vld [vmem:[%s1] sm:$0xf]
  %v216 = vld [vmem:[%s1 + $0x4] sm:$0xf]
  %v217 = vld [vmem:[%s1 + $0x8] sm:$0xf]
  %v218 = vld [vmem:[%s1 + $0xc] sm:$0xf]
  %v219 = vld [vmem:[%s1 + $0x10] sm:$0xf]
  %v220 = vld [vmem:[%s1 + $0x14] sm:$0xf]
  %v221 = vld [vmem:[%s1 + $0x18] sm:$0xf]
  %v222 = vld [vmem:[%s1 + $0x1c] sm:$0xf]
  %v223 = vld [vmem:[%s1 + $0x20] sm:$0xf]
  %v224 = vld [vmem:[%s1 + $0x24] sm:$0xf]
  %v225 = vld [vmem:[%s1 + $0x28] sm:$0xf]
  %v226 = vld [vmem:[%s1 + $0x2c] sm:$0xf]
  %v227 = vld [vmem:[%s1 + $0x30] sm:$0xf]
  %v228 = vld [vmem:[%s1 + $0x34] sm:$0xf]
  %v229 = vld [vmem:[%s1 + $0x38] sm:$0xf]
  %v230 = vld [vmem:[%s1 + $0x3c] sm:$0xf]
  %v431 = vunpack.c.l.b16 %v15
  %v432 = vunpack.c.l.b16 %v16
  %v433 = vunpack.c.l.b16 %v17
  %v434 = vunpack.c.l.b16 %v18
  %v435 = vunpack.c.l.b16 %v19
  %v436 = vunpack.c.l.b16 %v20
  %v437 = vunpack.c.l.b16 %v21
  %v438 = vunpack.c.l.b16 %v22
  %v439 = vunpack.c.l.b16 %v23
  %v440 = vunpack.c.l.b16 %v24
  %v441 = vunpack.c.l.b16 %v25
  %v442 = vunpack.c.l.b16 %v26
  %v443 = vunpack.c.l.b16 %v27
  %v444 = vunpack.c.l.b16 %v28
  %v445 = vunpack.c.l.b16 %v29
  %v446 = vunpack.c.l.b16 %v30
  %v447 = vunpack.c.l.b16 %v31
  %v448 = vunpack.c.l.b16 %v32
  %v449 = vunpack.c.l.b16 %v33
  %v450 = vunpack.c.l.b16 %v34
  %v451 = vunpack.c.l.b16 %v35
  %v452 = vunpack.c.l.b16 %v36
  %v453 = vunpack.c.l.b16 %v37
  %v454 = vunpack.c.l.b16 %v38
  %v455 = vunpack.c.l.b16 %v39
  %v456 = vunpack.c.l.b16 %v40
  %v457 = vunpack.c.l.b16 %v41
  %v458 = vunpack.c.l.b16 %v42
  %v459 = vunpack.c.l.b16 %v43
  %v460 = vunpack.c.l.b16 %v44
  %v461 = vunpack.c.l.b16 %v45
  %v462 = vunpack.c.l.b16 %v46
  %v463 = vunpack.c.l.b16 %v47
  %v464 = vunpack.c.l.b16 %v48
  %v465 = vunpack.c.l.b16 %v49
  %v466 = vunpack.c.l.b16 %v50
  %v467 = vunpack.c.l.b16 %v51
  %v468 = vunpack.c.l.b16 %v52
  %v469 = vunpack.c.l.b16 %v53
  %v470 = vunpack.c.l.b16 %v54
  %v471 = vunpack.c.l.b16 %v55
  %v472 = vunpack.c.l.b16 %v56
  %v473 = vunpack.c.l.b16 %v57
  %v474 = vunpack.c.l.b16 %v58
  %v475 = vunpack.c.l.b16 %v59
  %v476 = vunpack.c.l.b16 %v60
  %v477 = vunpack.c.l.b16 %v61
  %v478 = vunpack.c.l.b16 %v62
  %v479 = vunpack.c.l.b16 %v63
  %v480 = vunpack.c.l.b16 %v64
  %v481 = vunpack.c.l.b16 %v65
  %v482 = vunpack.c.l.b16 %v66
  %v483 = vunpack.c.l.b16 %v67
  %v484 = vunpack.c.l.b16 %v68
  %v485 = vunpack.c.l.b16 %v69
  %v486 = vunpack.c.l.b16 %v70
  %v487 = vunpack.c.l.b16 %v71
  %v488 = vunpack.c.l.b16 %v72
  %v489 = vunpack.c.l.b16 %v73
  %v490 = vunpack.c.l.b16 %v74
  %v491 = vunpack.c.l.b16 %v75
  %v492 = vunpack.c.l.b16 %v76
  %v493 = vunpack.c.l.b16 %v77
  %v494 = vunpack.c.l.b16 %v78
  %v495 = vunpack.c.l.b16 %v79
  %v496 = vunpack.c.l.b16 %v80
  %v497 = vunpack.c.l.b16 %v81
  %v498 = vunpack.c.l.b16 %v82
  %v499 = vunpack.c.l.b16 %v83
  %v500 = vunpack.c.l.b16 %v84
  %v501 = vunpack.c.l.b16 %v85
  %v502 = vunpack.c.l.b16 %v86
  %v503 = vunpack.c.l.b16 %v87
  %v504 = vunpack.c.l.b16 %v88
  %v505 = vunpack.c.l.b16 %v89
  %v506 = vunpack.c.l.b16 %v90
  %v507 = vunpack.c.l.b16 %v91
  %v508 = vunpack.c.l.b16 %v92
  %v509 = vunpack.c.l.b16 %v93
  %v510 = vunpack.c.l.b16 %v94
  %v511 = vunpack.c.l.b16 %v95
  %v512 = vunpack.c.l.b16 %v96
  %v513 = vunpack.c.l.b16 %v97
  %v514 = vunpack.c.l.b16 %v98
  %v515 = vunpack.c.l.b16 %v99
  %v516 = vunpack.c.l.b16 %v100
  %v517 = vunpack.c.l.b16 %v101
  %v518 = vunpack.c.l.b16 %v102
  %v519 = vunpack.c.l.b16 %v103
  %v520 = vunpack.c.l.b16 %v104
  %v521 = vunpack.c.l.b16 %v105
  %v522 = vunpack.c.l.b16 %v106
  %v523 = vunpack.c.l.b16 %v107
  %v524 = vunpack.c.l.b16 %v108
  %v525 = vunpack.c.l.b16 %v109
  %v526 = vunpack.c.l.b16 %v110
  %v527 = vunpack.c.l.b16 %v111
  %v528 = vunpack.c.l.b16 %v112
  %v529 = vunpack.c.l.b16 %v113
  %v530 = vunpack.c.l.b16 %v114
  %v531 = vunpack.c.l.b16 %v115
  %v532 = vunpack.c.l.b16 %v116
  %v533 = vunpack.c.l.b16 %v117
  %v534 = vunpack.c.l.b16 %v118
  %v535 = vunpack.c.l.b16 %v119
  %v536 = vunpack.c.l.b16 %v120
  %v537 = vunpack.c.l.b16 %v121
  %v538 = vunpack.c.l.b16 %v122
  %v539 = vunpack.c.l.b16 %v123
  %v540 = vunpack.c.l.b16 %v124
  %v541 = vunpack.c.l.b16 %v125
  %v542 = vunpack.c.l.b16 %v126
  %v543 = vunpack.c.l.b16 %v127
  %v544 = vunpack.c.l.b16 %v128
  %v545 = vunpack.c.l.b16 %v129
  %v546 = vunpack.c.l.b16 %v130
  %v547 = vunpack.c.l.b16 %v131
  %v548 = vunpack.c.l.b16 %v132
  %v549 = vunpack.c.l.b16 %v133
  %v550 = vunpack.c.l.b16 %v134
  %v551 = vunpack.c.l.b16 %v135
  %v552 = vunpack.c.l.b16 %v136
  %v553 = vunpack.c.l.b16 %v137
  %v554 = vunpack.c.l.b16 %v138
  %v555 = vunpack.c.l.b16 %v139
  %v556 = vunpack.c.l.b16 %v140
  %v557 = vunpack.c.l.b16 %v141
  %v558 = vunpack.c.l.b16 %v142
  %v559 = vunpack.c.l.b16 %v143
  %v560 = vunpack.c.l.b16 %v144
  %v561 = vunpack.c.l.b16 %v145
  %v562 = vunpack.c.l.b16 %v146
  %v563 = vunpack.c.l.b16 %v147
  %v564 = vunpack.c.l.b16 %v148
  %v565 = vunpack.c.l.b16 %v149
  %v566 = vunpack.c.l.b16 %v150
  %v567 = vunpack.c.l.b16 %v151
  %v568 = vunpack.c.l.b16 %v152
  %v569 = vunpack.c.l.b16 %v153
  %v570 = vunpack.c.l.b16 %v154
  %v571 = vunpack.c.l.b16 %v155
  %v572 = vunpack.c.l.b16 %v156
  %v573 = vunpack.c.l.b16 %v157
  %v574 = vunpack.c.l.b16 %v158
  %v575 = vunpack.c.l.b16 %v159
  %v576 = vunpack.c.l.b16 %v160
  %v577 = vunpack.c.l.b16 %v161
  %v578 = vunpack.c.l.b16 %v162
  %v579 = vunpack.c.l.b16 %v163
  %v580 = vunpack.c.l.b16 %v164
  %v581 = vunpack.c.l.b16 %v165
  %v582 = vunpack.c.l.b16 %v166
  %v583 = vunpack.c.l.b16 %v167
  %v584 = vunpack.c.l.b16 %v168
  %v585 = vunpack.c.l.b16 %v169
  %v586 = vunpack.c.l.b16 %v170
  %v587 = vunpack.c.l.b16 %v171
  %v588 = vunpack.c.l.b16 %v172
  %v589 = vunpack.c.l.b16 %v173
  %v590 = vunpack.c.l.b16 %v174
  %v591 = vunpack.c.l.b16 %v175
  %v592 = vunpack.c.l.b16 %v176
  %v593 = vunpack.c.l.b16 %v177
  %v594 = vunpack.c.l.b16 %v178
  %v595 = vunpack.c.l.b16 %v179
  %v596 = vunpack.c.l.b16 %v180
  %v597 = vunpack.c.l.b16 %v181
  %v598 = vunpack.c.l.b16 %v182
  %v599 = vunpack.c.l.b16 %v183
  %v600 = vunpack.c.l.b16 %v184
  %v601 = vunpack.c.l.b16 %v185
  %v602 = vunpack.c.l.b16 %v186
  %v603 = vunpack.c.l.b16 %v187
  %v604 = vunpack.c.l.b16 %v188
  %v605 = vunpack.c.l.b16 %v189
  %v606 = vunpack.c.l.b16 %v190
  %v607 = vunpack.c.l.b16 %v191
  %v608 = vunpack.c.l.b16 %v192
  %v609 = vunpack.c.l.b16 %v193
  %v610 = vunpack.c.l.b16 %v194
  %v611 = vunpack.c.l.b16 %v195
  %v612 = vunpack.c.l.b16 %v196
  %v613 = vunpack.c.l.b16 %v197
  %v614 = vunpack.c.l.b16 %v198
  %v615 = vunpack.c.l.b16 %v199
  %v616 = vunpack.c.l.b16 %v200
  %v617 = vunpack.c.l.b16 %v201
  %v618 = vunpack.c.l.b16 %v202
  %v619 = vunpack.c.l.b16 %v203
  %v620 = vunpack.c.l.b16 %v204
  %v621 = vunpack.c.l.b16 %v205
  %v622 = vunpack.c.l.b16 %v206
  %v623 = vunpack.c.l.b16 %v207
  %v624 = vunpack.c.l.b16 %v208
  %v625 = vunpack.c.l.b16 %v209
  %v626 = vunpack.c.l.b16 %v210
  %v627 = vunpack.c.l.b16 %v211
  %v628 = vunpack.c.l.b16 %v212
  %v629 = vunpack.c.l.b16 %v213
  %v630 = vunpack.c.l.b16 %v214
  %v631 = vpack.c.b16 %v432, %v431
  %v632 = vpack.c.b16 %v434, %v433
  %v633 = vpack.c.b16 %v436, %v435
  %v634 = vpack.c.b16 %v438, %v437
  %v635 = vpack.c.b16 %v440, %v439
  %v636 = vpack.c.b16 %v442, %v441
  %v637 = vpack.c.b16 %v444, %v443
  %v638 = vpack.c.b16 %v446, %v445
  %v639 = vpack.c.b16 %v448, %v447
  %v640 = vpack.c.b16 %v450, %v449
  %v641 = vpack.c.b16 %v452, %v451
  %v642 = vpack.c.b16 %v454, %v453
  %v643 = vpack.c.b16 %v456, %v455
  %v644 = vpack.c.b16 %v458, %v457
  %v645 = vpack.c.b16 %v460, %v459
  %v646 = vpack.c.b16 %v462, %v461
  %v647 = vpack.c.b16 %v464, %v463
  %v648 = vpack.c.b16 %v466, %v465
  %v649 = vpack.c.b16 %v468, %v467
  %v650 = vpack.c.b16 %v470, %v469
  %v651 = vpack.c.b16 %v472, %v471
  %v652 = vpack.c.b16 %v474, %v473
  %v653 = vpack.c.b16 %v476, %v475
  %v654 = vpack.c.b16 %v478, %v477
  %v655 = vpack.c.b16 %v480, %v479
  %v656 = vpack.c.b16 %v482, %v481
  %v657 = vpack.c.b16 %v484, %v483
  %v658 = vpack.c.b16 %v486, %v485
  %v659 = vpack.c.b16 %v488, %v487
  %v660 = vpack.c.b16 %v490, %v489
  %v661 = vpack.c.b16 %v492, %v491
  %v662 = vpack.c.b16 %v494, %v493
  %v663 = vpack.c.b16 %v496, %v495
  %v664 = vpack.c.b16 %v498, %v497
  %v665 = vpack.c.b16 %v500, %v499
  %v666 = vpack.c.b16 %v502, %v501
  %v667 = vpack.c.b16 %v504, %v503
  %v668 = vpack.c.b16 %v506, %v505
  %v669 = vpack.c.b16 %v508, %v507
  %v670 = vpack.c.b16 %v510, %v509
  %v671 = vpack.c.b16 %v512, %v511
  %v672 = vpack.c.b16 %v514, %v513
  %v673 = vpack.c.b16 %v516, %v515
  %v674 = vpack.c.b16 %v518, %v517
  %v675 = vpack.c.b16 %v520, %v519
  %v676 = vpack.c.b16 %v522, %v521
  %v677 = vpack.c.b16 %v524, %v523
  %v678 = vpack.c.b16 %v526, %v525
  %v679 = vpack.c.b16 %v528, %v527
  %v680 = vpack.c.b16 %v530, %v529
  %v681 = vpack.c.b16 %v532, %v531
  %v682 = vpack.c.b16 %v534, %v533
  %v683 = vpack.c.b16 %v536, %v535
  %v684 = vpack.c.b16 %v538, %v537
  %v685 = vpack.c.b16 %v540, %v539
  %v686 = vpack.c.b16 %v542, %v541
  %v687 = vpack.c.b16 %v544, %v543
  %v688 = vpack.c.b16 %v546, %v545
  %v689 = vpack.c.b16 %v548, %v547
  %v690 = vpack.c.b16 %v550, %v549
  %v691 = vpack.c.b16 %v552, %v551
  %v692 = vpack.c.b16 %v554, %v553
  %v693 = vpack.c.b16 %v556, %v555
  %v694 = vpack.c.b16 %v558, %v557
  %v695 = vpack.c.b16 %v560, %v559
  %v696 = vpack.c.b16 %v562, %v561
  %v697 = vpack.c.b16 %v564, %v563
  %v698 = vpack.c.b16 %v566, %v565
  %v699 = vpack.c.b16 %v568, %v567
  %v700 = vpack.c.b16 %v570, %v569
  %v701 = vpack.c.b16 %v572, %v571
  %v702 = vpack.c.b16 %v574, %v573
  %v703 = vpack.c.b16 %v576, %v575
  %v704 = vpack.c.b16 %v578, %v577
  %v705 = vpack.c.b16 %v580, %v579
  %v706 = vpack.c.b16 %v582, %v581
  %v707 = vpack.c.b16 %v584, %v583
  %v708 = vpack.c.b16 %v586, %v585
  %v709 = vpack.c.b16 %v588, %v587
  %v710 = vpack.c.b16 %v590, %v589
  %v711 = vpack.c.b16 %v592, %v591
  %v712 = vpack.c.b16 %v594, %v593
  %v713 = vpack.c.b16 %v596, %v595
  %v714 = vpack.c.b16 %v598, %v597
  %v715 = vpack.c.b16 %v600, %v599
  %v716 = vpack.c.b16 %v602, %v601
  %v717 = vpack.c.b16 %v604, %v603
  %v718 = vpack.c.b16 %v606, %v605
  %v719 = vpack.c.b16 %v608, %v607
  %v720 = vpack.c.b16 %v610, %v609
  %v721 = vpack.c.b16 %v612, %v611
  %v722 = vpack.c.b16 %v614, %v613
  %v723 = vpack.c.b16 %v616, %v615
  %v724 = vpack.c.b16 %v618, %v617
  %v725 = vpack.c.b16 %v620, %v619
  %v726 = vpack.c.b16 %v622, %v621
  %v727 = vpack.c.b16 %v624, %v623
  %v728 = vpack.c.b16 %v626, %v625
  %v729 = vpack.c.b16 %v628, %v627
  %v730 = vpack.c.b16 %v630, %v629
  %v847 = vunpack.c.l.b16 %v215
  %v848 = vunpack.c.l.b16 %v216
  %v849 = vunpack.c.l.b16 %v217
  %v850 = vunpack.c.l.b16 %v218
  %v851 = vunpack.c.l.b16 %v219
  %v852 = vunpack.c.l.b16 %v220
  %v853 = vunpack.c.l.b16 %v221
  %v854 = vunpack.c.l.b16 %v222
  %v855 = vunpack.c.l.b16 %v223
  %v856 = vunpack.c.l.b16 %v224
  %v857 = vunpack.c.l.b16 %v225
  %v858 = vunpack.c.l.b16 %v226
  %v859 = vunpack.c.l.b16 %v227
  %v860 = vunpack.c.l.b16 %v228
  %v861 = vunpack.c.l.b16 %v229
  %v862 = vunpack.c.l.b16 %v230
  %v863 = vpack.c.b16 %v848, %v847
  %v864 = vpack.c.b16 %v850, %v849
  %v865 = vpack.c.b16 %v852, %v851
  %v866 = vpack.c.b16 %v854, %v853
  %v867 = vpack.c.b16 %v856, %v855
  %v868 = vpack.c.b16 %v858, %v857
  %v869 = vpack.c.b16 %v860, %v859
  %v870 = vpack.c.b16 %v862, %v861
  %879 = vmatprep.subr.bf16.mxu0 0
  %880 = vmatpush1.bf16.msra.mxu0 %v870
  %881 = vmatprep.subr.bf16.mxu0 0
  %882 = vmatpush1.bf16.msra.mxu0 %v869
  %883 = vmatprep.subr.bf16.mxu0 0
  %884 = vmatpush1.bf16.msra.mxu0 %v868
  %885 = vmatprep.subr.bf16.mxu0 0
  %886 = vmatpush1.bf16.msra.mxu0 %v867
  %887 = vmatprep.subr.bf16.mxu0 0
  %888 = vmatpush1.bf16.msra.mxu0 %v866
  %889 = vmatprep.subr.bf16.mxu0 0
  %890 = vmatpush1.bf16.msra.mxu0 %v865
  %891 = vmatprep.subr.bf16.mxu0 0
  %892 = vmatpush1.bf16.msra.mxu0 %v864
  %893 = vmatprep.subr.bf16.mxu0 0
  %894 = vmatpush1.bf16.msra.mxu0 %v863
  %895 = vmatprep.subr.bf16.mxu0 0
  %896 = vmatpush2.bf16.msra.mxu0 0
  %897 = vmatprep.subr.bf16.mxu0 0
  %898 = vmatpush2.bf16.msra.mxu0 0
  %899 = vmatprep.subr.bf16.mxu0 0
  %900 = vmatpush2.bf16.msra.mxu0 0
  %901 = vmatprep.subr.bf16.mxu0 0
  %902 = vmatpush2.bf16.msra.mxu0 0
  %903 = vmatprep.subr.bf16.mxu0 0
  %904 = vmatpush2.bf16.msra.mxu0 0
  %905 = vmatprep.subr.bf16.mxu0 0
  %906 = vmatpush2.bf16.msra.mxu0 0
  %907 = vmatprep.subr.bf16.mxu0 0
  %908 = vmatpush2.bf16.msra.mxu0 0
  %909 = vmatprep.subr.bf16.mxu0 0
  %910 = vmatpush2.bf16.msra.mxu0 0
  %911 = vmatprep.mubr.bf16.mxu0 0
  %912 = vmatmul.mubr.bf16.gmra.mxu0 %v631
  %v913 = vpop.f32.mrf.mxu0
  %v914 = vadd.f32 0.0, %v913
  %v915 = vpop.f32.mrf.mxu0
  %v916 = vpop.f32.mrf.mxu0
  %v917 = vadd.f32 0.0, %v916
  %v918 = vpop.f32.mrf.mxu0
  %919 = vmatprep.mubr.bf16.mxu0 0
  %920 = vmatmul.mubr.bf16.gmra.mxu0 %v632
  %v921 = vpop.f32.mrf.mxu0
  %v922 = vadd.f32 0.0, %v921
  %v923 = vpop.f32.mrf.mxu0
  %v924 = vpop.f32.mrf.mxu0
  %v925 = vadd.f32 0.0, %v924
  %v926 = vpop.f32.mrf.mxu0
  %927 = vmatprep.mubr.bf16.mxu0 0
  %928 = vmatmul.mubr.bf16.gmra.mxu0 %v633
  %v929 = vpop.f32.mrf.mxu0
  %v930 = vadd.f32 0.0, %v929
  %v931 = vpop.f32.mrf.mxu0
  %v932 = vpop.f32.mrf.mxu0
  %v933 = vadd.f32 0.0, %v932
  %v934 = vpop.f32.mrf.mxu0
  %935 = vmatprep.mubr.bf16.mxu0 0
  %936 = vmatmul.mubr.bf16.gmra.mxu0 %v634
  %v937 = vpop.f32.mrf.mxu0
  %v938 = vadd.f32 0.0, %v937
  %v939 = vpop.f32.mrf.mxu0
  %v940 = vpop.f32.mrf.mxu0
  %v941 = vadd.f32 0.0, %v940
  %v942 = vpop.f32.mrf.mxu0
  %943 = vmatprep.mubr.bf16.mxu0 0
  %944 = vmatmul.mubr.bf16.gmra.mxu0 %v635
  %v945 = vpop.f32.mrf.mxu0
  %v946 = vadd.f32 0.0, %v945
  %v947 = vpop.f32.mrf.mxu0
  %v948 = vpop.f32.mrf.mxu0
  %v949 = vadd.f32 0.0, %v948
  %v950 = vpop.f32.mrf.mxu0
  %951 = vmatprep.mubr.bf16.mxu0 0
  %952 = vmatmul.mubr.bf16.gmra.mxu0 %v636
  %v953 = vpop.f32.mrf.mxu0
  %v954 = vadd.f32 0.0, %v953
  %v955 = vpop.f32.mrf.mxu0
  %v956 = vpop.f32.mrf.mxu0
  %v957 = vadd.f32 0.0, %v956
  %v958 = vpop.f32.mrf.mxu0
  %959 = vmatprep.mubr.bf16.mxu0 0
  %960 = vmatmul.mubr.bf16.gmra.mxu0 %v637
  %v961 = vpop.f32.mrf.mxu0
  %v962 = vadd.f32 0.0, %v961
  %v963 = vpop.f32.mrf.mxu0
  %v964 = vpop.f32.mrf.mxu0
  %v965 = vadd.f32 0.0, %v964
  %v966 = vpop.f32.mrf.mxu0
  %967 = vmatprep.mubr.bf16.mxu0 0
  %968 = vmatmul.mubr.bf16.gmra.mxu0 %v638
  %v969 = vpop.f32.mrf.mxu0
  %v970 = vadd.f32 0.0, %v969
  %v971 = vpop.f32.mrf.mxu0
  %v972 = vpop.f32.mrf.mxu0
  %v973 = vadd.f32 0.0, %v972
  %v974 = vpop.f32.mrf.mxu0
  %975 = vmatprep.mubr.bf16.mxu0 0
  %976 = vmatmul.mubr.bf16.gmra.mxu0 %v639
  %v977 = vpop.f32.mrf.mxu0
  %v978 = vadd.f32 0.0, %v977
  %v979 = vpop.f32.mrf.mxu0
  %v980 = vpop.f32.mrf.mxu0
  %v981 = vadd.f32 0.0, %v980
  %v982 = vpop.f32.mrf.mxu0
  %983 = vmatprep.mubr.bf16.mxu0 0
  %984 = vmatmul.mubr.bf16.gmra.mxu0 %v640
  %v985 = vpop.f32.mrf.mxu0
  %v986 = vadd.f32 0.0, %v985
  %v987 = vpop.f32.mrf.mxu0
  %v988 = vpop.f32.mrf.mxu0
  %v989 = vadd.f32 0.0, %v988
  %v990 = vpop.f32.mrf.mxu0
  %991 = vmatprep.mubr.bf16.mxu0 0
  %992 = vmatmul.mubr.bf16.gmra.mxu0 %v641
  %v993 = vpop.f32.mrf.mxu0
  %v994 = vadd.f32 0.0, %v993
  %v995 = vpop.f32.mrf.mxu0
  %v996 = vpop.f32.mrf.mxu0
  %v997 = vadd.f32 0.0, %v996
  %v998 = vpop.f32.mrf.mxu0
  %999 = vmatprep.mubr.bf16.mxu0 0
  %1000 = vmatmul.mubr.bf16.gmra.mxu0 %v642
  %v1001 = vpop.f32.mrf.mxu0
  %v1002 = vadd.f32 0.0, %v1001
  %v1003 = vpop.f32.mrf.mxu0
  %v1004 = vpop.f32.mrf.mxu0
  %v1005 = vadd.f32 0.0, %v1004
  %v1006 = vpop.f32.mrf.mxu0
  %1007 = vmatprep.mubr.bf16.mxu0 0
  %1008 = vmatmul.mubr.bf16.gmra.mxu0 %v643
  %v1009 = vpop.f32.mrf.mxu0
  %v1010 = vadd.f32 0.0, %v1009
  %v1011 = vpop.f32.mrf.mxu0
  %v1012 = vpop.f32.mrf.mxu0
  %v1013 = vadd.f32 0.0, %v1012
  %v1014 = vpop.f32.mrf.mxu0
  %1015 = vmatprep.mubr.bf16.mxu0 0
  %1016 = vmatmul.mubr.bf16.gmra.mxu0 %v644
  %v1017 = vpop.f32.mrf.mxu0
  %v1018 = vadd.f32 0.0, %v1017
  %v1019 = vpop.f32.mrf.mxu0
  %v1020 = vpop.f32.mrf.mxu0
  %v1021 = vadd.f32 0.0, %v1020
  %v1022 = vpop.f32.mrf.mxu0
  %1023 = vmatprep.mubr.bf16.mxu0 0
  %1024 = vmatmul.mubr.bf16.gmra.mxu0 %v645
  %v1025 = vpop.f32.mrf.mxu0
  %v1026 = vadd.f32 0.0, %v1025
  %v1027 = vpop.f32.mrf.mxu0
  %v1028 = vpop.f32.mrf.mxu0
  %v1029 = vadd.f32 0.0, %v1028
  %v1030 = vpop.f32.mrf.mxu0
  %1031 = vmatprep.mubr.bf16.mxu0 0
  %1032 = vmatmul.mubr.bf16.gmra.mxu0 %v646
  %v1033 = vpop.f32.mrf.mxu0
  %v1034 = vadd.f32 0.0, %v1033
  %v1035 = vpop.f32.mrf.mxu0
  %v1036 = vpop.f32.mrf.mxu0
  %v1037 = vadd.f32 0.0, %v1036
  %v1038 = vpop.f32.mrf.mxu0
  %1039 = vmatprep.mubr.bf16.mxu0 0
  %1040 = vmatmul.mubr.bf16.gmra.mxu0 %v647
  %v1041 = vpop.f32.mrf.mxu0
  %v1042 = vadd.f32 0.0, %v1041
  %v1043 = vpop.f32.mrf.mxu0
  %v1044 = vpop.f32.mrf.mxu0
  %v1045 = vadd.f32 0.0, %v1044
  %v1046 = vpop.f32.mrf.mxu0
  %1047 = vmatprep.mubr.bf16.mxu0 0
  %1048 = vmatmul.mubr.bf16.gmra.mxu0 %v648
  %v1049 = vpop.f32.mrf.mxu0
  %v1050 = vadd.f32 0.0, %v1049
  %v1051 = vpop.f32.mrf.mxu0
  %v1052 = vpop.f32.mrf.mxu0
  %v1053 = vadd.f32 0.0, %v1052
  %v1054 = vpop.f32.mrf.mxu0
  %1055 = vmatprep.mubr.bf16.mxu0 0
  %1056 = vmatmul.mubr.bf16.gmra.mxu0 %v649
  %v1057 = vpop.f32.mrf.mxu0
  %v1058 = vadd.f32 0.0, %v1057
  %v1059 = vpop.f32.mrf.mxu0
  %v1060 = vpop.f32.mrf.mxu0
  %v1061 = vadd.f32 0.0, %v1060
  %v1062 = vpop.f32.mrf.mxu0
  %1063 = vmatprep.mubr.bf16.mxu0 0
  %1064 = vmatmul.mubr.bf16.gmra.mxu0 %v650
  %v1065 = vpop.f32.mrf.mxu0
  %v1066 = vadd.f32 0.0, %v1065
  %v1067 = vpop.f32.mrf.mxu0
  %v1068 = vpop.f32.mrf.mxu0
  %v1069 = vadd.f32 0.0, %v1068
  %v1070 = vpop.f32.mrf.mxu0
  %1071 = vmatprep.mubr.bf16.mxu0 0
  %1072 = vmatmul.mubr.bf16.gmra.mxu0 %v651
  %v1073 = vpop.f32.mrf.mxu0
  %v1074 = vadd.f32 0.0, %v1073
  %v1075 = vpop.f32.mrf.mxu0
  %v1076 = vpop.f32.mrf.mxu0
  %v1077 = vadd.f32 0.0, %v1076
  %v1078 = vpop.f32.mrf.mxu0
  %1079 = vmatprep.mubr.bf16.mxu0 0
  %1080 = vmatmul.mubr.bf16.gmra.mxu0 %v652
  %v1081 = vpop.f32.mrf.mxu0
  %v1082 = vadd.f32 0.0, %v1081
  %v1083 = vpop.f32.mrf.mxu0
  %v1084 = vpop.f32.mrf.mxu0
  %v1085 = vadd.f32 0.0, %v1084
  %v1086 = vpop.f32.mrf.mxu0
  %1087 = vmatprep.mubr.bf16.mxu0 0
  %1088 = vmatmul.mubr.bf16.gmra.mxu0 %v653
  %v1089 = vpop.f32.mrf.mxu0
  %v1090 = vadd.f32 0.0, %v1089
  %v1091 = vpop.f32.mrf.mxu0
  %v1092 = vpop.f32.mrf.mxu0
  %v1093 = vadd.f32 0.0, %v1092
  %v1094 = vpop.f32.mrf.mxu0
  %1095 = vmatprep.mubr.bf16.mxu0 0
  %1096 = vmatmul.mubr.bf16.gmra.mxu0 %v654
  %v1097 = vpop.f32.mrf.mxu0
  %v1098 = vadd.f32 0.0, %v1097
  %v1099 = vpop.f32.mrf.mxu0
  %v1100 = vpop.f32.mrf.mxu0
  %v1101 = vadd.f32 0.0, %v1100
  %v1102 = vpop.f32.mrf.mxu0
  %1103 = vmatprep.mubr.bf16.mxu0 0
  %1104 = vmatmul.mubr.bf16.gmra.mxu0 %v655
  %v1105 = vpop.f32.mrf.mxu0
  %v1106 = vadd.f32 0.0, %v1105
  %v1107 = vpop.f32.mrf.mxu0
  %v1108 = vpop.f32.mrf.mxu0
  %v1109 = vadd.f32 0.0, %v1108
  %v1110 = vpop.f32.mrf.mxu0
  %1111 = vmatprep.mubr.bf16.mxu0 0
  %1112 = vmatmul.mubr.bf16.gmra.mxu0 %v656
  %v1113 = vpop.f32.mrf.mxu0
  %v1114 = vadd.f32 0.0, %v1113
  %v1115 = vpop.f32.mrf.mxu0
  %v1116 = vpop.f32.mrf.mxu0
  %v1117 = vadd.f32 0.0, %v1116
  %v1118 = vpop.f32.mrf.mxu0
  %1119 = vmatprep.mubr.bf16.mxu0 0
  %1120 = vmatmul.mubr.bf16.gmra.mxu0 %v657
  %v1121 = vpop.f32.mrf.mxu0
  %v1122 = vadd.f32 0.0, %v1121
  %v1123 = vpop.f32.mrf.mxu0
  %v1124 = vpop.f32.mrf.mxu0
  %v1125 = vadd.f32 0.0, %v1124
  %v1126 = vpop.f32.mrf.mxu0
  %1127 = vmatprep.mubr.bf16.mxu0 0
  %1128 = vmatmul.mubr.bf16.gmra.mxu0 %v658
  %v1129 = vpop.f32.mrf.mxu0
  %v1130 = vadd.f32 0.0, %v1129
  %v1131 = vpop.f32.mrf.mxu0
  %v1132 = vpop.f32.mrf.mxu0
  %v1133 = vadd.f32 0.0, %v1132
  %v1134 = vpop.f32.mrf.mxu0
  %1135 = vmatprep.mubr.bf16.mxu0 0
  %1136 = vmatmul.mubr.bf16.gmra.mxu0 %v659
  %v1137 = vpop.f32.mrf.mxu0
  %v1138 = vadd.f32 0.0, %v1137
  %v1139 = vpop.f32.mrf.mxu0
  %v1140 = vpop.f32.mrf.mxu0
  %v1141 = vadd.f32 0.0, %v1140
  %v1142 = vpop.f32.mrf.mxu0
  %1143 = vmatprep.mubr.bf16.mxu0 0
  %1144 = vmatmul.mubr.bf16.gmra.mxu0 %v660
  %v1145 = vpop.f32.mrf.mxu0
  %v1146 = vadd.f32 0.0, %v1145
  %v1147 = vpop.f32.mrf.mxu0
  %v1148 = vpop.f32.mrf.mxu0
  %v1149 = vadd.f32 0.0, %v1148
  %v1150 = vpop.f32.mrf.mxu0
  %1151 = vmatprep.mubr.bf16.mxu0 0
  %1152 = vmatmul.mubr.bf16.gmra.mxu0 %v661
  %v1153 = vpop.f32.mrf.mxu0
  %v1154 = vadd.f32 0.0, %v1153
  %v1155 = vpop.f32.mrf.mxu0
  %v1156 = vpop.f32.mrf.mxu0
  %v1157 = vadd.f32 0.0, %v1156
  %v1158 = vpop.f32.mrf.mxu0
  %1159 = vmatprep.mubr.bf16.mxu0 0
  %1160 = vmatmul.mubr.bf16.gmra.mxu0 %v662
  %v1161 = vpop.f32.mrf.mxu0
  %v1162 = vadd.f32 0.0, %v1161
  %v1163 = vpop.f32.mrf.mxu0
  %v1164 = vpop.f32.mrf.mxu0
  %v1165 = vadd.f32 0.0, %v1164
  %v1166 = vpop.f32.mrf.mxu0
  %1167 = vmatprep.mubr.bf16.mxu0 0
  %1168 = vmatmul.mubr.bf16.gmra.mxu0 %v663
  %v1169 = vpop.f32.mrf.mxu0
  %v1170 = vadd.f32 0.0, %v1169
  %v1171 = vpop.f32.mrf.mxu0
  %v1172 = vpop.f32.mrf.mxu0
  %v1173 = vadd.f32 0.0, %v1172
  %v1174 = vpop.f32.mrf.mxu0
  %1175 = vmatprep.mubr.bf16.mxu0 0
  %1176 = vmatmul.mubr.bf16.gmra.mxu0 %v664
  %v1177 = vpop.f32.mrf.mxu0
  %v1178 = vadd.f32 0.0, %v1177
  %v1179 = vpop.f32.mrf.mxu0
  %v1180 = vpop.f32.mrf.mxu0
  %v1181 = vadd.f32 0.0, %v1180
  %v1182 = vpop.f32.mrf.mxu0
  %1183 = vmatprep.mubr.bf16.mxu0 0
  %1184 = vmatmul.mubr.bf16.gmra.mxu0 %v665
  %v1185 = vpop.f32.mrf.mxu0
  %v1186 = vadd.f32 0.0, %v1185
  %v1187 = vpop.f32.mrf.mxu0
  %v1188 = vpop.f32.mrf.mxu0
  %v1189 = vadd.f32 0.0, %v1188
  %v1190 = vpop.f32.mrf.mxu0
  %1191 = vmatprep.mubr.bf16.mxu0 0
  %1192 = vmatmul.mubr.bf16.gmra.mxu0 %v666
  %v1193 = vpop.f32.mrf.mxu0
  %v1194 = vadd.f32 0.0, %v1193
  %v1195 = vpop.f32.mrf.mxu0
  %v1196 = vpop.f32.mrf.mxu0
  %v1197 = vadd.f32 0.0, %v1196
  %v1198 = vpop.f32.mrf.mxu0
  %1199 = vmatprep.mubr.bf16.mxu0 0
  %1200 = vmatmul.mubr.bf16.gmra.mxu0 %v667
  %v1201 = vpop.f32.mrf.mxu0
  %v1202 = vadd.f32 0.0, %v1201
  %v1203 = vpop.f32.mrf.mxu0
  %v1204 = vpop.f32.mrf.mxu0
  %v1205 = vadd.f32 0.0, %v1204
  %v1206 = vpop.f32.mrf.mxu0
  %1207 = vmatprep.mubr.bf16.mxu0 0
  %1208 = vmatmul.mubr.bf16.gmra.mxu0 %v668
  %v1209 = vpop.f32.mrf.mxu0
  %v1210 = vadd.f32 0.0, %v1209
  %v1211 = vpop.f32.mrf.mxu0
  %v1212 = vpop.f32.mrf.mxu0
  %v1213 = vadd.f32 0.0, %v1212
  %v1214 = vpop.f32.mrf.mxu0
  %1215 = vmatprep.mubr.bf16.mxu0 0
  %1216 = vmatmul.mubr.bf16.gmra.mxu0 %v669
  %v1217 = vpop.f32.mrf.mxu0
  %v1218 = vadd.f32 0.0, %v1217
  %v1219 = vpop.f32.mrf.mxu0
  %v1220 = vpop.f32.mrf.mxu0
  %v1221 = vadd.f32 0.0, %v1220
  %v1222 = vpop.f32.mrf.mxu0
  %1223 = vmatprep.mubr.bf16.mxu0 0
  %1224 = vmatmul.mubr.bf16.gmra.mxu0 %v670
  %v1225 = vpop.f32.mrf.mxu0
  %v1226 = vadd.f32 0.0, %v1225
  %v1227 = vpop.f32.mrf.mxu0
  %v1228 = vpop.f32.mrf.mxu0
  %v1229 = vadd.f32 0.0, %v1228
  %v1230 = vpop.f32.mrf.mxu0
  %1231 = vmatprep.mubr.bf16.mxu0 0
  %1232 = vmatmul.mubr.bf16.gmra.mxu0 %v671
  %v1233 = vpop.f32.mrf.mxu0
  %v1234 = vadd.f32 0.0, %v1233
  %v1235 = vpop.f32.mrf.mxu0
  %v1236 = vpop.f32.mrf.mxu0
  %v1237 = vadd.f32 0.0, %v1236
  %v1238 = vpop.f32.mrf.mxu0
  %1239 = vmatprep.mubr.bf16.mxu0 0
  %1240 = vmatmul.mubr.bf16.gmra.mxu0 %v672
  %v1241 = vpop.f32.mrf.mxu0
  %v1242 = vadd.f32 0.0, %v1241
  %v1243 = vpop.f32.mrf.mxu0
  %v1244 = vpop.f32.mrf.mxu0
  %v1245 = vadd.f32 0.0, %v1244
  %v1246 = vpop.f32.mrf.mxu0
  %1247 = vmatprep.mubr.bf16.mxu0 0
  %1248 = vmatmul.mubr.bf16.gmra.mxu0 %v673
  %v1249 = vpop.f32.mrf.mxu0
  %v1250 = vadd.f32 0.0, %v1249
  %v1251 = vpop.f32.mrf.mxu0
  %v1252 = vpop.f32.mrf.mxu0
  %v1253 = vadd.f32 0.0, %v1252
  %v1254 = vpop.f32.mrf.mxu0
  %1255 = vmatprep.mubr.bf16.mxu0 0
  %1256 = vmatmul.mubr.bf16.gmra.mxu0 %v674
  %v1257 = vpop.f32.mrf.mxu0
  %v1258 = vadd.f32 0.0, %v1257
  %v1259 = vpop.f32.mrf.mxu0
  %v1260 = vpop.f32.mrf.mxu0
  %v1261 = vadd.f32 0.0, %v1260
  %v1262 = vpop.f32.mrf.mxu0
  %1263 = vmatprep.mubr.bf16.mxu0 0
  %1264 = vmatmul.mubr.bf16.gmra.mxu0 %v675
  %v1265 = vpop.f32.mrf.mxu0
  %v1266 = vadd.f32 0.0, %v1265
  %v1267 = vpop.f32.mrf.mxu0
  %v1268 = vpop.f32.mrf.mxu0
  %v1269 = vadd.f32 0.0, %v1268
  %v1270 = vpop.f32.mrf.mxu0
  %1271 = vmatprep.mubr.bf16.mxu0 0
  %1272 = vmatmul.mubr.bf16.gmra.mxu0 %v676
  %v1273 = vpop.f32.mrf.mxu0
  %v1274 = vadd.f32 0.0, %v1273
  %v1275 = vpop.f32.mrf.mxu0
  %v1276 = vpop.f32.mrf.mxu0
  %v1277 = vadd.f32 0.0, %v1276
  %v1278 = vpop.f32.mrf.mxu0
  %1279 = vmatprep.mubr.bf16.mxu0 0
  %1280 = vmatmul.mubr.bf16.gmra.mxu0 %v677
  %v1281 = vpop.f32.mrf.mxu0
  %v1282 = vadd.f32 0.0, %v1281
  %v1283 = vpop.f32.mrf.mxu0
  %v1284 = vpop.f32.mrf.mxu0
  %v1285 = vadd.f32 0.0, %v1284
  %v1286 = vpop.f32.mrf.mxu0
  %1287 = vmatprep.mubr.bf16.mxu0 0
  %1288 = vmatmul.mubr.bf16.gmra.mxu0 %v678
  %v1289 = vpop.f32.mrf.mxu0
  %v1290 = vadd.f32 0.0, %v1289
  %v1291 = vpop.f32.mrf.mxu0
  %v1292 = vpop.f32.mrf.mxu0
  %v1293 = vadd.f32 0.0, %v1292
  %v1294 = vpop.f32.mrf.mxu0
  %1295 = vmatprep.mubr.bf16.mxu0 0
  %1296 = vmatmul.mubr.bf16.gmra.mxu0 %v679
  %v1297 = vpop.f32.mrf.mxu0
  %v1298 = vadd.f32 0.0, %v1297
  %v1299 = vpop.f32.mrf.mxu0
  %v1300 = vpop.f32.mrf.mxu0
  %v1301 = vadd.f32 0.0, %v1300
  %v1302 = vpop.f32.mrf.mxu0
  %1303 = vmatprep.mubr.bf16.mxu0 0
  %1304 = vmatmul.mubr.bf16.gmra.mxu0 %v680
  %v1305 = vpop.f32.mrf.mxu0
  %v1306 = vadd.f32 0.0, %v1305
  %v1307 = vpop.f32.mrf.mxu0
  %v1308 = vpop.f32.mrf.mxu0
  %v1309 = vadd.f32 0.0, %v1308
  %v1310 = vpop.f32.mrf.mxu0
  %1311 = vmatprep.mubr.bf16.mxu0 0
  %1312 = vmatmul.mubr.bf16.gmra.mxu0 %v681
  %v1313 = vpop.f32.mrf.mxu0
  %v1314 = vadd.f32 0.0, %v1313
  %v1315 = vpop.f32.mrf.mxu0
  %v1316 = vpop.f32.mrf.mxu0
  %v1317 = vadd.f32 0.0, %v1316
  %v1318 = vpop.f32.mrf.mxu0
  %1319 = vmatprep.mubr.bf16.mxu0 0
  %1320 = vmatmul.mubr.bf16.gmra.mxu0 %v682
  %v1321 = vpop.f32.mrf.mxu0
  %v1322 = vadd.f32 0.0, %v1321
  %v1323 = vpop.f32.mrf.mxu0
  %v1324 = vpop.f32.mrf.mxu0
  %v1325 = vadd.f32 0.0, %v1324
  %v1326 = vpop.f32.mrf.mxu0
  %1327 = vmatprep.mubr.bf16.mxu0 0
  %1328 = vmatmul.mubr.bf16.gmra.mxu0 %v683
  %v1329 = vpop.f32.mrf.mxu0
  %v1330 = vadd.f32 0.0, %v1329
  %v1331 = vpop.f32.mrf.mxu0
  %v1332 = vpop.f32.mrf.mxu0
  %v1333 = vadd.f32 0.0, %v1332
  %v1334 = vpop.f32.mrf.mxu0
  %1335 = vmatprep.mubr.bf16.mxu0 0
  %1336 = vmatmul.mubr.bf16.gmra.mxu0 %v684
  %v1337 = vpop.f32.mrf.mxu0
  %v1338 = vadd.f32 0.0, %v1337
  %v1339 = vpop.f32.mrf.mxu0
  %v1340 = vpop.f32.mrf.mxu0
  %v1341 = vadd.f32 0.0, %v1340
  %v1342 = vpop.f32.mrf.mxu0
  %1343 = vmatprep.mubr.bf16.mxu0 0
  %1344 = vmatmul.mubr.bf16.gmra.mxu0 %v685
  %v1345 = vpop.f32.mrf.mxu0
  %v1346 = vadd.f32 0.0, %v1345
  %v1347 = vpop.f32.mrf.mxu0
  %v1348 = vpop.f32.mrf.mxu0
  %v1349 = vadd.f32 0.0, %v1348
  %v1350 = vpop.f32.mrf.mxu0
  %1351 = vmatprep.mubr.bf16.mxu0 0
  %1352 = vmatmul.mubr.bf16.gmra.mxu0 %v686
  %v1353 = vpop.f32.mrf.mxu0
  %v1354 = vadd.f32 0.0, %v1353
  %v1355 = vpop.f32.mrf.mxu0
  %v1356 = vpop.f32.mrf.mxu0
  %v1357 = vadd.f32 0.0, %v1356
  %v1358 = vpop.f32.mrf.mxu0
  %1359 = vmatprep.mubr.bf16.mxu0 0
  %1360 = vmatmul.mubr.bf16.gmra.mxu0 %v687
  %v1361 = vpop.f32.mrf.mxu0
  %v1362 = vadd.f32 0.0, %v1361
  %v1363 = vpop.f32.mrf.mxu0
  %v1364 = vpop.f32.mrf.mxu0
  %v1365 = vadd.f32 0.0, %v1364
  %v1366 = vpop.f32.mrf.mxu0
  %1367 = vmatprep.mubr.bf16.mxu0 0
  %1368 = vmatmul.mubr.bf16.gmra.mxu0 %v688
  %v1369 = vpop.f32.mrf.mxu0
  %v1370 = vadd.f32 0.0, %v1369
  %v1371 = vpop.f32.mrf.mxu0
  %v1372 = vpop.f32.mrf.mxu0
  %v1373 = vadd.f32 0.0, %v1372
  %v1374 = vpop.f32.mrf.mxu0
  %1375 = vmatprep.mubr.bf16.mxu0 0
  %1376 = vmatmul.mubr.bf16.gmra.mxu0 %v689
  %v1377 = vpop.f32.mrf.mxu0
  %v1378 = vadd.f32 0.0, %v1377
  %v1379 = vpop.f32.mrf.mxu0
  %v1380 = vpop.f32.mrf.mxu0
  %v1381 = vadd.f32 0.0, %v1380
  %v1382 = vpop.f32.mrf.mxu0
  %1383 = vmatprep.mubr.bf16.mxu0 0
  %1384 = vmatmul.mubr.bf16.gmra.mxu0 %v690
  %v1385 = vpop.f32.mrf.mxu0
  %v1386 = vadd.f32 0.0, %v1385
  %v1387 = vpop.f32.mrf.mxu0
  %v1388 = vpop.f32.mrf.mxu0
  %v1389 = vadd.f32 0.0, %v1388
  %v1390 = vpop.f32.mrf.mxu0
  %1391 = vmatprep.mubr.bf16.mxu0 0
  %1392 = vmatmul.mubr.bf16.gmra.mxu0 %v691
  %v1393 = vpop.f32.mrf.mxu0
  %v1394 = vadd.f32 0.0, %v1393
  %v1395 = vpop.f32.mrf.mxu0
  %v1396 = vpop.f32.mrf.mxu0
  %v1397 = vadd.f32 0.0, %v1396
  %v1398 = vpop.f32.mrf.mxu0
  %1399 = vmatprep.mubr.bf16.mxu0 0
  %1400 = vmatmul.mubr.bf16.gmra.mxu0 %v692
  %v1401 = vpop.f32.mrf.mxu0
  %v1402 = vadd.f32 0.0, %v1401
  %v1403 = vpop.f32.mrf.mxu0
  %v1404 = vpop.f32.mrf.mxu0
  %v1405 = vadd.f32 0.0, %v1404
  %v1406 = vpop.f32.mrf.mxu0
  %1407 = vmatprep.mubr.bf16.mxu0 0
  %1408 = vmatmul.mubr.bf16.gmra.mxu0 %v693
  %v1409 = vpop.f32.mrf.mxu0
  %v1410 = vadd.f32 0.0, %v1409
  %v1411 = vpop.f32.mrf.mxu0
  %v1412 = vpop.f32.mrf.mxu0
  %v1413 = vadd.f32 0.0, %v1412
  %v1414 = vpop.f32.mrf.mxu0
  %1415 = vmatprep.mubr.bf16.mxu0 0
  %1416 = vmatmul.mubr.bf16.gmra.mxu0 %v694
  %v1417 = vpop.f32.mrf.mxu0
  %v1418 = vadd.f32 0.0, %v1417
  %v1419 = vpop.f32.mrf.mxu0
  %v1420 = vpop.f32.mrf.mxu0
  %v1421 = vadd.f32 0.0, %v1420
  %v1422 = vpop.f32.mrf.mxu0
  %1423 = vmatprep.mubr.bf16.mxu0 0
  %1424 = vmatmul.mubr.bf16.gmra.mxu0 %v695
  %v1425 = vpop.f32.mrf.mxu0
  %v1426 = vadd.f32 0.0, %v1425
  %v1427 = vpop.f32.mrf.mxu0
  %v1428 = vpop.f32.mrf.mxu0
  %v1429 = vadd.f32 0.0, %v1428
  %v1430 = vpop.f32.mrf.mxu0
  %1431 = vmatprep.mubr.bf16.mxu0 0
  %1432 = vmatmul.mubr.bf16.gmra.mxu0 %v696
  %v1433 = vpop.f32.mrf.mxu0
  %v1434 = vadd.f32 0.0, %v1433
  %v1435 = vpop.f32.mrf.mxu0
  %v1436 = vpop.f32.mrf.mxu0
  %v1437 = vadd.f32 0.0, %v1436
  %v1438 = vpop.f32.mrf.mxu0
  %1439 = vmatprep.mubr.bf16.mxu0 0
  %1440 = vmatmul.mubr.bf16.gmra.mxu0 %v697
  %v1441 = vpop.f32.mrf.mxu0
  %v1442 = vadd.f32 0.0, %v1441
  %v1443 = vpop.f32.mrf.mxu0
  %v1444 = vpop.f32.mrf.mxu0
  %v1445 = vadd.f32 0.0, %v1444
  %v1446 = vpop.f32.mrf.mxu0
  %1447 = vmatprep.mubr.bf16.mxu0 0
  %1448 = vmatmul.mubr.bf16.gmra.mxu0 %v698
  %v1449 = vpop.f32.mrf.mxu0
  %v1450 = vadd.f32 0.0, %v1449
  %v1451 = vpop.f32.mrf.mxu0
  %v1452 = vpop.f32.mrf.mxu0
  %v1453 = vadd.f32 0.0, %v1452
  %v1454 = vpop.f32.mrf.mxu0
  %1455 = vmatprep.mubr.bf16.mxu0 0
  %1456 = vmatmul.mubr.bf16.gmra.mxu0 %v699
  %v1457 = vpop.f32.mrf.mxu0
  %v1458 = vadd.f32 0.0, %v1457
  %v1459 = vpop.f32.mrf.mxu0
  %v1460 = vpop.f32.mrf.mxu0
  %v1461 = vadd.f32 0.0, %v1460
  %v1462 = vpop.f32.mrf.mxu0
  %1463 = vmatprep.mubr.bf16.mxu0 0
  %1464 = vmatmul.mubr.bf16.gmra.mxu0 %v700
  %v1465 = vpop.f32.mrf.mxu0
  %v1466 = vadd.f32 0.0, %v1465
  %v1467 = vpop.f32.mrf.mxu0
  %v1468 = vpop.f32.mrf.mxu0
  %v1469 = vadd.f32 0.0, %v1468
  %v1470 = vpop.f32.mrf.mxu0
  %1471 = vmatprep.mubr.bf16.mxu0 0
  %1472 = vmatmul.mubr.bf16.gmra.mxu0 %v701
  %v1473 = vpop.f32.mrf.mxu0
  %v1474 = vadd.f32 0.0, %v1473
  %v1475 = vpop.f32.mrf.mxu0
  %v1476 = vpop.f32.mrf.mxu0
  %v1477 = vadd.f32 0.0, %v1476
  %v1478 = vpop.f32.mrf.mxu0
  %1479 = vmatprep.mubr.bf16.mxu0 0
  %1480 = vmatmul.mubr.bf16.gmra.mxu0 %v702
  %v1481 = vpop.f32.mrf.mxu0
  %v1482 = vadd.f32 0.0, %v1481
  %v1483 = vpop.f32.mrf.mxu0
  %v1484 = vpop.f32.mrf.mxu0
  %v1485 = vadd.f32 0.0, %v1484
  %v1486 = vpop.f32.mrf.mxu0
  %1487 = vmatprep.mubr.bf16.mxu0 0
  %1488 = vmatmul.mubr.bf16.gmra.mxu0 %v703
  %v1489 = vpop.f32.mrf.mxu0
  %v1490 = vadd.f32 0.0, %v1489
  %v1491 = vpop.f32.mrf.mxu0
  %v1492 = vpop.f32.mrf.mxu0
  %v1493 = vadd.f32 0.0, %v1492
  %v1494 = vpop.f32.mrf.mxu0
  %1495 = vmatprep.mubr.bf16.mxu0 0
  %1496 = vmatmul.mubr.bf16.gmra.mxu0 %v704
  %v1497 = vpop.f32.mrf.mxu0
  %v1498 = vadd.f32 0.0, %v1497
  %v1499 = vpop.f32.mrf.mxu0
  %v1500 = vpop.f32.mrf.mxu0
  %v1501 = vadd.f32 0.0, %v1500
  %v1502 = vpop.f32.mrf.mxu0
  %1503 = vmatprep.mubr.bf16.mxu0 0
  %1504 = vmatmul.mubr.bf16.gmra.mxu0 %v705
  %v1505 = vpop.f32.mrf.mxu0
  %v1506 = vadd.f32 0.0, %v1505
  %v1507 = vpop.f32.mrf.mxu0
  %v1508 = vpop.f32.mrf.mxu0
  %v1509 = vadd.f32 0.0, %v1508
  %v1510 = vpop.f32.mrf.mxu0
  %1511 = vmatprep.mubr.bf16.mxu0 0
  %1512 = vmatmul.mubr.bf16.gmra.mxu0 %v706
  %v1513 = vpop.f32.mrf.mxu0
  %v1514 = vadd.f32 0.0, %v1513
  %v1515 = vpop.f32.mrf.mxu0
  %v1516 = vpop.f32.mrf.mxu0
  %v1517 = vadd.f32 0.0, %v1516
  %v1518 = vpop.f32.mrf.mxu0
  %1519 = vmatprep.mubr.bf16.mxu0 0
  %1520 = vmatmul.mubr.bf16.gmra.mxu0 %v707
  %v1521 = vpop.f32.mrf.mxu0
  %v1522 = vadd.f32 0.0, %v1521
  %v1523 = vpop.f32.mrf.mxu0
  %v1524 = vpop.f32.mrf.mxu0
  %v1525 = vadd.f32 0.0, %v1524
  %v1526 = vpop.f32.mrf.mxu0
  %1527 = vmatprep.mubr.bf16.mxu0 0
  %1528 = vmatmul.mubr.bf16.gmra.mxu0 %v708
  %v1529 = vpop.f32.mrf.mxu0
  %v1530 = vadd.f32 0.0, %v1529
  %v1531 = vpop.f32.mrf.mxu0
  %v1532 = vpop.f32.mrf.mxu0
  %v1533 = vadd.f32 0.0, %v1532
  %v1534 = vpop.f32.mrf.mxu0
  %1535 = vmatprep.mubr.bf16.mxu0 0
  %1536 = vmatmul.mubr.bf16.gmra.mxu0 %v709
  %v1537 = vpop.f32.mrf.mxu0
  %v1538 = vadd.f32 0.0, %v1537
  %v1539 = vpop.f32.mrf.mxu0
  %v1540 = vpop.f32.mrf.mxu0
  %v1541 = vadd.f32 0.0, %v1540
  %v1542 = vpop.f32.mrf.mxu0
  %1543 = vmatprep.mubr.bf16.mxu0 0
  %1544 = vmatmul.mubr.bf16.gmra.mxu0 %v710
  %v1545 = vpop.f32.mrf.mxu0
  %v1546 = vadd.f32 0.0, %v1545
  %v1547 = vpop.f32.mrf.mxu0
  %v1548 = vpop.f32.mrf.mxu0
  %v1549 = vadd.f32 0.0, %v1548
  %v1550 = vpop.f32.mrf.mxu0
  %1551 = vmatprep.mubr.bf16.mxu0 0
  %1552 = vmatmul.mubr.bf16.gmra.mxu0 %v711
  %v1553 = vpop.f32.mrf.mxu0
  %v1554 = vadd.f32 0.0, %v1553
  %v1555 = vpop.f32.mrf.mxu0
  %v1556 = vpop.f32.mrf.mxu0
  %v1557 = vadd.f32 0.0, %v1556
  %v1558 = vpop.f32.mrf.mxu0
  %1559 = vmatprep.mubr.bf16.mxu0 0
  %1560 = vmatmul.mubr.bf16.gmra.mxu0 %v712
  %v1561 = vpop.f32.mrf.mxu0
  %v1562 = vadd.f32 0.0, %v1561
  %v1563 = vpop.f32.mrf.mxu0
  %v1564 = vpop.f32.mrf.mxu0
  %v1565 = vadd.f32 0.0, %v1564
  %v1566 = vpop.f32.mrf.mxu0
  %1567 = vmatprep.mubr.bf16.mxu0 0
  %1568 = vmatmul.mubr.bf16.gmra.mxu0 %v713
  %v1569 = vpop.f32.mrf.mxu0
  %v1570 = vadd.f32 0.0, %v1569
  %v1571 = vpop.f32.mrf.mxu0
  %v1572 = vpop.f32.mrf.mxu0
  %v1573 = vadd.f32 0.0, %v1572
  %v1574 = vpop.f32.mrf.mxu0
  %1575 = vmatprep.mubr.bf16.mxu0 0
  %1576 = vmatmul.mubr.bf16.gmra.mxu0 %v714
  %v1577 = vpop.f32.mrf.mxu0
  %v1578 = vadd.f32 0.0, %v1577
  %v1579 = vpop.f32.mrf.mxu0
  %v1580 = vpop.f32.mrf.mxu0
  %v1581 = vadd.f32 0.0, %v1580
  %v1582 = vpop.f32.mrf.mxu0
  %1583 = vmatprep.mubr.bf16.mxu0 0
  %1584 = vmatmul.mubr.bf16.gmra.mxu0 %v715
  %v1585 = vpop.f32.mrf.mxu0
  %v1586 = vadd.f32 0.0, %v1585
  %v1587 = vpop.f32.mrf.mxu0
  %v1588 = vpop.f32.mrf.mxu0
  %v1589 = vadd.f32 0.0, %v1588
  %v1590 = vpop.f32.mrf.mxu0
  %1591 = vmatprep.mubr.bf16.mxu0 0
  %1592 = vmatmul.mubr.bf16.gmra.mxu0 %v716
  %v1593 = vpop.f32.mrf.mxu0
  %v1594 = vadd.f32 0.0, %v1593
  %v1595 = vpop.f32.mrf.mxu0
  %v1596 = vpop.f32.mrf.mxu0
  %v1597 = vadd.f32 0.0, %v1596
  %v1598 = vpop.f32.mrf.mxu0
  %1599 = vmatprep.mubr.bf16.mxu0 0
  %1600 = vmatmul.mubr.bf16.gmra.mxu0 %v717
  %v1601 = vpop.f32.mrf.mxu0
  %v1602 = vadd.f32 0.0, %v1601
  %v1603 = vpop.f32.mrf.mxu0
  %v1604 = vpop.f32.mrf.mxu0
  %v1605 = vadd.f32 0.0, %v1604
  %v1606 = vpop.f32.mrf.mxu0
  %1607 = vmatprep.mubr.bf16.mxu0 0
  %1608 = vmatmul.mubr.bf16.gmra.mxu0 %v718
  %v1609 = vpop.f32.mrf.mxu0
  %v1610 = vadd.f32 0.0, %v1609
  %v1611 = vpop.f32.mrf.mxu0
  %v1612 = vpop.f32.mrf.mxu0
  %v1613 = vadd.f32 0.0, %v1612
  %v1614 = vpop.f32.mrf.mxu0
  %1615 = vmatprep.mubr.bf16.mxu0 0
  %1616 = vmatmul.mubr.bf16.gmra.mxu0 %v719
  %v1617 = vpop.f32.mrf.mxu0
  %v1618 = vadd.f32 0.0, %v1617
  %v1619 = vpop.f32.mrf.mxu0
  %v1620 = vpop.f32.mrf.mxu0
  %v1621 = vadd.f32 0.0, %v1620
  %v1622 = vpop.f32.mrf.mxu0
  %1623 = vmatprep.mubr.bf16.mxu0 0
  %1624 = vmatmul.mubr.bf16.gmra.mxu0 %v720
  %v1625 = vpop.f32.mrf.mxu0
  %v1626 = vadd.f32 0.0, %v1625
  %v1627 = vpop.f32.mrf.mxu0
  %v1628 = vpop.f32.mrf.mxu0
  %v1629 = vadd.f32 0.0, %v1628
  %v1630 = vpop.f32.mrf.mxu0
  %1631 = vmatprep.mubr.bf16.mxu0 0
  %1632 = vmatmul.mubr.bf16.gmra.mxu0 %v721
  %v1633 = vpop.f32.mrf.mxu0
  %v1634 = vadd.f32 0.0, %v1633
  %v1635 = vpop.f32.mrf.mxu0
  %v1636 = vpop.f32.mrf.mxu0
  %v1637 = vadd.f32 0.0, %v1636
  %v1638 = vpop.f32.mrf.mxu0
  %1639 = vmatprep.mubr.bf16.mxu0 0
  %1640 = vmatmul.mubr.bf16.gmra.mxu0 %v722
  %v1641 = vpop.f32.mrf.mxu0
  %v1642 = vadd.f32 0.0, %v1641
  %v1643 = vpop.f32.mrf.mxu0
  %v1644 = vpop.f32.mrf.mxu0
  %v1645 = vadd.f32 0.0, %v1644
  %v1646 = vpop.f32.mrf.mxu0
  %1647 = vmatprep.mubr.bf16.mxu0 0
  %1648 = vmatmul.mubr.bf16.gmra.mxu0 %v723
  %v1649 = vpop.f32.mrf.mxu0
  %v1650 = vadd.f32 0.0, %v1649
  %v1651 = vpop.f32.mrf.mxu0
  %v1652 = vpop.f32.mrf.mxu0
  %v1653 = vadd.f32 0.0, %v1652
  %v1654 = vpop.f32.mrf.mxu0
  %1655 = vmatprep.mubr.bf16.mxu0 0
  %1656 = vmatmul.mubr.bf16.gmra.mxu0 %v724
  %v1657 = vpop.f32.mrf.mxu0
  %v1658 = vadd.f32 0.0, %v1657
  %v1659 = vpop.f32.mrf.mxu0
  %v1660 = vpop.f32.mrf.mxu0
  %v1661 = vadd.f32 0.0, %v1660
  %v1662 = vpop.f32.mrf.mxu0
  %1663 = vmatprep.mubr.bf16.mxu0 0
  %1664 = vmatmul.mubr.bf16.gmra.mxu0 %v725
  %v1665 = vpop.f32.mrf.mxu0
  %v1666 = vadd.f32 0.0, %v1665
  %v1667 = vpop.f32.mrf.mxu0
  %v1668 = vpop.f32.mrf.mxu0
  %v1669 = vadd.f32 0.0, %v1668
  %v1670 = vpop.f32.mrf.mxu0
  %1671 = vmatprep.mubr.bf16.mxu0 0
  %1672 = vmatmul.mubr.bf16.gmra.mxu0 %v726
  %v1673 = vpop.f32.mrf.mxu0
  %v1674 = vadd.f32 0.0, %v1673
  %v1675 = vpop.f32.mrf.mxu0
  %v1676 = vpop.f32.mrf.mxu0
  %v1677 = vadd.f32 0.0, %v1676
  %v1678 = vpop.f32.mrf.mxu0
  %1679 = vmatprep.mubr.bf16.mxu0 0
  %1680 = vmatmul.mubr.bf16.gmra.mxu0 %v727
  %v1681 = vpop.f32.mrf.mxu0
  %v1682 = vadd.f32 0.0, %v1681
  %v1683 = vpop.f32.mrf.mxu0
  %v1684 = vpop.f32.mrf.mxu0
  %v1685 = vadd.f32 0.0, %v1684
  %v1686 = vpop.f32.mrf.mxu0
  %1687 = vmatprep.mubr.bf16.mxu0 0
  %1688 = vmatmul.mubr.bf16.gmra.mxu0 %v728
  %v1689 = vpop.f32.mrf.mxu0
  %v1690 = vadd.f32 0.0, %v1689
  %v1691 = vpop.f32.mrf.mxu0
  %v1692 = vpop.f32.mrf.mxu0
  %v1693 = vadd.f32 0.0, %v1692
  %v1694 = vpop.f32.mrf.mxu0
  %1695 = vmatprep.mubr.bf16.mxu0 0
  %1696 = vmatmul.mubr.bf16.gmra.mxu0 %v729
  %v1697 = vpop.f32.mrf.mxu0
  %v1698 = vadd.f32 0.0, %v1697
  %v1699 = vpop.f32.mrf.mxu0
  %v1700 = vpop.f32.mrf.mxu0
  %v1701 = vadd.f32 0.0, %v1700
  %v1702 = vpop.f32.mrf.mxu0
  %1703 = vmatprep.mubr.bf16.mxu0 0
  %1704 = vmatmul.mubr.bf16.gmra.mxu0 %v730
  %v1705 = vpop.f32.mrf.mxu0
  %v1706 = vadd.f32 0.0, %v1705
  %v1707 = vpop.f32.mrf.mxu0
  %v1708 = vpop.f32.mrf.mxu0
  %v1709 = vadd.f32 0.0, %v1708
  %v1710 = vpop.f32.mrf.mxu0
  %1711 = vdwg.mxu0
  %v1712 = vmax.f32 %v914, %v1114
  %v1713 = vmax.f32 %v917, %v1117
  %v1714 = vmax.f32 %v922, %v1122
  %v1715 = vmax.f32 %v925, %v1125
  %v1716 = vmax.f32 %v930, %v1130
  %v1717 = vmax.f32 %v933, %v1133
  %v1718 = vmax.f32 %v938, %v1138
  %v1719 = vmax.f32 %v941, %v1141
  %v1720 = vmax.f32 %v946, %v1146
  %v1721 = vmax.f32 %v949, %v1149
  %v1722 = vmax.f32 %v954, %v1154
  %v1723 = vmax.f32 %v957, %v1157
  %v1724 = vmax.f32 %v962, %v1162
  %v1725 = vmax.f32 %v965, %v1165
  %v1726 = vmax.f32 %v970, %v1170
  %v1727 = vmax.f32 %v973, %v1173
  %v1728 = vmax.f32 %v978, %v1178
  %v1729 = vmax.f32 %v981, %v1181
  %v1730 = vmax.f32 %v986, %v1186
  %v1731 = vmax.f32 %v989, %v1189
  %v1732 = vmax.f32 %v994, %v1194
  %v1733 = vmax.f32 %v997, %v1197
  %v1734 = vmax.f32 %v1002, %v1202
  %v1735 = vmax.f32 %v1005, %v1205
  %v1736 = vmax.f32 %v1010, %v1210
  %v1737 = vmax.f32 %v1013, %v1213
  %v1738 = vmax.f32 %v1018, %v1218
  %v1739 = vmax.f32 %v1021, %v1221
  %v1740 = vmax.f32 %v1026, %v1226
  %v1741 = vmax.f32 %v1029, %v1229
  %v1742 = vmax.f32 %v1034, %v1234
  %v1743 = vmax.f32 %v1037, %v1237
  %v1744 = vmax.f32 %v1042, %v1242
  %v1745 = vmax.f32 %v1045, %v1245
  %v1746 = vmax.f32 %v1050, %v1250
  %v1747 = vmax.f32 %v1053, %v1253
  %v1748 = vmax.f32 %v1058, %v1258
  %v1749 = vmax.f32 %v1061, %v1261
  %v1750 = vmax.f32 %v1066, %v1266
  %v1751 = vmax.f32 %v1069, %v1269
  %v1752 = vmax.f32 %v1074, %v1274
  %v1753 = vmax.f32 %v1077, %v1277
  %v1754 = vmax.f32 %v1082, %v1282
  %v1755 = vmax.f32 %v1085, %v1285
  %v1756 = vmax.f32 %v1090, %v1290
  %v1757 = vmax.f32 %v1093, %v1293
  %v1758 = vmax.f32 %v1098, %v1298
  %v1759 = vmax.f32 %v1101, %v1301
  %v1760 = vmax.f32 %v1106, %v1306
  %v1761 = vmax.f32 %v1109, %v1309
  %v1762 = vmax.f32 %v1314, %v1514
  %v1763 = vmax.f32 %v1317, %v1517
  %v1764 = vmax.f32 %v1322, %v1522
  %v1765 = vmax.f32 %v1325, %v1525
  %v1766 = vmax.f32 %v1330, %v1530
  %v1767 = vmax.f32 %v1333, %v1533
  %v1768 = vmax.f32 %v1338, %v1538
  %v1769 = vmax.f32 %v1341, %v1541
  %v1770 = vmax.f32 %v1346, %v1546
  %v1771 = vmax.f32 %v1349, %v1549
  %v1772 = vmax.f32 %v1354, %v1554
  %v1773 = vmax.f32 %v1357, %v1557
  %v1774 = vmax.f32 %v1362, %v1562
  %v1775 = vmax.f32 %v1365, %v1565
  %v1776 = vmax.f32 %v1370, %v1570
  %v1777 = vmax.f32 %v1373, %v1573
  %v1778 = vmax.f32 %v1378, %v1578
  %v1779 = vmax.f32 %v1381, %v1581
  %v1780 = vmax.f32 %v1386, %v1586
  %v1781 = vmax.f32 %v1389, %v1589
  %v1782 = vmax.f32 %v1394, %v1594
  %v1783 = vmax.f32 %v1397, %v1597
  %v1784 = vmax.f32 %v1402, %v1602
  %v1785 = vmax.f32 %v1405, %v1605
  %v1786 = vmax.f32 %v1410, %v1610
  %v1787 = vmax.f32 %v1413, %v1613
  %v1788 = vmax.f32 %v1418, %v1618
  %v1789 = vmax.f32 %v1421, %v1621
  %v1790 = vmax.f32 %v1426, %v1626
  %v1791 = vmax.f32 %v1429, %v1629
  %v1792 = vmax.f32 %v1434, %v1634
  %v1793 = vmax.f32 %v1437, %v1637
  %v1794 = vmax.f32 %v1442, %v1642
  %v1795 = vmax.f32 %v1445, %v1645
  %v1796 = vmax.f32 %v1450, %v1650
  %v1797 = vmax.f32 %v1453, %v1653
  %v1798 = vmax.f32 %v1458, %v1658
  %v1799 = vmax.f32 %v1461, %v1661
  %v1800 = vmax.f32 %v1466, %v1666
  %v1801 = vmax.f32 %v1469, %v1669
  %v1802 = vmax.f32 %v1474, %v1674
  %v1803 = vmax.f32 %v1477, %v1677
  %v1804 = vmax.f32 %v1482, %v1682
  %v1805 = vmax.f32 %v1485, %v1685
  %v1806 = vmax.f32 %v1490, %v1690
  %v1807 = vmax.f32 %v1493, %v1693
  %v1808 = vmax.f32 %v1498, %v1698
  %v1809 = vmax.f32 %v1501, %v1701
  %v1810 = vmax.f32 %v1506, %v1706
  %v1811 = vmax.f32 %v1509, %v1709
  %v1812 = vmax.f32 %v1712, %v1762
  %v1813 = vmax.f32 %v1713, %v1763
  %v1814 = vmax.f32 %v1714, %v1764
  %v1815 = vmax.f32 %v1715, %v1765
  %v1816 = vmax.f32 %v1716, %v1766
  %v1817 = vmax.f32 %v1717, %v1767
  %v1818 = vmax.f32 %v1718, %v1768
  %v1819 = vmax.f32 %v1719, %v1769
  %v1820 = vmax.f32 %v1720, %v1770
  %v1821 = vmax.f32 %v1721, %v1771
  %v1822 = vmax.f32 %v1722, %v1772
  %v1823 = vmax.f32 %v1723, %v1773
  %v1824 = vmax.f32 %v1724, %v1774
  %v1825 = vmax.f32 %v1725, %v1775
  %v1826 = vmax.f32 %v1726, %v1776
  %v1827 = vmax.f32 %v1727, %v1777
  %v1828 = vmax.f32 %v1728, %v1778
  %v1829 = vmax.f32 %v1729, %v1779
  %v1830 = vmax.f32 %v1730, %v1780
  %v1831 = vmax.f32 %v1731, %v1781
  %v1832 = vmax.f32 %v1732, %v1782
  %v1833 = vmax.f32 %v1733, %v1783
  %v1834 = vmax.f32 %v1734, %v1784
  %v1835 = vmax.f32 %v1735, %v1785
  %v1836 = vmax.f32 %v1736, %v1786
  %v1837 = vmax.f32 %v1737, %v1787
  %v1838 = vmax.f32 %v1738, %v1788
  %v1839 = vmax.f32 %v1739, %v1789
  %v1840 = vmax.f32 %v1740, %v1790
  %v1841 = vmax.f32 %v1741, %v1791
  %v1842 = vmax.f32 %v1742, %v1792
  %v1843 = vmax.f32 %v1743, %v1793
  %v1844 = vmax.f32 %v1744, %v1794
  %v1845 = vmax.f32 %v1745, %v1795
  %v1846 = vmax.f32 %v1746, %v1796
  %v1847 = vmax.f32 %v1747, %v1797
  %v1848 = vmax.f32 %v1748, %v1798
  %v1849 = vmax.f32 %v1749, %v1799
  %v1850 = vmax.f32 %v1750, %v1800
  %v1851 = vmax.f32 %v1751, %v1801
  %v1852 = vmax.f32 %v1752, %v1802
  %v1853 = vmax.f32 %v1753, %v1803
  %v1854 = vmax.f32 %v1754, %v1804
  %v1855 = vmax.f32 %v1755, %v1805
  %v1856 = vmax.f32 %v1756, %v1806
  %v1857 = vmax.f32 %v1757, %v1807
  %v1858 = vmax.f32 %v1758, %v1808
  %v1859 = vmax.f32 %v1759, %v1809
  %v1860 = vmax.f32 %v1760, %v1810
  %v1861 = vmax.f32 %v1761, %v1811
  %v1862 = vld [vmem:[%s2] sm:$0x1]
  %v1864 = vlaneseq
  %v1865 = vshrl.u32 %v1864, 7
  %v1866 = vsub.s32 0, %v1865
  %v1867 = vrot.slane %v1862, %v1866
  %v1869 = vadd.f32 %v1812, %v1867
  %v1870 = vadd.f32 %v1813, %v1867
  %v1871 = vadd.f32 %v1814, %v1867
  %v1872 = vadd.f32 %v1815, %v1867
  %v1873 = vadd.f32 %v1816, %v1867
  %v1874 = vadd.f32 %v1817, %v1867
  %v1875 = vadd.f32 %v1818, %v1867
  %v1876 = vadd.f32 %v1819, %v1867
  %v1877 = vadd.f32 %v1820, %v1867
  %v1878 = vadd.f32 %v1821, %v1867
  %v1879 = vadd.f32 %v1822, %v1867
  %v1880 = vadd.f32 %v1823, %v1867
  %v1881 = vadd.f32 %v1824, %v1867
  %v1882 = vadd.f32 %v1825, %v1867
  %v1883 = vadd.f32 %v1826, %v1867
  %v1884 = vadd.f32 %v1827, %v1867
  %v1885 = vadd.f32 %v1828, %v1867
  %v1886 = vadd.f32 %v1829, %v1867
  %v1887 = vadd.f32 %v1830, %v1867
  %v1888 = vadd.f32 %v1831, %v1867
  %v1889 = vadd.f32 %v1832, %v1867
  %v1890 = vadd.f32 %v1833, %v1867
  %v1891 = vadd.f32 %v1834, %v1867
  %v1892 = vadd.f32 %v1835, %v1867
  %v1893 = vadd.f32 %v1836, %v1867
  %v1894 = vadd.f32 %v1837, %v1867
  %v1895 = vadd.f32 %v1838, %v1867
  %v1896 = vadd.f32 %v1839, %v1867
  %v1897 = vadd.f32 %v1840, %v1867
  %v1898 = vadd.f32 %v1841, %v1867
  %v1899 = vadd.f32 %v1842, %v1867
  %v1900 = vadd.f32 %v1843, %v1867
  %v1901 = vadd.f32 %v1844, %v1867
  %v1902 = vadd.f32 %v1845, %v1867
  %v1903 = vadd.f32 %v1846, %v1867
  %v1904 = vadd.f32 %v1847, %v1867
  %v1905 = vadd.f32 %v1848, %v1867
  %v1906 = vadd.f32 %v1849, %v1867
  %v1907 = vadd.f32 %v1850, %v1867
  %v1908 = vadd.f32 %v1851, %v1867
  %v1909 = vadd.f32 %v1852, %v1867
  %v1910 = vadd.f32 %v1853, %v1867
  %v1911 = vadd.f32 %v1854, %v1867
  %v1912 = vadd.f32 %v1855, %v1867
  %v1913 = vadd.f32 %v1856, %v1867
  %v1914 = vadd.f32 %v1857, %v1867
  %v1915 = vadd.f32 %v1858, %v1867
  %v1916 = vadd.f32 %v1859, %v1867
  %v1917 = vadd.f32 %v1860, %v1867
  %v1918 = vadd.f32 %v1861, %v1867
  %v1919 = vmax.f32 %v1869, 0.0
  %v1920 = vmax.f32 %v1870, 0.0
  %v1921 = vmax.f32 %v1871, 0.0
  %v1922 = vmax.f32 %v1872, 0.0
  %v1923 = vmax.f32 %v1873, 0.0
  %v1924 = vmax.f32 %v1874, 0.0
  %v1925 = vmax.f32 %v1875, 0.0
  %v1926 = vmax.f32 %v1876, 0.0
  %v1927 = vmax.f32 %v1877, 0.0
  %v1928 = vmax.f32 %v1878, 0.0
  %v1929 = vmax.f32 %v1879, 0.0
  %v1930 = vmax.f32 %v1880, 0.0
  %v1931 = vmax.f32 %v1881, 0.0
  %v1932 = vmax.f32 %v1882, 0.0
  %v1933 = vmax.f32 %v1883, 0.0
  %v1934 = vmax.f32 %v1884, 0.0
  %v1935 = vmax.f32 %v1885, 0.0
  %v1936 = vmax.f32 %v1886, 0.0
  %v1937 = vmax.f32 %v1887, 0.0
  %v1938 = vmax.f32 %v1888, 0.0
  %v1939 = vmax.f32 %v1889, 0.0
  %v1940 = vmax.f32 %v1890, 0.0
  %v1941 = vmax.f32 %v1891, 0.0
  %v1942 = vmax.f32 %v1892, 0.0
  %v1943 = vmax.f32 %v1893, 0.0
  %v1944 = vmax.f32 %v1894, 0.0
  %v1945 = vmax.f32 %v1895, 0.0
  %v1946 = vmax.f32 %v1896, 0.0
  %v1947 = vmax.f32 %v1897, 0.0
  %v1948 = vmax.f32 %v1898, 0.0
  %v1949 = vmax.f32 %v1899, 0.0
  %v1950 = vmax.f32 %v1900, 0.0
  %v1951 = vmax.f32 %v1901, 0.0
  %v1952 = vmax.f32 %v1902, 0.0
  %v1953 = vmax.f32 %v1903, 0.0
  %v1954 = vmax.f32 %v1904, 0.0
  %v1955 = vmax.f32 %v1905, 0.0
  %v1956 = vmax.f32 %v1906, 0.0
  %v1957 = vmax.f32 %v1907, 0.0
  %v1958 = vmax.f32 %v1908, 0.0
  %v1959 = vmax.f32 %v1909, 0.0
  %v1960 = vmax.f32 %v1910, 0.0
  %v1961 = vmax.f32 %v1911, 0.0
  %v1962 = vmax.f32 %v1912, 0.0
  %v1963 = vmax.f32 %v1913, 0.0
  %v1964 = vmax.f32 %v1914, 0.0
  %v1965 = vmax.f32 %v1915, 0.0
  %v1966 = vmax.f32 %v1916, 0.0
  %v1967 = vmax.f32 %v1917, 0.0
  %v1968 = vmax.f32 %v1918, 0.0
  %v1969 = vpack.c.bf16 %v1920, %v1919
  %v1970 = vpack.c.bf16 %v1922, %v1921
  %v1971 = vpack.c.bf16 %v1924, %v1923
  %v1972 = vpack.c.bf16 %v1926, %v1925
  %v1973 = vpack.c.bf16 %v1928, %v1927
  %v1974 = vpack.c.bf16 %v1930, %v1929
  %v1975 = vpack.c.bf16 %v1932, %v1931
  %v1976 = vpack.c.bf16 %v1934, %v1933
  %v1977 = vpack.c.bf16 %v1936, %v1935
  %v1978 = vpack.c.bf16 %v1938, %v1937
  %v1979 = vpack.c.bf16 %v1940, %v1939
  %v1980 = vpack.c.bf16 %v1942, %v1941
  %v1981 = vpack.c.bf16 %v1944, %v1943
  %v1982 = vpack.c.bf16 %v1946, %v1945
  %v1983 = vpack.c.bf16 %v1948, %v1947
  %v1984 = vpack.c.bf16 %v1950, %v1949
  %v1985 = vpack.c.bf16 %v1952, %v1951
  %v1986 = vpack.c.bf16 %v1954, %v1953
  %v1987 = vpack.c.bf16 %v1956, %v1955
  %v1988 = vpack.c.bf16 %v1958, %v1957
  %v1989 = vpack.c.bf16 %v1960, %v1959
  %v1990 = vpack.c.bf16 %v1962, %v1961
  %v1991 = vpack.c.bf16 %v1964, %v1963
  %v1992 = vpack.c.bf16 %v1966, %v1965
  %v1993 = vpack.c.bf16 %v1968, %v1967
  %v2019 = vunpack.c.l.b16 %v1969
  %v2020 = vunpack.c.h.b16 %v1969
  %v2021 = vunpack.c.l.b16 %v1970
  %v2022 = vunpack.c.h.b16 %v1970
  %v2023 = vunpack.c.l.b16 %v1971
  %v2024 = vunpack.c.h.b16 %v1971
  %v2025 = vunpack.c.l.b16 %v1972
  %v2026 = vunpack.c.h.b16 %v1972
  %v2027 = vunpack.c.l.b16 %v1973
  %v2028 = vunpack.c.h.b16 %v1973
  %v2029 = vunpack.c.l.b16 %v1974
  %v2030 = vunpack.c.h.b16 %v1974
  %v2031 = vunpack.c.l.b16 %v1975
  %v2032 = vunpack.c.h.b16 %v1975
  %v2033 = vunpack.c.l.b16 %v1976
  %v2034 = vunpack.c.h.b16 %v1976
  %v2035 = vunpack.c.l.b16 %v1977
  %v2036 = vunpack.c.h.b16 %v1977
  %v2037 = vunpack.c.l.b16 %v1978
  %v2038 = vunpack.c.h.b16 %v1978
  %v2039 = vunpack.c.l.b16 %v1979
  %v2040 = vunpack.c.h.b16 %v1979
  %v2041 = vunpack.c.l.b16 %v1980
  %v2042 = vunpack.c.h.b16 %v1980
  %v2043 = vunpack.c.l.b16 %v1981
  %v2044 = vunpack.c.h.b16 %v1981
  %v2045 = vunpack.c.l.b16 %v1982
  %v2046 = vunpack.c.h.b16 %v1982
  %v2047 = vunpack.c.l.b16 %v1983
  %v2048 = vunpack.c.h.b16 %v1983
  %v2049 = vunpack.c.l.b16 %v1984
  %v2050 = vunpack.c.h.b16 %v1984
  %v2051 = vunpack.c.l.b16 %v1985
  %v2052 = vunpack.c.h.b16 %v1985
  %v2053 = vunpack.c.l.b16 %v1986
  %v2054 = vunpack.c.h.b16 %v1986
  %v2055 = vunpack.c.l.b16 %v1987
  %v2056 = vunpack.c.h.b16 %v1987
  %v2057 = vunpack.c.l.b16 %v1988
  %v2058 = vunpack.c.h.b16 %v1988
  %v2059 = vunpack.c.l.b16 %v1989
  %v2060 = vunpack.c.h.b16 %v1989
  %v2061 = vunpack.c.l.b16 %v1990
  %v2062 = vunpack.c.h.b16 %v1990
  %v2063 = vunpack.c.l.b16 %v1991
  %v2064 = vunpack.c.h.b16 %v1991
  %v2065 = vunpack.c.l.b16 %v1992
  %v2066 = vunpack.c.h.b16 %v1992
  %v2067 = vunpack.c.l.b16 %v1993
  %v2068 = vunpack.c.h.b16 %v1993
  %v2069 = vpack.c.b16 %v2019, %v2019
  %v2070 = vpack.c.b16 %v2020, %v2020
  %v2071 = vpack.c.b16 %v2021, %v2021
  %v2072 = vpack.c.b16 %v2022, %v2022
  %v2073 = vpack.c.b16 %v2023, %v2023
  %v2074 = vpack.c.b16 %v2024, %v2024
  %v2075 = vpack.c.b16 %v2025, %v2025
  %v2076 = vpack.c.b16 %v2026, %v2026
  %v2077 = vpack.c.b16 %v2027, %v2027
  %v2078 = vpack.c.b16 %v2028, %v2028
  %v2079 = vpack.c.b16 %v2029, %v2029
  %v2080 = vpack.c.b16 %v2030, %v2030
  %v2081 = vpack.c.b16 %v2031, %v2031
  %v2082 = vpack.c.b16 %v2032, %v2032
  %v2083 = vpack.c.b16 %v2033, %v2033
  %v2084 = vpack.c.b16 %v2034, %v2034
  %v2085 = vpack.c.b16 %v2035, %v2035
  %v2086 = vpack.c.b16 %v2036, %v2036
  %v2087 = vpack.c.b16 %v2037, %v2037
  %v2088 = vpack.c.b16 %v2038, %v2038
  %v2089 = vpack.c.b16 %v2039, %v2039
  %v2090 = vpack.c.b16 %v2040, %v2040
  %v2091 = vpack.c.b16 %v2041, %v2041
  %v2092 = vpack.c.b16 %v2042, %v2042
  %v2093 = vpack.c.b16 %v2043, %v2043
  %v2094 = vpack.c.b16 %v2044, %v2044
  %v2095 = vpack.c.b16 %v2045, %v2045
  %v2096 = vpack.c.b16 %v2046, %v2046
  %v2097 = vpack.c.b16 %v2047, %v2047
  %v2098 = vpack.c.b16 %v2048, %v2048
  %v2099 = vpack.c.b16 %v2049, %v2049
  %v2100 = vpack.c.b16 %v2050, %v2050
  %v2101 = vpack.c.b16 %v2051, %v2051
  %v2102 = vpack.c.b16 %v2052, %v2052
  %v2103 = vpack.c.b16 %v2053, %v2053
  %v2104 = vpack.c.b16 %v2054, %v2054
  %v2105 = vpack.c.b16 %v2055, %v2055
  %v2106 = vpack.c.b16 %v2056, %v2056
  %v2107 = vpack.c.b16 %v2057, %v2057
  %v2108 = vpack.c.b16 %v2058, %v2058
  %v2109 = vpack.c.b16 %v2059, %v2059
  %v2110 = vpack.c.b16 %v2060, %v2060
  %v2111 = vpack.c.b16 %v2061, %v2061
  %v2112 = vpack.c.b16 %v2062, %v2062
  %v2113 = vpack.c.b16 %v2063, %v2063
  %v2114 = vpack.c.b16 %v2064, %v2064
  %v2115 = vpack.c.b16 %v2065, %v2065
  %v2116 = vpack.c.b16 %v2066, %v2066
  %v2117 = vpack.c.b16 %v2067, %v2067
  %v2118 = vpack.c.b16 %v2068, %v2068
  %2169 = vst [vmem:[%s3] sm:$0xf] %v2069
  %2170 = vst [vmem:[%s3 + $0x4] sm:$0xf] %v2070
  %2171 = vst [vmem:[%s3 + $0x8] sm:$0xf] %v2071
  %2172 = vst [vmem:[%s3 + $0xc] sm:$0xf] %v2072
  %2173 = vst [vmem:[%s3 + $0x10] sm:$0xf] %v2073
  %2174 = vst [vmem:[%s3 + $0x14] sm:$0xf] %v2074
  %2175 = vst [vmem:[%s3 + $0x18] sm:$0xf] %v2075
  %2176 = vst [vmem:[%s3 + $0x1c] sm:$0xf] %v2076
  %2177 = vst [vmem:[%s3 + $0x20] sm:$0xf] %v2077
  %2178 = vst [vmem:[%s3 + $0x24] sm:$0xf] %v2078
  %2179 = vst [vmem:[%s3 + $0x28] sm:$0xf] %v2079
  %2180 = vst [vmem:[%s3 + $0x2c] sm:$0xf] %v2080
  %2181 = vst [vmem:[%s3 + $0x30] sm:$0xf] %v2081
  %2182 = vst [vmem:[%s3 + $0x34] sm:$0xf] %v2082
  %2183 = vst [vmem:[%s3 + $0x38] sm:$0xf] %v2083
  %2184 = vst [vmem:[%s3 + $0x3c] sm:$0xf] %v2084
  %2185 = vst [vmem:[%s3 + $0x40] sm:$0xf] %v2085
  %2186 = vst [vmem:[%s3 + $0x44] sm:$0xf] %v2086
  %2187 = vst [vmem:[%s3 + $0x48] sm:$0xf] %v2087
  %2188 = vst [vmem:[%s3 + $0x4c] sm:$0xf] %v2088
  %2189 = vst [vmem:[%s3 + $0x50] sm:$0xf] %v2089
  %2190 = vst [vmem:[%s3 + $0x54] sm:$0xf] %v2090
  %2191 = vst [vmem:[%s3 + $0x58] sm:$0xf] %v2091
  %2192 = vst [vmem:[%s3 + $0x5c] sm:$0xf] %v2092
  %2193 = vst [vmem:[%s3 + $0x60] sm:$0xf] %v2093
  %2194 = vst [vmem:[%s3 + $0x64] sm:$0xf] %v2094
  %2195 = vst [vmem:[%s3 + $0x68] sm:$0xf] %v2095
  %2196 = vst [vmem:[%s3 + $0x6c] sm:$0xf] %v2096
  %2197 = vst [vmem:[%s3 + $0x70] sm:$0xf] %v2097
  %2198 = vst [vmem:[%s3 + $0x74] sm:$0xf] %v2098
  %2199 = vst [vmem:[%s3 + $0x78] sm:$0xf] %v2099
  %2200 = vst [vmem:[%s3 + $0x7c] sm:$0xf] %v2100
  %2201 = vst [vmem:[%s3 + $0x80] sm:$0xf] %v2101
  %2202 = vst [vmem:[%s3 + $0x84] sm:$0xf] %v2102
  %2203 = vst [vmem:[%s3 + $0x88] sm:$0xf] %v2103
  %2204 = vst [vmem:[%s3 + $0x8c] sm:$0xf] %v2104
  %2205 = vst [vmem:[%s3 + $0x90] sm:$0xf] %v2105
  %2206 = vst [vmem:[%s3 + $0x94] sm:$0xf] %v2106
  %2207 = vst [vmem:[%s3 + $0x98] sm:$0xf] %v2107
  %2208 = vst [vmem:[%s3 + $0x9c] sm:$0xf] %v2108
  %2209 = vst [vmem:[%s3 + $0xa0] sm:$0xf] %v2109
  %2210 = vst [vmem:[%s3 + $0xa4] sm:$0xf] %v2110
  %2211 = vst [vmem:[%s3 + $0xa8] sm:$0xf] %v2111
  %2212 = vst [vmem:[%s3 + $0xac] sm:$0xf] %v2112
  %2213 = vst [vmem:[%s3 + $0xb0] sm:$0xf] %v2113
  %2214 = vst [vmem:[%s3 + $0xb4] sm:$0xf] %v2114
  %2215 = vst [vmem:[%s3 + $0xb8] sm:$0xf] %v2115
  %2216 = vst [vmem:[%s3 + $0xbc] sm:$0xf] %v2116
  %2217 = vst [vmem:[%s3 + $0xc0] sm:$0xf] %v2117
  %2218 = vst [vmem:[%s3 + $0xc4] sm:$0xf] %v2118
  // Predicated region
  $region14: #{lenet_forward.3} parent=0 // pred_check
    _
  $region15: #{lenet_forward.3} parent=0 // pred_check_branch
    %2220 = sbr.rel (0) target = $region17
  $region16: #{lenet_forward.3} parent=0 // pred_region
    _
  $region17: #{lenet_forward.3} parent=0 // pred_fallthru
    _
  // Predicated region
  $region18: #{lenet_forward.3} parent=0 // pred_check
    _
  $region19: #{lenet_forward.3} parent=0 // pred_check_branch
    %2222 = sbr.rel (0) target = $region21
  $region20: #{lenet_forward.3} parent=0 // pred_region
    _
  $region21: #{lenet_forward.3} parent=0 // pred_fallthru
    _

// kernel: lenet_forward.4
$region0: #{lenet_forward.4}
  #allocation0 [shape = 'u32[]', space=smem, size = 0x4, offset = 0x4, fixed_abs, tag = 'smem constant byte address 0x4 - core index']
  #allocation1 [shape = 'u32[144,128]{1,0:T(1,128)}', space=vmem, size = 0x12000, scoped, tag = 'internal scratch']
  %s0 = inlined_call_operand.vmem [shape: bf16[4,64,384], index: 0, kind: input, shape index: {}]
  %s1 = inlined_call_operand.vmem [shape: bf16[384,128], index: 1, kind: input, shape index: {}]
  %s2 = inlined_call_operand.vmem [shape: f32[1,128], index: 2, kind: input, shape index: {}]
  %s3 = inlined_call_operand.vmem [shape: bf16[64,128], index: 3, kind: output, shape index: {}]
  %s4 = sld [smem:[#allocation0]]
  $region22: #{lenet_forward.4} parent=0
    _
  %s6 = ssub.s32 1, %s4
  %s7 = scalar_select 0, %s6, %s4
  // Predicated region
  $region2: #{lenet_forward.4} parent=0 // pred_check
    _
  $region3: #{lenet_forward.4} parent=0 // pred_check_branch
    %9 = sbr.rel (0) target = $region5
  $region4: #{lenet_forward.4} parent=0 // pred_region
    _
  $region5: #{lenet_forward.4} parent=0 // pred_fallthru
    _
  // Predicated region
  $region6: #{lenet_forward.4} parent=0 // pred_check
    _
  $region7: #{lenet_forward.4} parent=0 // pred_check_branch
    %11 = sbr.rel (0) target = $region9
  $region8: #{lenet_forward.4} parent=0 // pred_region
    _
  $region9: #{lenet_forward.4} parent=0 // pred_fallthru
    _
  // Predicated region
  $region10: #{lenet_forward.4} parent=0 // pred_check
    _
  $region11: #{lenet_forward.4} parent=0 // pred_check_branch
    %13 = sbr.rel (0) target = $region13
  $region12: #{lenet_forward.4} parent=0 // pred_region
    _
  $region13: #{lenet_forward.4} parent=0 // pred_fallthru
    _
  %v15 = vld [vmem:[%s0] sm:$0xff]
  %v16 = vld [vmem:[%s0 + $0x8] sm:$0xf]
  %v17 = vld [vmem:[%s0 + $0xc] sm:$0xff]
  %v18 = vld [vmem:[%s0 + $0x14] sm:$0xf]
  %v19 = vld [vmem:[%s0 + $0x18] sm:$0xff]
  %v20 = vld [vmem:[%s0 + $0x20] sm:$0xf]
  %v21 = vld [vmem:[%s0 + $0x24] sm:$0xff]
  %v22 = vld [vmem:[%s0 + $0x2c] sm:$0xf]
  %v23 = vld [vmem:[%s0 + $0x30] sm:$0xff]
  %v24 = vld [vmem:[%s0 + $0x38] sm:$0xf]
  %v25 = vld [vmem:[%s0 + $0x3c] sm:$0xff]
  %v26 = vld [vmem:[%s0 + $0x44] sm:$0xf]
  %v27 = vld [vmem:[%s0 + $0x48] sm:$0xff]
  %v28 = vld [vmem:[%s0 + $0x50] sm:$0xf]
  %v29 = vld [vmem:[%s0 + $0x54] sm:$0xff]
  %v30 = vld [vmem:[%s0 + $0x5c] sm:$0xf]
  %v31 = vld [vmem:[%s0 + $0x60] sm:$0xff]
  %v32 = vld [vmem:[%s0 + $0x68] sm:$0xf]
  %v33 = vld [vmem:[%s0 + $0x6c] sm:$0xff]
  %v34 = vld [vmem:[%s0 + $0x74] sm:$0xf]
  %v35 = vld [vmem:[%s0 + $0x78] sm:$0xff]
  %v36 = vld [vmem:[%s0 + $0x80] sm:$0xf]
  %v37 = vld [vmem:[%s0 + $0x84] sm:$0xff]
  %v38 = vld [vmem:[%s0 + $0x8c] sm:$0xf]
  %v39 = vld [vmem:[%s0 + $0x90] sm:$0xff]
  %v40 = vld [vmem:[%s0 + $0x98] sm:$0xf]
  %v41 = vld [vmem:[%s0 + $0x9c] sm:$0xff]
  %v42 = vld [vmem:[%s0 + $0xa4] sm:$0xf]
  %v43 = vld [vmem:[%s0 + $0xa8] sm:$0xff]
  %v44 = vld [vmem:[%s0 + $0xb0] sm:$0xf]
  %v45 = vld [vmem:[%s0 + $0xb4] sm:$0xff]
  %v46 = vld [vmem:[%s0 + $0xbc] sm:$0xf]
  %v47 = vld [vmem:[%s0 + $0xc0] sm:$0xff]
  %v48 = vld [vmem:[%s0 + $0xc8] sm:$0xf]
  %v49 = vld [vmem:[%s0 + $0xcc] sm:$0xff]
  %v50 = vld [vmem:[%s0 + $0xd4] sm:$0xf]
  %v51 = vld [vmem:[%s0 + $0xd8] sm:$0xff]
  %v52 = vld [vmem:[%s0 + $0xe0] sm:$0xf]
  %v53 = vld [vmem:[%s0 + $0xe4] sm:$0xff]
  %v54 = vld [vmem:[%s0 + $0xec] sm:$0xf]
  %v55 = vld [vmem:[%s0 + $0xf0] sm:$0xff]
  %v56 = vld [vmem:[%s0 + $0xf8] sm:$0xf]
  %v57 = vld [vmem:[%s0 + $0xfc] sm:$0xff]
  %v58 = vld [vmem:[%s0 + $0x104] sm:$0xf]
  %v59 = vld [vmem:[%s0 + $0x108] sm:$0xff]
  %v60 = vld [vmem:[%s0 + $0x110] sm:$0xf]
  %v61 = vld [vmem:[%s0 + $0x114] sm:$0xff]
  %v62 = vld [vmem:[%s0 + $0x11c] sm:$0xf]
  %v63 = vld [vmem:[%s0 + $0x120] sm:$0xff]
  %v64 = vld [vmem:[%s0 + $0x128] sm:$0xf]
  %v65 = vld [vmem:[%s0 + $0x12c] sm:$0xff]
  %v66 = vld [vmem:[%s0 + $0x134] sm:$0xf]
  %v67 = vld [vmem:[%s0 + $0x138] sm:$0xff]
  %v68 = vld [vmem:[%s0 + $0x140] sm:$0xf]
  %v69 = vld [vmem:[%s0 + $0x144] sm:$0xff]
  %v70 = vld [vmem:[%s0 + $0x14c] sm:$0xf]
  %v71 = vld [vmem:[%s0 + $0x150] sm:$0xff]
  %v72 = vld [vmem:[%s0 + $0x158] sm:$0xf]
  %v73 = vld [vmem:[%s0 + $0x15c] sm:$0xff]
  %v74 = vld [vmem:[%s0 + $0x164] sm:$0xf]
  %v75 = vld [vmem:[%s0 + $0x168] sm:$0xff]
  %v76 = vld [vmem:[%s0 + $0x170] sm:$0xf]
  %v77 = vld [vmem:[%s0 + $0x174] sm:$0xff]
  %v78 = vld [vmem:[%s0 + $0x17c] sm:$0xf]
  %v79 = vld [vmem:[%s1] sm:$0xf]
  %v80 = vld [vmem:[%s1 + $0x4] sm:$0xf]
  %v81 = vld [vmem:[%s1 + $0x8] sm:$0xf]
  %v82 = vld [vmem:[%s1 + $0xc] sm:$0xf]
  %v83 = vld [vmem:[%s1 + $0x10] sm:$0xf]
  %v84 = vld [vmem:[%s1 + $0x14] sm:$0xf]
  %v85 = vld [vmem:[%s1 + $0x18] sm:$0xf]
  %v86 = vld [vmem:[%s1 + $0x1c] sm:$0xf]
  %v87 = vld [vmem:[%s1 + $0x20] sm:$0xf]
  %v88 = vld [vmem:[%s1 + $0x24] sm:$0xf]
  %v89 = vld [vmem:[%s1 + $0x28] sm:$0xf]
  %v90 = vld [vmem:[%s1 + $0x2c] sm:$0xf]
  %v91 = vld [vmem:[%s1 + $0x30] sm:$0xf]
  %v92 = vld [vmem:[%s1 + $0x34] sm:$0xf]
  %v93 = vld [vmem:[%s1 + $0x38] sm:$0xf]
  %v94 = vld [vmem:[%s1 + $0x3c] sm:$0xf]
  %v95 = vld [vmem:[%s1 + $0x40] sm:$0xf]
  %v96 = vld [vmem:[%s1 + $0x44] sm:$0xf]
  %v97 = vld [vmem:[%s1 + $0x48] sm:$0xf]
  %v98 = vld [vmem:[%s1 + $0x4c] sm:$0xf]
  %v99 = vld [vmem:[%s1 + $0x50] sm:$0xf]
  %v100 = vld [vmem:[%s1 + $0x54] sm:$0xf]
  %v101 = vld [vmem:[%s1 + $0x58] sm:$0xf]
  %v102 = vld [vmem:[%s1 + $0x5c] sm:$0xf]
  %v103 = vld [vmem:[%s1 + $0x60] sm:$0xf]
  %v104 = vld [vmem:[%s1 + $0x64] sm:$0xf]
  %v105 = vld [vmem:[%s1 + $0x68] sm:$0xf]
  %v106 = vld [vmem:[%s1 + $0x6c] sm:$0xf]
  %v107 = vld [vmem:[%s1 + $0x70] sm:$0xf]
  %v108 = vld [vmem:[%s1 + $0x74] sm:$0xf]
  %v109 = vld [vmem:[%s1 + $0x78] sm:$0xf]
  %v110 = vld [vmem:[%s1 + $0x7c] sm:$0xf]
  %v111 = vld [vmem:[%s1 + $0x80] sm:$0xf]
  %v112 = vld [vmem:[%s1 + $0x84] sm:$0xf]
  %v113 = vld [vmem:[%s1 + $0x88] sm:$0xf]
  %v114 = vld [vmem:[%s1 + $0x8c] sm:$0xf]
  %v115 = vld [vmem:[%s1 + $0x90] sm:$0xf]
  %v116 = vld [vmem:[%s1 + $0x94] sm:$0xf]
  %v117 = vld [vmem:[%s1 + $0x98] sm:$0xf]
  %v118 = vld [vmem:[%s1 + $0x9c] sm:$0xf]
  %v119 = vld [vmem:[%s1 + $0xa0] sm:$0xf]
  %v120 = vld [vmem:[%s1 + $0xa4] sm:$0xf]
  %v121 = vld [vmem:[%s1 + $0xa8] sm:$0xf]
  %v122 = vld [vmem:[%s1 + $0xac] sm:$0xf]
  %v123 = vld [vmem:[%s1 + $0xb0] sm:$0xf]
  %v124 = vld [vmem:[%s1 + $0xb4] sm:$0xf]
  %v125 = vld [vmem:[%s1 + $0xb8] sm:$0xf]
  %v126 = vld [vmem:[%s1 + $0xbc] sm:$0xf]
  %v191 = vunpack.c.l.b16 %v15
  %v192 = vunpack.c.h.b16 %v15
  %v193 = vunpack.c.l.b16 %v16
  %v194 = vunpack.c.l.b16 %v17
  %v195 = vunpack.c.h.b16 %v17
  %v196 = vunpack.c.l.b16 %v18
  %v197 = vunpack.c.l.b16 %v19
  %v198 = vunpack.c.h.b16 %v19
  %v199 = vunpack.c.l.b16 %v20
  %v200 = vunpack.c.l.b16 %v21
  %v201 = vunpack.c.h.b16 %v21
  %v202 = vunpack.c.l.b16 %v22
  %v203 = vunpack.c.l.b16 %v23
  %v204 = vunpack.c.h.b16 %v23
  %v205 = vunpack.c.l.b16 %v24
  %v206 = vunpack.c.l.b16 %v25
  %v207 = vunpack.c.h.b16 %v25
  %v208 = vunpack.c.l.b16 %v26
  %v209 = vunpack.c.l.b16 %v27
  %v210 = vunpack.c.h.b16 %v27
  %v211 = vunpack.c.l.b16 %v28
  %v212 = vunpack.c.l.b16 %v29
  %v213 = vunpack.c.h.b16 %v29
  %v214 = vunpack.c.l.b16 %v30
  %v215 = vunpack.c.l.b16 %v31
  %v216 = vunpack.c.h.b16 %v31
  %v217 = vunpack.c.l.b16 %v32
  %v218 = vunpack.c.l.b16 %v33
  %v219 = vunpack.c.h.b16 %v33
  %v220 = vunpack.c.l.b16 %v34
  %v221 = vunpack.c.l.b16 %v35
  %v222 = vunpack.c.h.b16 %v35
  %v223 = vunpack.c.l.b16 %v36
  %v224 = vunpack.c.l.b16 %v37
  %v225 = vunpack.c.h.b16 %v37
  %v226 = vunpack.c.l.b16 %v38
  %v227 = vunpack.c.l.b16 %v39
  %v228 = vunpack.c.h.b16 %v39
  %v229 = vunpack.c.l.b16 %v40
  %v230 = vunpack.c.l.b16 %v41
  %v231 = vunpack.c.h.b16 %v41
  %v232 = vunpack.c.l.b16 %v42
  %v233 = vunpack.c.l.b16 %v43
  %v234 = vunpack.c.h.b16 %v43
  %v235 = vunpack.c.l.b16 %v44
  %v236 = vunpack.c.l.b16 %v45
  %v237 = vunpack.c.h.b16 %v45
  %v238 = vunpack.c.l.b16 %v46
  %v239 = vunpack.c.l.b16 %v47
  %v240 = vunpack.c.h.b16 %v47
  %v241 = vunpack.c.l.b16 %v48
  %v242 = vunpack.c.l.b16 %v49
  %v243 = vunpack.c.h.b16 %v49
  %v244 = vunpack.c.l.b16 %v50
  %v245 = vunpack.c.l.b16 %v51
  %v246 = vunpack.c.h.b16 %v51
  %v247 = vunpack.c.l.b16 %v52
  %v248 = vunpack.c.l.b16 %v53
  %v249 = vunpack.c.h.b16 %v53
  %v250 = vunpack.c.l.b16 %v54
  %v251 = vunpack.c.l.b16 %v55
  %v252 = vunpack.c.h.b16 %v55
  %v253 = vunpack.c.l.b16 %v56
  %v254 = vunpack.c.l.b16 %v57
  %v255 = vunpack.c.h.b16 %v57
  %v256 = vunpack.c.l.b16 %v58
  %v257 = vunpack.c.l.b16 %v59
  %v258 = vunpack.c.h.b16 %v59
  %v259 = vunpack.c.l.b16 %v60
  %v260 = vunpack.c.l.b16 %v61
  %v261 = vunpack.c.h.b16 %v61
  %v262 = vunpack.c.l.b16 %v62
  %v263 = vunpack.c.l.b16 %v63
  %v264 = vunpack.c.h.b16 %v63
  %v265 = vunpack.c.l.b16 %v64
  %v266 = vunpack.c.l.b16 %v65
  %v267 = vunpack.c.h.b16 %v65
  %v268 = vunpack.c.l.b16 %v66
  %v269 = vunpack.c.l.b16 %v67
  %v270 = vunpack.c.h.b16 %v67
  %v271 = vunpack.c.l.b16 %v68
  %v272 = vunpack.c.l.b16 %v69
  %v273 = vunpack.c.h.b16 %v69
  %v274 = vunpack.c.l.b16 %v70
  %v275 = vunpack.c.l.b16 %v71
  %v276 = vunpack.c.h.b16 %v71
  %v277 = vunpack.c.l.b16 %v72
  %v278 = vunpack.c.l.b16 %v73
  %v279 = vunpack.c.h.b16 %v73
  %v280 = vunpack.c.l.b16 %v74
  %v281 = vunpack.c.l.b16 %v75
  %v282 = vunpack.c.h.b16 %v75
  %v283 = vunpack.c.l.b16 %v76
  %v284 = vunpack.c.l.b16 %v77
  %v285 = vunpack.c.h.b16 %v77
  %v286 = vunpack.c.l.b16 %v78
  %v287 = vpack.c.b16 %v194, %v191
  %v288 = vpack.c.b16 %v195, %v192
  %v289 = vpack.c.b16 %v196, %v193
  %v290 = vpack.c.b16 %v200, %v197
  %v291 = vpack.c.b16 %v201, %v198
  %v292 = vpack.c.b16 %v202, %v199
  %v293 = vpack.c.b16 %v206, %v203
  %v294 = vpack.c.b16 %v207, %v204
  %v295 = vpack.c.b16 %v208, %v205
  %v296 = vpack.c.b16 %v212, %v209
  %v297 = vpack.c.b16 %v213, %v210
  %v298 = vpack.c.b16 %v214, %v211
  %v299 = vpack.c.b16 %v218, %v215
  %v300 = vpack.c.b16 %v219, %v216
  %v301 = vpack.c.b16 %v220, %v217
  %v302 = vpack.c.b16 %v224, %v221
  %v303 = vpack.c.b16 %v225, %v222
  %v304 = vpack.c.b16 %v226, %v223
  %v305 = vpack.c.b16 %v230, %v227
  %v306 = vpack.c.b16 %v231, %v228
  %v307 = vpack.c.b16 %v232, %v229
  %v308 = vpack.c.b16 %v236, %v233
  %v309 = vpack.c.b16 %v237, %v234
  %v310 = vpack.c.b16 %v238, %v235
  %v311 = vpack.c.b16 %v242, %v239
  %v312 = vpack.c.b16 %v243, %v240
  %v313 = vpack.c.b16 %v244, %v241
  %v314 = vpack.c.b16 %v248, %v245
  %v315 = vpack.c.b16 %v249, %v246
  %v316 = vpack.c.b16 %v250, %v247
  %v317 = vpack.c.b16 %v254, %v251
  %v318 = vpack.c.b16 %v255, %v252
  %v319 = vpack.c.b16 %v256, %v253
  %v320 = vpack.c.b16 %v260, %v257
  %v321 = vpack.c.b16 %v261, %v258
  %v322 = vpack.c.b16 %v262, %v259
  %v323 = vpack.c.b16 %v266, %v263
  %v324 = vpack.c.b16 %v267, %v264
  %v325 = vpack.c.b16 %v268, %v265
  %v326 = vpack.c.b16 %v272, %v269
  %v327 = vpack.c.b16 %v273, %v270
  %v328 = vpack.c.b16 %v274, %v271
  %v329 = vpack.c.b16 %v278, %v275
  %v330 = vpack.c.b16 %v279, %v276
  %v331 = vpack.c.b16 %v280, %v277
  %v332 = vpack.c.b16 %v284, %v281
  %v333 = vpack.c.b16 %v285, %v282
  %v334 = vpack.c.b16 %v286, %v283
  %v431 = vunpack.c.l.b16 %v79
  %v432 = vunpack.c.l.b16 %v80
  %v433 = vunpack.c.l.b16 %v81
  %v434 = vunpack.c.l.b16 %v82
  %v435 = vunpack.c.l.b16 %v83
  %v436 = vunpack.c.l.b16 %v84
  %v437 = vunpack.c.l.b16 %v85
  %v438 = vunpack.c.l.b16 %v86
  %v439 = vunpack.c.l.b16 %v87
  %v440 = vunpack.c.l.b16 %v88
  %v441 = vunpack.c.l.b16 %v89
  %v442 = vunpack.c.l.b16 %v90
  %v443 = vunpack.c.l.b16 %v91
  %v444 = vunpack.c.l.b16 %v92
  %v445 = vunpack.c.l.b16 %v93
  %v446 = vunpack.c.l.b16 %v94
  %v447 = vunpack.c.l.b16 %v95
  %v448 = vunpack.c.l.b16 %v96
  %v449 = vunpack.c.l.b16 %v97
  %v450 = vunpack.c.l.b16 %v98
  %v451 = vunpack.c.l.b16 %v99
  %v452 = vunpack.c.l.b16 %v100
  %v453 = vunpack.c.l.b16 %v101
  %v454 = vunpack.c.l.b16 %v102
  %v455 = vunpack.c.l.b16 %v103
  %v456 = vunpack.c.l.b16 %v104
  %v457 = vunpack.c.l.b16 %v105
  %v458 = vunpack.c.l.b16 %v106
  %v459 = vunpack.c.l.b16 %v107
  %v460 = vunpack.c.l.b16 %v108
  %v461 = vunpack.c.l.b16 %v109
  %v462 = vunpack.c.l.b16 %v110
  %v463 = vunpack.c.l.b16 %v111
  %v464 = vunpack.c.l.b16 %v112
  %v465 = vunpack.c.l.b16 %v113
  %v466 = vunpack.c.l.b16 %v114
  %v467 = vunpack.c.l.b16 %v115
  %v468 = vunpack.c.l.b16 %v116
  %v469 = vunpack.c.l.b16 %v117
  %v470 = vunpack.c.l.b16 %v118
  %v471 = vunpack.c.l.b16 %v119
  %v472 = vunpack.c.l.b16 %v120
  %v473 = vunpack.c.l.b16 %v121
  %v474 = vunpack.c.l.b16 %v122
  %v475 = vunpack.c.l.b16 %v123
  %v476 = vunpack.c.l.b16 %v124
  %v477 = vunpack.c.l.b16 %v125
  %v478 = vunpack.c.l.b16 %v126
  %v479 = vpack.c.b16 %v432, %v431
  %v480 = vpack.c.b16 %v434, %v433
  %v481 = vpack.c.b16 %v436, %v435
  %v482 = vpack.c.b16 %v438, %v437
  %v483 = vpack.c.b16 %v440, %v439
  %v484 = vpack.c.b16 %v442, %v441
  %v485 = vpack.c.b16 %v444, %v443
  %v486 = vpack.c.b16 %v446, %v445
  %v487 = vpack.c.b16 %v448, %v447
  %v488 = vpack.c.b16 %v450, %v449
  %v489 = vpack.c.b16 %v452, %v451
  %v490 = vpack.c.b16 %v454, %v453
  %v491 = vpack.c.b16 %v456, %v455
  %v492 = vpack.c.b16 %v458, %v457
  %v493 = vpack.c.b16 %v460, %v459
  %v494 = vpack.c.b16 %v462, %v461
  %v495 = vpack.c.b16 %v464, %v463
  %v496 = vpack.c.b16 %v466, %v465
  %v497 = vpack.c.b16 %v468, %v467
  %v498 = vpack.c.b16 %v470, %v469
  %v499 = vpack.c.b16 %v472, %v471
  %v500 = vpack.c.b16 %v474, %v473
  %v501 = vpack.c.b16 %v476, %v475
  %v502 = vpack.c.b16 %v478, %v477
  %527 = vmatprep.subr.bf16.mxu0 0
  %528 = vmatpush1.bf16.msra.mxu0 %v486
  %529 = vmatprep.subr.bf16.mxu0 0
  %530 = vmatpush1.bf16.msra.mxu0 %v485
  %531 = vmatprep.subr.bf16.mxu0 0
  %532 = vmatpush1.bf16.msra.mxu0 %v484
  %533 = vmatprep.subr.bf16.mxu0 0
  %534 = vmatpush1.bf16.msra.mxu0 %v483
  %535 = vmatprep.subr.bf16.mxu0 0
  %536 = vmatpush1.bf16.msra.mxu0 %v482
  %537 = vmatprep.subr.bf16.mxu0 0
  %538 = vmatpush1.bf16.msra.mxu0 %v481
  %539 = vmatprep.subr.bf16.mxu0 0
  %540 = vmatpush1.bf16.msra.mxu0 %v480
  %541 = vmatprep.subr.bf16.mxu0 0
  %542 = vmatpush1.bf16.msra.mxu0 %v479
  %543 = vmatprep.subr.bf16.mxu0 0
  %544 = vmatpush2.bf16.msra.mxu0 %v494
  %545 = vmatprep.subr.bf16.mxu0 0
  %546 = vmatpush2.bf16.msra.mxu0 %v493
  %547 = vmatprep.subr.bf16.mxu0 0
  %548 = vmatpush2.bf16.msra.mxu0 %v492
  %549 = vmatprep.subr.bf16.mxu0 0
  %550 = vmatpush2.bf16.msra.mxu0 %v491
  %551 = vmatprep.subr.bf16.mxu0 0
  %552 = vmatpush2.bf16.msra.mxu0 %v490
  %553 = vmatprep.subr.bf16.mxu0 0
  %554 = vmatpush2.bf16.msra.mxu0 %v489
  %555 = vmatprep.subr.bf16.mxu0 0
  %556 = vmatpush2.bf16.msra.mxu0 %v488
  %557 = vmatprep.subr.bf16.mxu0 0
  %558 = vmatpush2.bf16.msra.mxu0 %v487
  %559 = vmatprep.mubr.bf16.mxu0 %v288
  %560 = vmatmul.mubr.bf16.gmra.mxu0 %v287
  %v561 = vpop.f32.mrf.mxu0
  %v562 = vadd.f32 0.0, %v561
  %v563 = vpop.f32.mrf.mxu0
  %v564 = vpop.f32.mrf.mxu0
  %v565 = vadd.f32 0.0, %v564
  %v566 = vpop.f32.mrf.mxu0
  %567 = vmatprep.mubr.bf16.mxu0 %v291
  %568 = vmatmul.mubr.bf16.gmra.mxu0 %v290
  %v569 = vpop.f32.mrf.mxu0
  %v570 = vadd.f32 0.0, %v569
  %v571 = vpop.f32.mrf.mxu0
  %v572 = vpop.f32.mrf.mxu0
  %v573 = vadd.f32 0.0, %v572
  %v574 = vpop.f32.mrf.mxu0
  %575 = vmatprep.mubr.bf16.mxu0 %v294
  %576 = vmatmul.mubr.bf16.gmra.mxu0 %v293
  %v577 = vpop.f32.mrf.mxu0
  %v578 = vadd.f32 0.0, %v577
  %v579 = vpop.f32.mrf.mxu0
  %v580 = vpop.f32.mrf.mxu0
  %v581 = vadd.f32 0.0, %v580
  %v582 = vpop.f32.mrf.mxu0
  %583 = vmatprep.mubr.bf16.mxu0 %v297
  %584 = vmatmul.mubr.bf16.gmra.mxu0 %v296
  %v585 = vpop.f32.mrf.mxu0
  %v586 = vadd.f32 0.0, %v585
  %v587 = vpop.f32.mrf.mxu0
  %v588 = vpop.f32.mrf.mxu0
  %v589 = vadd.f32 0.0, %v588
  %v590 = vpop.f32.mrf.mxu0
  %591 = vmatprep.mubr.bf16.mxu0 %v300
  %592 = vmatmul.mubr.bf16.gmra.mxu0 %v299
  %v593 = vpop.f32.mrf.mxu0
  %v594 = vadd.f32 0.0, %v593
  %v595 = vpop.f32.mrf.mxu0
  %v596 = vpop.f32.mrf.mxu0
  %v597 = vadd.f32 0.0, %v596
  %v598 = vpop.f32.mrf.mxu0
  %599 = vmatprep.mubr.bf16.mxu0 %v303
  %600 = vmatmul.mubr.bf16.gmra.mxu0 %v302
  %v601 = vpop.f32.mrf.mxu0
  %v602 = vadd.f32 0.0, %v601
  %v603 = vpop.f32.mrf.mxu0
  %v604 = vpop.f32.mrf.mxu0
  %v605 = vadd.f32 0.0, %v604
  %v606 = vpop.f32.mrf.mxu0
  %607 = vmatprep.mubr.bf16.mxu0 %v306
  %608 = vmatmul.mubr.bf16.gmra.mxu0 %v305
  %v609 = vpop.f32.mrf.mxu0
  %v610 = vadd.f32 0.0, %v609
  %v611 = vpop.f32.mrf.mxu0
  %v612 = vpop.f32.mrf.mxu0
  %v613 = vadd.f32 0.0, %v612
  %v614 = vpop.f32.mrf.mxu0
  %615 = vmatprep.mubr.bf16.mxu0 %v309
  %616 = vmatmul.mubr.bf16.gmra.mxu0 %v308
  %v617 = vpop.f32.mrf.mxu0
  %v618 = vadd.f32 0.0, %v617
  %v619 = vpop.f32.mrf.mxu0
  %v620 = vpop.f32.mrf.mxu0
  %v621 = vadd.f32 0.0, %v620
  %v622 = vpop.f32.mrf.mxu0
  %623 = vmatprep.mubr.bf16.mxu0 %v312
  %624 = vmatmul.mubr.bf16.gmra.mxu0 %v311
  %v625 = vpop.f32.mrf.mxu0
  %v626 = vadd.f32 0.0, %v625
  %v627 = vpop.f32.mrf.mxu0
  %v628 = vpop.f32.mrf.mxu0
  %v629 = vadd.f32 0.0, %v628
  %v630 = vpop.f32.mrf.mxu0
  %631 = vmatprep.mubr.bf16.mxu0 %v315
  %632 = vmatmul.mubr.bf16.gmra.mxu0 %v314
  %v633 = vpop.f32.mrf.mxu0
  %v634 = vadd.f32 0.0, %v633
  %v635 = vpop.f32.mrf.mxu0
  %v636 = vpop.f32.mrf.mxu0
  %v637 = vadd.f32 0.0, %v636
  %v638 = vpop.f32.mrf.mxu0
  %639 = vmatprep.mubr.bf16.mxu0 %v318
  %640 = vmatmul.mubr.bf16.gmra.mxu0 %v317
  %v641 = vpop.f32.mrf.mxu0
  %v642 = vadd.f32 0.0, %v641
  %v643 = vpop.f32.mrf.mxu0
  %v644 = vpop.f32.mrf.mxu0
  %v645 = vadd.f32 0.0, %v644
  %v646 = vpop.f32.mrf.mxu0
  %647 = vmatprep.mubr.bf16.mxu0 %v321
  %648 = vmatmul.mubr.bf16.gmra.mxu0 %v320
  %v649 = vpop.f32.mrf.mxu0
  %v650 = vadd.f32 0.0, %v649
  %v651 = vpop.f32.mrf.mxu0
  %v652 = vpop.f32.mrf.mxu0
  %v653 = vadd.f32 0.0, %v652
  %v654 = vpop.f32.mrf.mxu0
  %655 = vmatprep.mubr.bf16.mxu0 %v324
  %656 = vmatmul.mubr.bf16.gmra.mxu0 %v323
  %v657 = vpop.f32.mrf.mxu0
  %v658 = vadd.f32 0.0, %v657
  %v659 = vpop.f32.mrf.mxu0
  %v660 = vpop.f32.mrf.mxu0
  %v661 = vadd.f32 0.0, %v660
  %v662 = vpop.f32.mrf.mxu0
  %663 = vmatprep.mubr.bf16.mxu0 %v327
  %664 = vmatmul.mubr.bf16.gmra.mxu0 %v326
  %v665 = vpop.f32.mrf.mxu0
  %v666 = vadd.f32 0.0, %v665
  %v667 = vpop.f32.mrf.mxu0
  %v668 = vpop.f32.mrf.mxu0
  %v669 = vadd.f32 0.0, %v668
  %v670 = vpop.f32.mrf.mxu0
  %671 = vmatprep.mubr.bf16.mxu0 %v330
  %672 = vmatmul.mubr.bf16.gmra.mxu0 %v329
  %v673 = vpop.f32.mrf.mxu0
  %v674 = vadd.f32 0.0, %v673
  %v675 = vpop.f32.mrf.mxu0
  %v676 = vpop.f32.mrf.mxu0
  %v677 = vadd.f32 0.0, %v676
  %v678 = vpop.f32.mrf.mxu0
  %679 = vmatprep.mubr.bf16.mxu0 %v333
  %680 = vmatmul.mubr.bf16.gmra.mxu0 %v332
  %v681 = vpop.f32.mrf.mxu0
  %v682 = vadd.f32 0.0, %v681
  %v683 = vpop.f32.mrf.mxu0
  %v684 = vpop.f32.mrf.mxu0
  %v685 = vadd.f32 0.0, %v684
  %v686 = vpop.f32.mrf.mxu0
  %687 = vdwg.mxu0
  %688 = vmatprep.subr.bf16.mxu0 0
  %689 = vmatpush1.bf16.msra.mxu0 %v502
  %690 = vmatprep.subr.bf16.mxu0 0
  %691 = vmatpush1.bf16.msra.mxu0 %v501
  %692 = vmatprep.subr.bf16.mxu0 0
  %693 = vmatpush1.bf16.msra.mxu0 %v500
  %694 = vmatprep.subr.bf16.mxu0 0
  %695 = vmatpush1.bf16.msra.mxu0 %v499
  %696 = vmatprep.subr.bf16.mxu0 0
  %697 = vmatpush1.bf16.msra.mxu0 %v498
  %698 = vmatprep.subr.bf16.mxu0 0
  %699 = vmatpush1.bf16.msra.mxu0 %v497
  %700 = vmatprep.subr.bf16.mxu0 0
  %701 = vmatpush1.bf16.msra.mxu0 %v496
  %702 = vmatprep.subr.bf16.mxu0 0
  %703 = vmatpush1.bf16.msra.mxu0 %v495
  %704 = vmatprep.subr.bf16.mxu0 0
  %705 = vmatpush2.bf16.msra.mxu0 0
  %706 = vmatprep.subr.bf16.mxu0 0
  %707 = vmatpush2.bf16.msra.mxu0 0
  %708 = vmatprep.subr.bf16.mxu0 0
  %709 = vmatpush2.bf16.msra.mxu0 0
  %710 = vmatprep.subr.bf16.mxu0 0
  %711 = vmatpush2.bf16.msra.mxu0 0
  %712 = vmatprep.subr.bf16.mxu0 0
  %713 = vmatpush2.bf16.msra.mxu0 0
  %714 = vmatprep.subr.bf16.mxu0 0
  %715 = vmatpush2.bf16.msra.mxu0 0
  %716 = vmatprep.subr.bf16.mxu0 0
  %717 = vmatpush2.bf16.msra.mxu0 0
  %718 = vmatprep.subr.bf16.mxu0 0
  %719 = vmatpush2.bf16.msra.mxu0 0
  %720 = vmatprep.mubr.bf16.mxu0 0
  %721 = vmatmul.mubr.bf16.gmra.mxu0 %v289
  %v722 = vpop.f32.mrf.mxu0
  %v723 = vadd.f32 %v562, %v722
  %v724 = vpop.f32.mrf.mxu0
  %v725 = vpop.f32.mrf.mxu0
  %v726 = vadd.f32 %v565, %v725
  %v727 = vpop.f32.mrf.mxu0
  %728 = vmatprep.mubr.bf16.mxu0 0
  %729 = vmatmul.mubr.bf16.gmra.mxu0 %v292
  %v730 = vpop.f32.mrf.mxu0
  %v731 = vadd.f32 %v570, %v730
  %v732 = vpop.f32.mrf.mxu0
  %v733 = vpop.f32.mrf.mxu0
  %v734 = vadd.f32 %v573, %v733
  %v735 = vpop.f32.mrf.mxu0
  %736 = vmatprep.mubr.bf16.mxu0 0
  %737 = vmatmul.mubr.bf16.gmra.mxu0 %v295
  %v738 = vpop.f32.mrf.mxu0
  %v739 = vadd.f32 %v578, %v738
  %v740 = vpop.f32.mrf.mxu0
  %v741 = vpop.f32.mrf.mxu0
  %v742 = vadd.f32 %v581, %v741
  %v743 = vpop.f32.mrf.mxu0
  %744 = vmatprep.mubr.bf16.mxu0 0
  %745 = vmatmul.mubr.bf16.gmra.mxu0 %v298
  %v746 = vpop.f32.mrf.mxu0
  %v747 = vadd.f32 %v586, %v746
  %v748 = vpop.f32.mrf.mxu0
  %v749 = vpop.f32.mrf.mxu0
  %v750 = vadd.f32 %v589, %v749
  %v751 = vpop.f32.mrf.mxu0
  %752 = vmatprep.mubr.bf16.mxu0 0
  %753 = vmatmul.mubr.bf16.gmra.mxu0 %v301
  %v754 = vpop.f32.mrf.mxu0
  %v755 = vadd.f32 %v594, %v754
  %v756 = vpop.f32.mrf.mxu0
  %v757 = vpop.f32.mrf.mxu0
  %v758 = vadd.f32 %v597, %v757
  %v759 = vpop.f32.mrf.mxu0
  %760 = vmatprep.mubr.bf16.mxu0 0
  %761 = vmatmul.mubr.bf16.gmra.mxu0 %v304
  %v762 = vpop.f32.mrf.mxu0
  %v763 = vadd.f32 %v602, %v762
  %v764 = vpop.f32.mrf.mxu0
  %v765 = vpop.f32.mrf.mxu0
  %v766 = vadd.f32 %v605, %v765
  %v767 = vpop.f32.mrf.mxu0
  %768 = vmatprep.mubr.bf16.mxu0 0
  %769 = vmatmul.mubr.bf16.gmra.mxu0 %v307
  %v770 = vpop.f32.mrf.mxu0
  %v771 = vadd.f32 %v610, %v770
  %v772 = vpop.f32.mrf.mxu0
  %v773 = vpop.f32.mrf.mxu0
  %v774 = vadd.f32 %v613, %v773
  %v775 = vpop.f32.mrf.mxu0
  %776 = vmatprep.mubr.bf16.mxu0 0
  %777 = vmatmul.mubr.bf16.gmra.mxu0 %v310
  %v778 = vpop.f32.mrf.mxu0
  %v779 = vadd.f32 %v618, %v778
  %v780 = vpop.f32.mrf.mxu0
  %v781 = vpop.f32.mrf.mxu0
  %v782 = vadd.f32 %v621, %v781
  %v783 = vpop.f32.mrf.mxu0
  %784 = vmatprep.mubr.bf16.mxu0 0
  %785 = vmatmul.mubr.bf16.gmra.mxu0 %v313
  %v786 = vpop.f32.mrf.mxu0
  %v787 = vadd.f32 %v626, %v786
  %v788 = vpop.f32.mrf.mxu0
  %v789 = vpop.f32.mrf.mxu0
  %v790 = vadd.f32 %v629, %v789
  %v791 = vpop.f32.mrf.mxu0
  %792 = vmatprep.mubr.bf16.mxu0 0
  %793 = vmatmul.mubr.bf16.gmra.mxu0 %v316
  %v794 = vpop.f32.mrf.mxu0
  %v795 = vadd.f32 %v634, %v794
  %v796 = vpop.f32.mrf.mxu0
  %v797 = vpop.f32.mrf.mxu0
  %v798 = vadd.f32 %v637, %v797
  %v799 = vpop.f32.mrf.mxu0
  %800 = vmatprep.mubr.bf16.mxu0 0
  %801 = vmatmul.mubr.bf16.gmra.mxu0 %v319
  %v802 = vpop.f32.mrf.mxu0
  %v803 = vadd.f32 %v642, %v802
  %v804 = vpop.f32.mrf.mxu0
  %v805 = vpop.f32.mrf.mxu0
  %v806 = vadd.f32 %v645, %v805
  %v807 = vpop.f32.mrf.mxu0
  %808 = vmatprep.mubr.bf16.mxu0 0
  %809 = vmatmul.mubr.bf16.gmra.mxu0 %v322
  %v810 = vpop.f32.mrf.mxu0
  %v811 = vadd.f32 %v650, %v810
  %v812 = vpop.f32.mrf.mxu0
  %v813 = vpop.f32.mrf.mxu0
  %v814 = vadd.f32 %v653, %v813
  %v815 = vpop.f32.mrf.mxu0
  %816 = vmatprep.mubr.bf16.mxu0 0
  %817 = vmatmul.mubr.bf16.gmra.mxu0 %v325
  %v818 = vpop.f32.mrf.mxu0
  %v819 = vadd.f32 %v658, %v818
  %v820 = vpop.f32.mrf.mxu0
  %v821 = vpop.f32.mrf.mxu0
  %v822 = vadd.f32 %v661, %v821
  %v823 = vpop.f32.mrf.mxu0
  %824 = vmatprep.mubr.bf16.mxu0 0
  %825 = vmatmul.mubr.bf16.gmra.mxu0 %v328
  %v826 = vpop.f32.mrf.mxu0
  %v827 = vadd.f32 %v666, %v826
  %v828 = vpop.f32.mrf.mxu0
  %v829 = vpop.f32.mrf.mxu0
  %v830 = vadd.f32 %v669, %v829
  %v831 = vpop.f32.mrf.mxu0
  %832 = vmatprep.mubr.bf16.mxu0 0
  %833 = vmatmul.mubr.bf16.gmra.mxu0 %v331
  %v834 = vpop.f32.mrf.mxu0
  %v835 = vadd.f32 %v674, %v834
  %v836 = vpop.f32.mrf.mxu0
  %v837 = vpop.f32.mrf.mxu0
  %v838 = vadd.f32 %v677, %v837
  %v839 = vpop.f32.mrf.mxu0
  %840 = vmatprep.mubr.bf16.mxu0 0
  %841 = vmatmul.mubr.bf16.gmra.mxu0 %v334
  %v842 = vpop.f32.mrf.mxu0
  %v843 = vadd.f32 %v682, %v842
  %v844 = vpop.f32.mrf.mxu0
  %v845 = vpop.f32.mrf.mxu0
  %v846 = vadd.f32 %v685, %v845
  %v847 = vpop.f32.mrf.mxu0
  %848 = vdwg.mxu0
  %v849 = vmax.f32 %v723, %v755
  %v850 = vmax.f32 %v726, %v758
  %v851 = vmax.f32 %v731, %v763
  %v852 = vmax.f32 %v734, %v766
  %v853 = vmax.f32 %v739, %v771
  %v854 = vmax.f32 %v742, %v774
  %v855 = vmax.f32 %v747, %v779
  %v856 = vmax.f32 %v750, %v782
  %v857 = vmax.f32 %v787, %v819
  %v858 = vmax.f32 %v790, %v822
  %v859 = vmax.f32 %v795, %v827
  %v860 = vmax.f32 %v798, %v830
  %v861 = vmax.f32 %v803, %v835
  %v862 = vmax.f32 %v806, %v838
  %v863 = vmax.f32 %v811, %v843
  %v864 = vmax.f32 %v814, %v846
  %v865 = vmax.f32 %v849, %v857
  %v866 = vmax.f32 %v850, %v858
  %v867 = vmax.f32 %v851, %v859
  %v868 = vmax.f32 %v852, %v860
  %v869 = vmax.f32 %v853, %v861
  %v870 = vmax.f32 %v854, %v862
  %v871 = vmax.f32 %v855, %v863
  %v872 = vmax.f32 %v856, %v864
  %v873 = vld [vmem:[%s2] sm:$0x1]
  %v875 = vlaneseq
  %v876 = vshrl.u32 %v875, 7
  %v877 = vsub.s32 0, %v876
  %v878 = vrot.slane %v873, %v877
  %v880 = vadd.f32 %v865, %v878
  %v881 = vadd.f32 %v866, %v878
  %v882 = vadd.f32 %v867, %v878
  %v883 = vadd.f32 %v868, %v878
  %v884 = vadd.f32 %v869, %v878
  %v885 = vadd.f32 %v870, %v878
  %v886 = vadd.f32 %v871, %v878
  %v887 = vadd.f32 %v872, %v878
  %v888 = vmax.f32 %v880, 0.0
  %v889 = vmax.f32 %v881, 0.0
  %v890 = vmax.f32 %v882, 0.0
  %v891 = vmax.f32 %v883, 0.0
  %v892 = vmax.f32 %v884, 0.0
  %v893 = vmax.f32 %v885, 0.0
  %v894 = vmax.f32 %v886, 0.0
  %v895 = vmax.f32 %v887, 0.0
  %v896 = vpack.c.bf16 %v889, %v888
  %v897 = vpack.c.bf16 %v891, %v890
  %v898 = vpack.c.bf16 %v893, %v892
  %v899 = vpack.c.bf16 %v895, %v894
  %v904 = vunpack.c.l.b16 %v896
  %v905 = vunpack.c.h.b16 %v896
  %v906 = vunpack.c.l.b16 %v897
  %v907 = vunpack.c.h.b16 %v897
  %v908 = vunpack.c.l.b16 %v898
  %v909 = vunpack.c.h.b16 %v898
  %v910 = vunpack.c.l.b16 %v899
  %v911 = vunpack.c.h.b16 %v899
  %v912 = vpack.c.b16 %v904, %v904
  %v913 = vpack.c.b16 %v905, %v905
  %v914 = vpack.c.b16 %v906, %v906
  %v915 = vpack.c.b16 %v907, %v907
  %v916 = vpack.c.b16 %v908, %v908
  %v917 = vpack.c.b16 %v909, %v909
  %v918 = vpack.c.b16 %v910, %v910
  %v919 = vpack.c.b16 %v911, %v911
  %928 = vst [vmem:[%s3] sm:$0xf] %v912
  %929 = vst [vmem:[%s3 + $0x4] sm:$0xf] %v913
  %930 = vst [vmem:[%s3 + $0x8] sm:$0xf] %v914
  %931 = vst [vmem:[%s3 + $0xc] sm:$0xf] %v915
  %932 = vst [vmem:[%s3 + $0x10] sm:$0xf] %v916
  %933 = vst [vmem:[%s3 + $0x14] sm:$0xf] %v917
  %934 = vst [vmem:[%s3 + $0x18] sm:$0xf] %v918
  %935 = vst [vmem:[%s3 + $0x1c] sm:$0xf] %v919
  // Predicated region
  $region14: #{lenet_forward.4} parent=0 // pred_check
    _
  $region15: #{lenet_forward.4} parent=0 // pred_check_branch
    %937 = sbr.rel (0) target = $region17
  $region16: #{lenet_forward.4} parent=0 // pred_region
    _
  $region17: #{lenet_forward.4} parent=0 // pred_fallthru
    _
  // Predicated region
  $region18: #{lenet_forward.4} parent=0 // pred_check
    _
  $region19: #{lenet_forward.4} parent=0 // pred_check_branch
    %939 = sbr.rel (0) target = $region21
  $region20: #{lenet_forward.4} parent=0 // pred_region
    _
  $region21: #{lenet_forward.4} parent=0 // pred_fallthru
    _

// kernel: lenet_forward.5
$region0: #{lenet_forward.5}
  #allocation0 [shape = 'u32[]', space=smem, size = 0x4, offset = 0x4, fixed_abs, tag = 'smem constant byte address 0x4 - core index']
  #allocation1 [shape = 'u32[144,128]{1,0:T(1,128)}', space=vmem, size = 0x12000, scoped, tag = 'internal scratch']
  %s0 = inlined_call_operand.vmem [shape: bf16[16,512], index: 0, kind: input, shape index: {}]
  %s1 = inlined_call_operand.vmem [shape: bf16[512,128], index: 1, kind: input, shape index: {}]
  %s2 = inlined_call_operand.vmem [shape: f32[1,128], index: 2, kind: input, shape index: {}]
  %s3 = inlined_call_operand.vmem [shape: bf16[128,128], index: 3, kind: input, shape index: {}]
  %s4 = inlined_call_operand.vmem [shape: f32[1,128], index: 4, kind: input, shape index: {}]
  %s5 = inlined_call_operand.vmem [shape: bf16[128,128], index: 5, kind: input, shape index: {}]
  %s6 = inlined_call_operand.vmem [shape: f32[1,128], index: 6, kind: input, shape index: {}]
  %s7 = inlined_call_operand.vmem [shape: f32[16,128], index: 7, kind: output, shape index: {}]
  %s8 = sld [smem:[#allocation0]]
  $region38: #{lenet_forward.5} parent=0
    _
  %s10 = ssub.s32 1, %s8
  %s11 = scalar_select 0, %s10, %s8
  // Predicated region
  $region2: #{lenet_forward.5} parent=0 // pred_check
    _
  $region3: #{lenet_forward.5} parent=0 // pred_check_branch
    %13 = sbr.rel (0) target = $region5
  $region4: #{lenet_forward.5} parent=0 // pred_region
    _
  $region5: #{lenet_forward.5} parent=0 // pred_fallthru
    _
  // Predicated region
  $region6: #{lenet_forward.5} parent=0 // pred_check
    _
  $region7: #{lenet_forward.5} parent=0 // pred_check_branch
    %15 = sbr.rel (0) target = $region9
  $region8: #{lenet_forward.5} parent=0 // pred_region
    _
  $region9: #{lenet_forward.5} parent=0 // pred_fallthru
    _
  // Predicated region
  $region10: #{lenet_forward.5} parent=0 // pred_check
    _
  $region11: #{lenet_forward.5} parent=0 // pred_check_branch
    %17 = sbr.rel (0) target = $region13
  $region12: #{lenet_forward.5} parent=0 // pred_region
    _
  $region13: #{lenet_forward.5} parent=0 // pred_fallthru
    _
  // Predicated region
  $region14: #{lenet_forward.5} parent=0 // pred_check
    _
  $region15: #{lenet_forward.5} parent=0 // pred_check_branch
    %19 = sbr.rel (0) target = $region17
  $region16: #{lenet_forward.5} parent=0 // pred_region
    _
  $region17: #{lenet_forward.5} parent=0 // pred_fallthru
    _
  // Predicated region
  $region18: #{lenet_forward.5} parent=0 // pred_check
    _
  $region19: #{lenet_forward.5} parent=0 // pred_check_branch
    %21 = sbr.rel (0) target = $region21
  $region20: #{lenet_forward.5} parent=0 // pred_region
    _
  $region21: #{lenet_forward.5} parent=0 // pred_fallthru
    _
  // Predicated region
  $region22: #{lenet_forward.5} parent=0 // pred_check
    _
  $region23: #{lenet_forward.5} parent=0 // pred_check_branch
    %23 = sbr.rel (0) target = $region25
  $region24: #{lenet_forward.5} parent=0 // pred_region
    _
  $region25: #{lenet_forward.5} parent=0 // pred_fallthru
    _
  // Predicated region
  $region26: #{lenet_forward.5} parent=0 // pred_check
    _
  $region27: #{lenet_forward.5} parent=0 // pred_check_branch
    %25 = sbr.rel (0) target = $region29
  $region28: #{lenet_forward.5} parent=0 // pred_region
    _
  $region29: #{lenet_forward.5} parent=0 // pred_fallthru
    _
  %v27 = vld [vmem:[%s0] sm:$0xff]
  %v28 = vld [vmem:[%s0 + $0x8] sm:$0xff]
  %v29 = vld [vmem:[%s0 + $0x10] sm:$0xff]
  %v30 = vld [vmem:[%s0 + $0x18] sm:$0xff]
  %v31 = vld [vmem:[%s1] sm:$0xf]
  %v32 = vld [vmem:[%s1 + $0x4] sm:$0xf]
  %v33 = vld [vmem:[%s1 + $0x8] sm:$0xf]
  %v34 = vld [vmem:[%s1 + $0xc] sm:$0xf]
  %v35 = vld [vmem:[%s1 + $0x10] sm:$0xf]
  %v36 = vld [vmem:[%s1 + $0x14] sm:$0xf]
  %v37 = vld [vmem:[%s1 + $0x18] sm:$0xf]
  %v38 = vld [vmem:[%s1 + $0x1c] sm:$0xf]
  %v39 = vld [vmem:[%s1 + $0x20] sm:$0xf]
  %v40 = vld [vmem:[%s1 + $0x24] sm:$0xf]
  %v41 = vld [vmem:[%s1 + $0x28] sm:$0xf]
  %v42 = vld [vmem:[%s1 + $0x2c] sm:$0xf]
  %v43 = vld [vmem:[%s1 + $0x30] sm:$0xf]
  %v44 = vld [vmem:[%s1 + $0x34] sm:$0xf]
  %v45 = vld [vmem:[%s1 + $0x38] sm:$0xf]
  %v46 = vld [vmem:[%s1 + $0x3c] sm:$0xf]
  %v47 = vld [vmem:[%s1 + $0x40] sm:$0xf]
  %v48 = vld [vmem:[%s1 + $0x44] sm:$0xf]
  %v49 = vld [vmem:[%s1 + $0x48] sm:$0xf]
  %v50 = vld [vmem:[%s1 + $0x4c] sm:$0xf]
  %v51 = vld [vmem:[%s1 + $0x50] sm:$0xf]
  %v52 = vld [vmem:[%s1 + $0x54] sm:$0xf]
  %v53 = vld [vmem:[%s1 + $0x58] sm:$0xf]
  %v54 = vld [vmem:[%s1 + $0x5c] sm:$0xf]
  %v55 = vld [vmem:[%s1 + $0x60] sm:$0xf]
  %v56 = vld [vmem:[%s1 + $0x64] sm:$0xf]
  %v57 = vld [vmem:[%s1 + $0x68] sm:$0xf]
  %v58 = vld [vmem:[%s1 + $0x6c] sm:$0xf]
  %v59 = vld [vmem:[%s1 + $0x70] sm:$0xf]
  %v60 = vld [vmem:[%s1 + $0x74] sm:$0xf]
  %v61 = vld [vmem:[%s1 + $0x78] sm:$0xf]
  %v62 = vld [vmem:[%s1 + $0x7c] sm:$0xf]
  %v63 = vld [vmem:[%s1 + $0x80] sm:$0xf]
  %v64 = vld [vmem:[%s1 + $0x84] sm:$0xf]
  %v65 = vld [vmem:[%s1 + $0x88] sm:$0xf]
  %v66 = vld [vmem:[%s1 + $0x8c] sm:$0xf]
  %v67 = vld [vmem:[%s1 + $0x90] sm:$0xf]
  %v68 = vld [vmem:[%s1 + $0x94] sm:$0xf]
  %v69 = vld [vmem:[%s1 + $0x98] sm:$0xf]
  %v70 = vld [vmem:[%s1 + $0x9c] sm:$0xf]
  %v71 = vld [vmem:[%s1 + $0xa0] sm:$0xf]
  %v72 = vld [vmem:[%s1 + $0xa4] sm:$0xf]
  %v73 = vld [vmem:[%s1 + $0xa8] sm:$0xf]
  %v74 = vld [vmem:[%s1 + $0xac] sm:$0xf]
  %v75 = vld [vmem:[%s1 + $0xb0] sm:$0xf]
  %v76 = vld [vmem:[%s1 + $0xb4] sm:$0xf]
  %v77 = vld [vmem:[%s1 + $0xb8] sm:$0xf]
  %v78 = vld [vmem:[%s1 + $0xbc] sm:$0xf]
  %v79 = vld [vmem:[%s1 + $0xc0] sm:$0xf]
  %v80 = vld [vmem:[%s1 + $0xc4] sm:$0xf]
  %v81 = vld [vmem:[%s1 + $0xc8] sm:$0xf]
  %v82 = vld [vmem:[%s1 + $0xcc] sm:$0xf]
  %v83 = vld [vmem:[%s1 + $0xd0] sm:$0xf]
  %v84 = vld [vmem:[%s1 + $0xd4] sm:$0xf]
  %v85 = vld [vmem:[%s1 + $0xd8] sm:$0xf]
  %v86 = vld [vmem:[%s1 + $0xdc] sm:$0xf]
  %v87 = vld [vmem:[%s1 + $0xe0] sm:$0xf]
  %v88 = vld [vmem:[%s1 + $0xe4] sm:$0xf]
  %v89 = vld [vmem:[%s1 + $0xe8] sm:$0xf]
  %v90 = vld [vmem:[%s1 + $0xec] sm:$0xf]
  %v91 = vld [vmem:[%s1 + $0xf0] sm:$0xf]
  %v92 = vld [vmem:[%s1 + $0xf4] sm:$0xf]
  %v93 = vld [vmem:[%s1 + $0xf8] sm:$0xf]
  %v94 = vld [vmem:[%s1 + $0xfc] sm:$0xf]
  %v95 = vld [vmem:[%s2] sm:$0x1]
  %v97 = vlaneseq
  %v98 = vshrl.u32 %v97, 7
  %v99 = vsub.s32 0, %v98
  %v100 = vrot.slane %v95, %v99
  %v106 = vunpack.c.l.b16 %v27
  %v107 = vunpack.c.h.b16 %v27
  %v108 = vunpack.c.l.b16 %v28
  %v109 = vunpack.c.h.b16 %v28
  %v110 = vunpack.c.l.b16 %v29
  %v111 = vunpack.c.h.b16 %v29
  %v112 = vunpack.c.l.b16 %v30
  %v113 = vunpack.c.h.b16 %v30
  %v114 = vpack.c.b16 %v110, %v106
  %v115 = vpack.c.b16 %v111, %v107
  %v116 = vpack.c.b16 %v112, %v108
  %v117 = vpack.c.b16 %v113, %v109
  %v186 = vunpack.c.l.b16 %v31
  %v187 = vunpack.c.l.b16 %v32
  %v188 = vunpack.c.l.b16 %v33
  %v189 = vunpack.c.l.b16 %v34
  %v190 = vunpack.c.l.b16 %v35
  %v191 = vunpack.c.l.b16 %v36
  %v192 = vunpack.c.l.b16 %v37
  %v193 = vunpack.c.l.b16 %v38
  %v194 = vunpack.c.l.b16 %v39
  %v195 = vunpack.c.l.b16 %v40
  %v196 = vunpack.c.l.b16 %v41
  %v197 = vunpack.c.l.b16 %v42
  %v198 = vunpack.c.l.b16 %v43
  %v199 = vunpack.c.l.b16 %v44
  %v200 = vunpack.c.l.b16 %v45
  %v201 = vunpack.c.l.b16 %v46
  %v202 = vunpack.c.l.b16 %v47
  %v203 = vunpack.c.l.b16 %v48
  %v204 = vunpack.c.l.b16 %v49
  %v205 = vunpack.c.l.b16 %v50
  %v206 = vunpack.c.l.b16 %v51
  %v207 = vunpack.c.l.b16 %v52
  %v208 = vunpack.c.l.b16 %v53
  %v209 = vunpack.c.l.b16 %v54
  %v210 = vunpack.c.l.b16 %v55
  %v211 = vunpack.c.l.b16 %v56
  %v212 = vunpack.c.l.b16 %v57
  %v213 = vunpack.c.l.b16 %v58
  %v214 = vunpack.c.l.b16 %v59
  %v215 = vunpack.c.l.b16 %v60
  %v216 = vunpack.c.l.b16 %v61
  %v217 = vunpack.c.l.b16 %v62
  %v218 = vunpack.c.l.b16 %v63
  %v219 = vunpack.c.l.b16 %v64
  %v220 = vunpack.c.l.b16 %v65
  %v221 = vunpack.c.l.b16 %v66
  %v222 = vunpack.c.l.b16 %v67
  %v223 = vunpack.c.l.b16 %v68
  %v224 = vunpack.c.l.b16 %v69
  %v225 = vunpack.c.l.b16 %v70
  %v226 = vunpack.c.l.b16 %v71
  %v227 = vunpack.c.l.b16 %v72
  %v228 = vunpack.c.l.b16 %v73
  %v229 = vunpack.c.l.b16 %v74
  %v230 = vunpack.c.l.b16 %v75
  %v231 = vunpack.c.l.b16 %v76
  %v232 = vunpack.c.l.b16 %v77
  %v233 = vunpack.c.l.b16 %v78
  %v234 = vunpack.c.l.b16 %v79
  %v235 = vunpack.c.l.b16 %v80
  %v236 = vunpack.c.l.b16 %v81
  %v237 = vunpack.c.l.b16 %v82
  %v238 = vunpack.c.l.b16 %v83
  %v239 = vunpack.c.l.b16 %v84
  %v240 = vunpack.c.l.b16 %v85
  %v241 = vunpack.c.l.b16 %v86
  %v242 = vunpack.c.l.b16 %v87
  %v243 = vunpack.c.l.b16 %v88
  %v244 = vunpack.c.l.b16 %v89
  %v245 = vunpack.c.l.b16 %v90
  %v246 = vunpack.c.l.b16 %v91
  %v247 = vunpack.c.l.b16 %v92
  %v248 = vunpack.c.l.b16 %v93
  %v249 = vunpack.c.l.b16 %v94
  %v250 = vpack.c.b16 %v187, %v186
  %v251 = vpack.c.b16 %v189, %v188
  %v252 = vpack.c.b16 %v191, %v190
  %v253 = vpack.c.b16 %v193, %v192
  %v254 = vpack.c.b16 %v195, %v194
  %v255 = vpack.c.b16 %v197, %v196
  %v256 = vpack.c.b16 %v199, %v198
  %v257 = vpack.c.b16 %v201, %v200
  %v258 = vpack.c.b16 %v203, %v202
  %v259 = vpack.c.b16 %v205, %v204
  %v260 = vpack.c.b16 %v207, %v206
  %v261 = vpack.c.b16 %v209, %v208
  %v262 = vpack.c.b16 %v211, %v210
  %v263 = vpack.c.b16 %v213, %v212
  %v264 = vpack.c.b16 %v215, %v214
  %v265 = vpack.c.b16 %v217, %v216
  %v266 = vpack.c.b16 %v219, %v218
  %v267 = vpack.c.b16 %v221, %v220
  %v268 = vpack.c.b16 %v223, %v222
  %v269 = vpack.c.b16 %v225, %v224
  %v270 = vpack.c.b16 %v227, %v226
  %v271 = vpack.c.b16 %v229, %v228
  %v272 = vpack.c.b16 %v231, %v230
  %v273 = vpack.c.b16 %v233, %v232
  %v274 = vpack.c.b16 %v235, %v234
  %v275 = vpack.c.b16 %v237, %v236
  %v276 = vpack.c.b16 %v239, %v238
  %v277 = vpack.c.b16 %v241, %v240
  %v278 = vpack.c.b16 %v243, %v242
  %v279 = vpack.c.b16 %v245, %v244
  %v280 = vpack.c.b16 %v247, %v246
  %v281 = vpack.c.b16 %v249, %v248
  %314 = vmatprep.subr.bf16.mxu0 0
  %315 = vmatpush1.bf16.msra.mxu0 %v257
  %316 = vmatprep.subr.bf16.mxu0 0
  %317 = vmatpush1.bf16.msra.mxu0 %v256
  %318 = vmatprep.subr.bf16.mxu0 0
  %319 = vmatpush1.bf16.msra.mxu0 %v255
  %320 = vmatprep.subr.bf16.mxu0 0
  %321 = vmatpush1.bf16.msra.mxu0 %v254
  %322 = vmatprep.subr.bf16.mxu0 0
  %323 = vmatpush1.bf16.msra.mxu0 %v253
  %324 = vmatprep.subr.bf16.mxu0 0
  %325 = vmatpush1.bf16.msra.mxu0 %v252
  %326 = vmatprep.subr.bf16.mxu0 0
  %327 = vmatpush1.bf16.msra.mxu0 %v251
  %328 = vmatprep.subr.bf16.mxu0 0
  %329 = vmatpush1.bf16.msra.mxu0 %v250
  %330 = vmatprep.subr.bf16.mxu0 0
  %331 = vmatpush2.bf16.msra.mxu0 %v265
  %332 = vmatprep.subr.bf16.mxu0 0
  %333 = vmatpush2.bf16.msra.mxu0 %v264
  %334 = vmatprep.subr.bf16.mxu0 0
  %335 = vmatpush2.bf16.msra.mxu0 %v263
  %336 = vmatprep.subr.bf16.mxu0 0
  %337 = vmatpush2.bf16.msra.mxu0 %v262
  %338 = vmatprep.subr.bf16.mxu0 0
  %339 = vmatpush2.bf16.msra.mxu0 %v261
  %340 = vmatprep.subr.bf16.mxu0 0
  %341 = vmatpush2.bf16.msra.mxu0 %v260
  %342 = vmatprep.subr.bf16.mxu0 0
  %343 = vmatpush2.bf16.msra.mxu0 %v259
  %344 = vmatprep.subr.bf16.mxu0 0
  %345 = vmatpush2.bf16.msra.mxu0 %v258
  %346 = vmatprep.mubr.bf16.mxu0 %v115
  %347 = vmatmul.mubr.bf16.gmra.mxu0 %v114
  %v348 = vpop.f32.mrf.mxu0
  %v349 = vadd.f32 %v100, %v348
  %v350 = vpop.f32.mrf.mxu0
  %v351 = vpop.f32.mrf.mxu0
  %v352 = vadd.f32 %v100, %v351
  %v353 = vpop.f32.mrf.mxu0
  %354 = vdwg.mxu0
  %355 = vmatprep.subr.bf16.mxu0 0
  %356 = vmatpush1.bf16.msra.mxu0 %v273
  %357 = vmatprep.subr.bf16.mxu0 0
  %358 = vmatpush1.bf16.msra.mxu0 %v272
  %359 = vmatprep.subr.bf16.mxu0 0
  %360 = vmatpush1.bf16.msra.mxu0 %v271
  %361 = vmatprep.subr.bf16.mxu0 0
  %362 = vmatpush1.bf16.msra.mxu0 %v270
  %363 = vmatprep.subr.bf16.mxu0 0
  %364 = vmatpush1.bf16.msra.mxu0 %v269
  %365 = vmatprep.subr.bf16.mxu0 0
  %366 = vmatpush1.bf16.msra.mxu0 %v268
  %367 = vmatprep.subr.bf16.mxu0 0
  %368 = vmatpush1.bf16.msra.mxu0 %v267
  %369 = vmatprep.subr.bf16.mxu0 0
  %370 = vmatpush1.bf16.msra.mxu0 %v266
  %371 = vmatprep.subr.bf16.mxu0 0
  %372 = vmatpush2.bf16.msra.mxu0 %v281
  %373 = vmatprep.subr.bf16.mxu0 0
  %374 = vmatpush2.bf16.msra.mxu0 %v280
  %375 = vmatprep.subr.bf16.mxu0 0
  %376 = vmatpush2.bf16.msra.mxu0 %v279
  %377 = vmatprep.subr.bf16.mxu0 0
  %378 = vmatpush2.bf16.msra.mxu0 %v278
  %379 = vmatprep.subr.bf16.mxu0 0
  %380 = vmatpush2.bf16.msra.mxu0 %v277
  %381 = vmatprep.subr.bf16.mxu0 0
  %382 = vmatpush2.bf16.msra.mxu0 %v276
  %383 = vmatprep.subr.bf16.mxu0 0
  %384 = vmatpush2.bf16.msra.mxu0 %v275
  %385 = vmatprep.subr.bf16.mxu0 0
  %386 = vmatpush2.bf16.msra.mxu0 %v274
  %387 = vmatprep.mubr.bf16.mxu0 %v117
  %388 = vmatmul.mubr.bf16.gmra.mxu0 %v116
  %v389 = vpop.f32.mrf.mxu0
  %v390 = vadd.f32 %v349, %v389
  %v391 = vpop.f32.mrf.mxu0
  %v392 = vpop.f32.mrf.mxu0
  %v393 = vadd.f32 %v352, %v392
  %v394 = vpop.f32.mrf.mxu0
  %395 = vdwg.mxu0
  %v396 = vmax.f32 %v390, 0.0
  %v397 = vmax.f32 %v393, 0.0
  %v398 = vpack.c.bf16 %v397, %v396
  %v399 = vld [vmem:[%s3] sm:$0xf]
  %v400 = vld [vmem:[%s3 + $0x4] sm:$0xf]
  %v401 = vld [vmem:[%s3 + $0x8] sm:$0xf]
  %v402 = vld [vmem:[%s3 + $0xc] sm:$0xf]
  %v403 = vld [vmem:[%s3 + $0x10] sm:$0xf]
  %v404 = vld [vmem:[%s3 + $0x14] sm:$0xf]
  %v405 = vld [vmem:[%s3 + $0x18] sm:$0xf]
  %v406 = vld [vmem:[%s3 + $0x1c] sm:$0xf]
  %v407 = vld [vmem:[%s3 + $0x20] sm:$0xf]
  %v408 = vld [vmem:[%s3 + $0x24] sm:$0xf]
  %v409 = vld [vmem:[%s3 + $0x28] sm:$0xf]
  %v410 = vld [vmem:[%s3 + $0x2c] sm:$0xf]
  %v411 = vld [vmem:[%s3 + $0x30] sm:$0xf]
  %v412 = vld [vmem:[%s3 + $0x34] sm:$0xf]
  %v413 = vld [vmem:[%s3 + $0x38] sm:$0xf]
  %v414 = vld [vmem:[%s3 + $0x3c] sm:$0xf]
  %v415 = vld [vmem:[%s4] sm:$0x1]
  %v417 = vlaneseq
  %v418 = vshrl.u32 %v417, 7
  %v419 = vsub.s32 0, %v418
  %v420 = vrot.slane %v415, %v419
  %v438 = vunpack.c.l.b16 %v399
  %v439 = vunpack.c.l.b16 %v400
  %v440 = vunpack.c.l.b16 %v401
  %v441 = vunpack.c.l.b16 %v402
  %v442 = vunpack.c.l.b16 %v403
  %v443 = vunpack.c.l.b16 %v404
  %v444 = vunpack.c.l.b16 %v405
  %v445 = vunpack.c.l.b16 %v406
  %v446 = vunpack.c.l.b16 %v407
  %v447 = vunpack.c.l.b16 %v408
  %v448 = vunpack.c.l.b16 %v409
  %v449 = vunpack.c.l.b16 %v410
  %v450 = vunpack.c.l.b16 %v411
  %v451 = vunpack.c.l.b16 %v412
  %v452 = vunpack.c.l.b16 %v413
  %v453 = vunpack.c.l.b16 %v414
  %v454 = vpack.c.b16 %v439, %v438
  %v455 = vpack.c.b16 %v441, %v440
  %v456 = vpack.c.b16 %v443, %v442
  %v457 = vpack.c.b16 %v445, %v444
  %v458 = vpack.c.b16 %v447, %v446
  %v459 = vpack.c.b16 %v449, %v448
  %v460 = vpack.c.b16 %v451, %v450
  %v461 = vpack.c.b16 %v453, %v452
  %470 = vmatprep.subr.bf16.mxu0 0
  %471 = vmatpush1.bf16.msra.mxu0 %v461
  %472 = vmatprep.subr.bf16.mxu0 0
  %473 = vmatpush1.bf16.msra.mxu0 %v460
  %474 = vmatprep.subr.bf16.mxu0 0
  %475 = vmatpush1.bf16.msra.mxu0 %v459
  %476 = vmatprep.subr.bf16.mxu0 0
  %477 = vmatpush1.bf16.msra.mxu0 %v458
  %478 = vmatprep.subr.bf16.mxu0 0
  %479 = vmatpush1.bf16.msra.mxu0 %v457
  %480 = vmatprep.subr.bf16.mxu0 0
  %481 = vmatpush1.bf16.msra.mxu0 %v456
  %482 = vmatprep.subr.bf16.mxu0 0
  %483 = vmatpush1.bf16.msra.mxu0 %v455
  %484 = vmatprep.subr.bf16.mxu0 0
  %485 = vmatpush1.bf16.msra.mxu0 %v454
  %486 = vmatprep.subr.bf16.mxu0 0
  %487 = vmatpush2.bf16.msra.mxu0 0
  %488 = vmatprep.subr.bf16.mxu0 0
  %489 = vmatpush2.bf16.msra.mxu0 0
  %490 = vmatprep.subr.bf16.mxu0 0
  %491 = vmatpush2.bf16.msra.mxu0 0
  %492 = vmatprep.subr.bf16.mxu0 0
  %493 = vmatpush2.bf16.msra.mxu0 0
  %494 = vmatprep.subr.bf16.mxu0 0
  %495 = vmatpush2.bf16.msra.mxu0 0
  %496 = vmatprep.subr.bf16.mxu0 0
  %497 = vmatpush2.bf16.msra.mxu0 0
  %498 = vmatprep.subr.bf16.mxu0 0
  %499 = vmatpush2.bf16.msra.mxu0 0
  %500 = vmatprep.subr.bf16.mxu0 0
  %501 = vmatpush2.bf16.msra.mxu0 0
  %502 = vmatprep.mubr.bf16.mxu0 0
  %503 = vmatmul.mubr.bf16.gmra.mxu0 %v398
  %v504 = vpop.f32.mrf.mxu0
  %v505 = vadd.f32 %v420, %v504
  %v506 = vpop.f32.mrf.mxu0
  %v507 = vpop.f32.mrf.mxu0
  %v508 = vadd.f32 %v420, %v507
  %v509 = vpop.f32.mrf.mxu0
  %510 = vdwg.mxu0
  %v511 = vmax.f32 %v505, 0.0
  %v512 = vmax.f32 %v508, 0.0
  %v513 = vpack.c.bf16 %v512, %v511
  %v514 = vld [vmem:[%s5] sm:$0xf]
  %v515 = vld [vmem:[%s5 + $0x4] sm:$0xf]
  %v516 = vld [vmem:[%s5 + $0x8] sm:$0xf]
  %v517 = vld [vmem:[%s5 + $0xc] sm:$0xf]
  %v518 = vld [vmem:[%s5 + $0x10] sm:$0xf]
  %v519 = vld [vmem:[%s5 + $0x14] sm:$0xf]
  %v520 = vld [vmem:[%s5 + $0x18] sm:$0xf]
  %v521 = vld [vmem:[%s5 + $0x1c] sm:$0xf]
  %v522 = vld [vmem:[%s5 + $0x20] sm:$0xf]
  %v523 = vld [vmem:[%s5 + $0x24] sm:$0xf]
  %v524 = vld [vmem:[%s5 + $0x28] sm:$0xf]
  %v525 = vld [vmem:[%s5 + $0x2c] sm:$0xf]
  %v526 = vld [vmem:[%s5 + $0x30] sm:$0xf]
  %v527 = vld [vmem:[%s5 + $0x34] sm:$0xf]
  %v528 = vld [vmem:[%s5 + $0x38] sm:$0xf]
  %v529 = vld [vmem:[%s5 + $0x3c] sm:$0xf]
  %v530 = vld [vmem:[%s6] sm:$0x1]
  %v532 = vlaneseq
  %v533 = vshrl.u32 %v532, 7
  %v534 = vsub.s32 0, %v533
  %v535 = vrot.slane %v530, %v534
  %v553 = vunpack.c.l.b16 %v514
  %v554 = vunpack.c.l.b16 %v515
  %v555 = vunpack.c.l.b16 %v516
  %v556 = vunpack.c.l.b16 %v517
  %v557 = vunpack.c.l.b16 %v518
  %v558 = vunpack.c.l.b16 %v519
  %v559 = vunpack.c.l.b16 %v520
  %v560 = vunpack.c.l.b16 %v521
  %v561 = vunpack.c.l.b16 %v522
  %v562 = vunpack.c.l.b16 %v523
  %v563 = vunpack.c.l.b16 %v524
  %v564 = vunpack.c.l.b16 %v525
  %v565 = vunpack.c.l.b16 %v526
  %v566 = vunpack.c.l.b16 %v527
  %v567 = vunpack.c.l.b16 %v528
  %v568 = vunpack.c.l.b16 %v529
  %v569 = vpack.c.b16 %v554, %v553
  %v570 = vpack.c.b16 %v556, %v555
  %v571 = vpack.c.b16 %v558, %v557
  %v572 = vpack.c.b16 %v560, %v559
  %v573 = vpack.c.b16 %v562, %v561
  %v574 = vpack.c.b16 %v564, %v563
  %v575 = vpack.c.b16 %v566, %v565
  %v576 = vpack.c.b16 %v568, %v567
  %585 = vmatprep.subr.bf16.mxu0 0
  %586 = vmatpush1.bf16.msra.mxu0 %v576
  %587 = vmatprep.subr.bf16.mxu0 0
  %588 = vmatpush1.bf16.msra.mxu0 %v575
  %589 = vmatprep.subr.bf16.mxu0 0
  %590 = vmatpush1.bf16.msra.mxu0 %v574
  %591 = vmatprep.subr.bf16.mxu0 0
  %592 = vmatpush1.bf16.msra.mxu0 %v573
  %593 = vmatprep.subr.bf16.mxu0 0
  %594 = vmatpush1.bf16.msra.mxu0 %v572
  %595 = vmatprep.subr.bf16.mxu0 0
  %596 = vmatpush1.bf16.msra.mxu0 %v571
  %597 = vmatprep.subr.bf16.mxu0 0
  %598 = vmatpush1.bf16.msra.mxu0 %v570
  %599 = vmatprep.subr.bf16.mxu0 0
  %600 = vmatpush1.bf16.msra.mxu0 %v569
  %601 = vmatprep.subr.bf16.mxu0 0
  %602 = vmatpush2.bf16.msra.mxu0 0
  %603 = vmatprep.subr.bf16.mxu0 0
  %604 = vmatpush2.bf16.msra.mxu0 0
  %605 = vmatprep.subr.bf16.mxu0 0
  %606 = vmatpush2.bf16.msra.mxu0 0
  %607 = vmatprep.subr.bf16.mxu0 0
  %608 = vmatpush2.bf16.msra.mxu0 0
  %609 = vmatprep.subr.bf16.mxu0 0
  %610 = vmatpush2.bf16.msra.mxu0 0
  %611 = vmatprep.subr.bf16.mxu0 0
  %612 = vmatpush2.bf16.msra.mxu0 0
  %613 = vmatprep.subr.bf16.mxu0 0
  %614 = vmatpush2.bf16.msra.mxu0 0
  %615 = vmatprep.subr.bf16.mxu0 0
  %616 = vmatpush2.bf16.msra.mxu0 0
  %617 = vmatprep.mubr.bf16.mxu0 0
  %618 = vmatmul.mubr.bf16.gmra.mxu0 %v513
  %v619 = vpop.f32.mrf.mxu0
  %v620 = vadd.f32 %v535, %v619
  %v621 = vpop.f32.mrf.mxu0
  %v622 = vpop.f32.mrf.mxu0
  %v623 = vadd.f32 %v535, %v622
  %v624 = vpop.f32.mrf.mxu0
  %625 = vdwg.mxu0
  %626 = vst [vmem:[%s7] sm:$0xff] %v620
  %627 = vst [vmem:[%s7 + $0x8] sm:$0xff] %v623
  // Predicated region
  $region30: #{lenet_forward.5} parent=0 // pred_check
    _
  $region31: #{lenet_forward.5} parent=0 // pred_check_branch
    %629 = sbr.rel (0) target = $region33
  $region32: #{lenet_forward.5} parent=0 // pred_region
    _
  $region33: #{lenet_forward.5} parent=0 // pred_fallthru
    _
  // Predicated region
  $region34: #{lenet_forward.5} parent=0 // pred_check
    _
  $region35: #{lenet_forward.5} parent=0 // pred_check_branch
    %631 = sbr.rel (0) target = $region37
  $region36: #{lenet_forward.5} parent=0 // pred_region
    _
  $region37: #{lenet_forward.5} parent=0 // pred_fallthru
    _

</llo_original>
